<compile_context>
chip_gen: v5e
topology: v5e:2x2
jax: 0.10.0
libtpu: 0.0.40
codegen_flags: <defaults>
</compile_context>

<pallas_src>
import functools

import jax
import jax.numpy as jnp
from jax.experimental import pallas as pl
from jax.experimental.pallas import tpu as pltpu


def _choose_tile_lanes(M):
    """Largest lane tile in {512,256,128} that divides M, else full extent."""
    for t in (512, 256, 128):
        if M > t and M % t == 0:
            return t
    return M


# ---------------------------------------------------------------------------
# Pallas kernels
# ---------------------------------------------------------------------------
def _conv_kernel(w_ref, p_ref, b_ref, o_ref, *, apply_relu):
    # out[Cout, TM] = w[Cout, K] @ patchesT[K, TM]  (bf16 in, f32 acc)
    acc = jnp.dot(w_ref[...], p_ref[...], preferred_element_type=jnp.float32)
    acc = acc + b_ref[...]                      # folded BN shift, [Cout, 1]
    if apply_relu:
        acc = jnp.maximum(acc, 0.0)
    o_ref[...] = acc


def _conv_res_kernel(w_ref, p_ref, b_ref, r_ref, o_ref, *, apply_relu):
    acc = jnp.dot(w_ref[...], p_ref[...], preferred_element_type=jnp.float32)
    acc = acc + b_ref[...] + r_ref[...]
    if apply_relu:
        acc = jnp.maximum(acc, 0.0)
    o_ref[...] = acc


def _maxpool_kernel(t_ref, o_ref):
    # t_ref: [T(=27 taps), C, TM] -> max over taps
    o_ref[...] = jnp.max(t_ref[...], axis=0)


# ---------------------------------------------------------------------------
# Conv3d (+ folded BN, residual, ReLU) via a transposed Pallas matmul
# ---------------------------------------------------------------------------
def _conv_mm_pallas(wK, pT, shift, residual, apply_relu):
    Cout, K = wK.shape
    _, M = pT.shape
    tm = _choose_tile_lanes(M)
    grid = (M // tm,)

    in_specs = [
        pl.BlockSpec((Cout, K), lambda i: (0, 0)),   # weight: constant block
        pl.BlockSpec((K, tm), lambda i: (0, i)),     # patches^T: streamed over M
        pl.BlockSpec((Cout, 1), lambda i: (0, 0)),   # BN shift: constant block
    ]
    args = [wK, pT, shift]
    if residual is None:
        kern = functools.partial(_conv_kernel, apply_relu=apply_relu)
    else:
        kern = functools.partial(_conv_res_kernel, apply_relu=apply_relu)
        in_specs.append(pl.BlockSpec((Cout, tm), lambda i: (0, i)))
        args.append(residual)

    out = pl.pallas_call(
        kern,
        out_shape=jax.ShapeDtypeStruct((Cout, M), jnp.float32),
        grid=grid,
        in_specs=in_specs,
        out_specs=pl.BlockSpec((Cout, tm), lambda i: (0, i)),
        compiler_params=pltpu.CompilerParams(
            dimension_semantics=("parallel",),
            vmem_limit_bytes=32 * 1024 * 1024),
    )(*args)
    return out


def _extract_patches_T(x, ksize, stride, pad):
    """x: [C, N, D, H, W] -> patches^T [C*kd*kh*kw, N*Do*Ho*Wo] in bf16.

    K-row ordering is (c, i, j, l), matching w.reshape(Cout, Cin*kd*kh*kw).
    """
    kd, kh, kw = ksize
    sd, sh, sw = stride
    pd, ph, pw = pad
    C, N, D, H, W = x.shape
    xp = jnp.pad(x, ((0, 0), (0, 0), (pd, pd), (ph, ph), (pw, pw)))
    Do = (D + 2 * pd - kd) // sd + 1
    Ho = (H + 2 * ph - kh) // sh + 1
    Wo = (W + 2 * pw - kw) // sw + 1
    taps = []
    for i in range(kd):
        for j in range(kh):
            for l in range(kw):
                taps.append(
                    xp[:, :, i:i + sd * Do:sd, j:j + sh * Ho:sh, l:l + sw * Wo:sw])
    pt = jnp.stack(taps, axis=1)                    # [C, T, N, Do, Ho, Wo]
    pt = pt.reshape(C * kd * kh * kw, N * Do * Ho * Wo).astype(jnp.bfloat16)
    return pt, (Do, Ho, Wo), N


def conv3d_bn_act(x, w, scale, shift, stride, pad, residual=None, apply_relu=True):
    # x: [Cin, N, D, H, W] f32; w: PyTorch layout [Cout, Cin, kd, kh, kw]
    Cout, Cin, kd, kh, kw = w.shape
    pT, (Do, Ho, Wo), N = _extract_patches_T(x, (kd, kh, kw), stride, pad)
    # Fold BN scale into the weight rows (host side, f32), then cast to bf16.
    wK = (w.reshape(Cout, Cin * kd * kh * kw) * scale[:, None]).astype(jnp.bfloat16)
    b2 = shift.reshape(Cout, 1).astype(jnp.float32)
    r2 = None if residual is None else residual.reshape(Cout, -1).astype(jnp.float32)
    out2 = _conv_mm_pallas(wK, pT, b2, r2, apply_relu)        # [Cout, M] f32
    return out2.reshape(Cout, N, Do, Ho, Wo)


# ---------------------------------------------------------------------------
# MaxPool3d(kernel=3, stride=2, padding=1) via Pallas max-reduction.
# Zero padding is exact here because a ReLU always precedes the pool.
# ---------------------------------------------------------------------------
def maxpool3d_pallas(x, ksize=3, stride=2, pad=1):
    # x: [C, N, D, H, W]
    C, N, D, H, W = x.shape
    xp = jnp.pad(x, ((0, 0), (0, 0), (pad, pad), (pad, pad), (pad, pad)))
    Do = (D + 2 * pad - ksize) // stride + 1
    Ho = (H + 2 * pad - ksize) // stride + 1
    Wo = (W + 2 * pad - ksize) // stride + 1
    taps = []
    for i in range(ksize):
        for j in range(ksize):
            for l in range(ksize):
                taps.append(
                    xp[:, :, i:i + stride * Do:stride, j:j + stride * Ho:stride,
                       l:l + stride * Wo:stride])
    T = ksize ** 3
    M = N * Do * Ho * Wo
    tt = jnp.stack(taps, axis=0).reshape(T, C, M)   # [T, C, M]
    tm = _choose_tile_lanes(M)

    out = pl.pallas_call(
        _maxpool_kernel,
        out_shape=jax.ShapeDtypeStruct((C, M), jnp.float32),
        grid=(M // tm,),
        in_specs=[pl.BlockSpec((T, C, tm), lambda i: (0, 0, i))],
        out_specs=pl.BlockSpec((C, tm), lambda i: (0, i)),
        compiler_params=pltpu.CompilerParams(
            dimension_semantics=("parallel",),
            vmem_limit_bytes=32 * 1024 * 1024),
    )(tt)
    return out.reshape(C, N, Do, Ho, Wo)


# ---------------------------------------------------------------------------
# Deterministic parameter construction (synthetic weights)
# ---------------------------------------------------------------------------
def _init_conv(key, cout, cin, ksize):
    kd, kh, kw = ksize
    fan_in = cin * kd * kh * kw
    std = (2.0 / fan_in) ** 0.5
    return std * jax.random.normal(key, (cout, cin, kd, kh, kw), jnp.float32)


def _init_bn(key, c, eps=1e-5):
    k1, k2, k3, k4 = jax.random.split(key, 4)
    gamma = jax.random.uniform(k1, (c,), jnp.float32, 0.5, 1.5)
    beta = 0.1 * jax.random.normal(k2, (c,), jnp.float32)
    rmean = 0.1 * jax.random.normal(k3, (c,), jnp.float32)
    rvar = jax.random.uniform(k4, (c,), jnp.float32, 0.5, 1.5)
    scale = gamma / jnp.sqrt(rvar + eps)
    shift = beta - rmean * scale
    return scale, shift


def build_params(key, in_channels=1, inplanes=8, layers=(1, 1, 1, 1)):
    keys = iter(jax.random.split(key, 256))
    P = {
        "conv1_w": _init_conv(next(keys), inplanes, in_channels, (7, 7, 7)),
        "bn1": _init_bn(next(keys), inplanes),
        "stages": [],
    }
    cur = [inplanes]  # mutable "self.inplanes"

    def make_layer(planes, blocks, stride):
        blks = []
        for bi in range(blocks):
            s = stride if bi == 0 else 1
            bp = {"stride": s}
            bp["conv1_w"] = _init_conv(next(keys), planes, cur[0], (3, 3, 3))
            bp["bn1"] = _init_bn(next(keys), planes)
            bp["conv2_w"] = _init_conv(next(keys), planes, planes, (3, 3, 3))
            bp["bn2"] = _init_bn(next(keys), planes)
            if bi == 0 and (s != 1 or cur[0] != planes):     # shortcut_type 'B'
                bp["ds_w"] = _init_conv(next(keys), planes, cur[0], (1, 1, 1))
                bp["ds_bn"] = _init_bn(next(keys), planes)
            blks.append(bp)
            cur[0] = planes
        return blks

    P["stages"].append(make_layer(cur[0], layers[0], 1))
    P["stages"].append(make_layer(cur[0] * 2, layers[1], 2))
    P["stages"].append(make_layer(cur[0] * 2, layers[2], 2))
    P["stages"].append(make_layer(cur[0] * 2, layers[3], 2))
    return P


# ---------------------------------------------------------------------------
# Forward pass
# ---------------------------------------------------------------------------
def basic_block_forward(bp, x):
    st = bp["stride"]
    s1, b1 = bp["bn1"]
    s2, b2 = bp["bn2"]
    out = conv3d_bn_act(x, bp["conv1_w"], s1, b1,
                        stride=(st, st, st), pad=(1, 1, 1), apply_relu=True)
    if "ds_w" in bp:
        sd_, bd_ = bp["ds_bn"]
        residual = conv3d_bn_act(x, bp["ds_w"], sd_, bd_,
                                 stride=(st, st, st), pad=(0, 0, 0),
                                 apply_relu=False)
    else:
        residual = x
    out = conv3d_bn_act(out, bp["conv2_w"], s2, b2,
                        stride=(1, 1, 1), pad=(1, 1, 1),
                        residual=residual, apply_relu=True)
    return out


def resnet_heatmap_forward(P, x_ncdhw):
    # PyTorch NCDHW -> internal channels-first CNDHW ([C, N, D, H, W])
    x = jnp.transpose(x_ncdhw.astype(jnp.float32), (1, 0, 2, 3, 4))
    s, b = P["bn1"]
    x = conv3d_bn_act(x, P["conv1_w"], s, b,
                      stride=(1, 2, 2), pad=(3, 3, 3), apply_relu=True)
    x = maxpool3d_pallas(x, ksize=3, stride=2, pad=1)
    for stage in P["stages"]:
        for bp in stage:
            x = basic_block_forward(bp, x)
    # back to PyTorch NCDHW
    return jnp.transpose(x, (1, 0, 2, 3, 4))


if __name__ == "__main__":
    key = jax.random.PRNGKey(0)
    kp, kx = jax.random.split(key)
    params = build_params(kp, in_channels=1, inplanes=8, layers=(1, 1, 1, 1))

    # small input consistent with the module: N=2, C_in=1, D=8, H=W=16
    x = jax.random.normal(kx, (2, 1, 8, 16, 16), jnp.float32)

    fwd = jax.jit(lambda xx: resnet_heatmap_forward(params, xx))
    y = fwd(x)
    jax.block_until_ready(y)
    assert y.shape == (2, 64, 1, 1, 1), y.shape  # N, C_out(=inplanes*8), D, H, W
    print("KERNEL_OK")
</pallas_src>

<mosaic_0001>
module attributes {stable_mosaic.version = 11 : i64} {
  func.func @_conv_kernel(%arg0: i32, %arg1: memref<8x343xbf16, #tpu.memory_space<vmem>>, %arg2: memref<343x512xbf16, #tpu.memory_space<vmem>>, %arg3: memref<8x1xf32, #tpu.memory_space<vmem>>, %arg4: memref<8x512xf32, #tpu.memory_space<vmem>>) attributes {dimension_semantics = [#tpu.dimension_semantics<parallel>], iteration_bounds = array<i64: 2>, scalar_prefetch = 0 : i64, scratch_operands = 0 : i64, tpu.core_type = #tpu.core_type<tc>, window_params = [{pipeline_mode = #tpu.pipeline_mode<synchronous>, transform_indices = @transform_0, window_bounds = array<i64: 8, 343>}, {transform_indices = @transform_1, window_bounds = array<i64: 343, 512>}, {pipeline_mode = #tpu.pipeline_mode<synchronous>, transform_indices = @transform_2, window_bounds = array<i64: 8, 1>}, {transform_indices = @transform_3, window_bounds = array<i64: 8, 512>}]} {
    %c0 = arith.constant 0 : index
    %c0_0 = arith.constant 0 : index
    %0 = vector.load %arg1[%c0, %c0_0] : memref<8x343xbf16, #tpu.memory_space<vmem>>, vector<8x343xbf16>
    %c0_1 = arith.constant 0 : index
    %c0_2 = arith.constant 0 : index
    %1 = vector.load %arg2[%c0_1, %c0_2] : memref<343x512xbf16, #tpu.memory_space<vmem>>, vector<343x512xbf16>
    %cst = arith.constant dense<0.000000e+00> : vector<8x512xf32>
    %2 = tpu.matmul %0, %1, %cst {dimension_numbers = #tpu.dot_dimension_numbers<[1], [0], [0], [1], [0, 0, 1, 1], [], []>} : vector<8x343xbf16>, vector<343x512xbf16>, vector<8x512xf32> -> vector<8x512xf32>
    %c0_3 = arith.constant 0 : index
    %c0_4 = arith.constant 0 : index
    %3 = vector.load %arg3[%c0_3, %c0_4] : memref<8x1xf32, #tpu.memory_space<vmem>>, vector<8x1xf32>
    %4 = vector.broadcast %3 : vector<8x1xf32> to vector<8x512xf32>
    %5 = arith.addf %2, %4 : vector<8x512xf32>
    %cst_5 = arith.constant 0.000000e+00 : f32
    %6 = vector.broadcast %cst_5 : f32 to vector<8x512xf32>
    %7 = arith.maximumf %5, %6 : vector<8x512xf32>
    %c0_6 = arith.constant 0 : index
    %c0_7 = arith.constant 0 : index
    %8 = vector.load %arg4[%c0_6, %c0_7] : memref<8x512xf32, #tpu.memory_space<vmem>>, vector<8x512xf32>
    tpu.vector_store %arg4[%c0_6, %c0_7], %7 {strides = array<i32>} : memref<8x512xf32, #tpu.memory_space<vmem>>, vector<8x512xf32>,
    return
  }
  func.func @transform_0(%arg0: i32) -> (i32, i32) {
    %c0_i32 = arith.constant 0 : i32
    %c0_i32_0 = arith.constant 0 : i32
    %c0_i32_1 = arith.constant 0 : i32
    return %c0_i32, %c0_i32_0 : i32, i32
  }
  func.func @transform_1(%arg0: i32) -> (i32, i32) {
    %c0_i32 = arith.constant 0 : i32
    %c0_i32_0 = arith.constant 0 : i32
    return %c0_i32, %arg0 : i32, i32
  }
  func.func @transform_2(%arg0: i32) -> (i32, i32) {
    %c0_i32 = arith.constant 0 : i32
    %c0_i32_0 = arith.constant 0 : i32
    %c0_i32_1 = arith.constant 0 : i32
    return %c0_i32, %c0_i32_0 : i32, i32
  }
  func.func @transform_3(%arg0: i32) -> (i32, i32) {
    %c0_i32 = arith.constant 0 : i32
    %c0_i32_0 = arith.constant 0 : i32
    return %c0_i32, %arg0 : i32, i32
  }
}

module attributes {stable_mosaic.version = 11 : i64} {
  func.func @_maxpool_kernel(%arg0: i32, %arg1: memref<27x8x128xf32, #tpu.memory_space<vmem>>, %arg2: memref<8x128xf32, #tpu.memory_space<vmem>>) attributes {dimension_semantics = [#tpu.dimension_semantics<parallel>], iteration_bounds = array<i64: 1>, scalar_prefetch = 0 : i64, scratch_operands = 0 : i64, tpu.core_type = #tpu.core_type<tc>, window_params = [{transform_indices = @transform_0, window_bounds = array<i64: 27, 8, 128>}, {transform_indices = @transform_1, window_bounds = array<i64: 8, 128>}]} {
    %c0 = arith.constant 0 : index
    %c0_0 = arith.constant 0 : index
    %c0_1 = arith.constant 0 : index
    %0 = vector.load %arg1[%c0, %c0_0, %c0_1] : memref<27x8x128xf32, #tpu.memory_space<vmem>>, vector<27x8x128xf32>
    %cst = arith.constant dense<0xFF800000> : vector<8x128xf32>
    %1 = vector.multi_reduction <maximumf>, %0, %cst [0] : vector<27x8x128xf32> to vector<8x128xf32>
    %c0_2 = arith.constant 0 : index
    %c0_3 = arith.constant 0 : index
    %2 = vector.load %arg2[%c0_2, %c0_3] : memref<8x128xf32, #tpu.memory_space<vmem>>, vector<8x128xf32>
    tpu.vector_store %arg2[%c0_2, %c0_3], %1 {strides = array<i32>} : memref<8x128xf32, #tpu.memory_space<vmem>>, vector<8x128xf32>,
    return
  }
  func.func @transform_0(%arg0: i32) -> (i32, i32, i32) {
    %c0_i32 = arith.constant 0 : i32
    %c0_i32_0 = arith.constant 0 : i32
    %c0_i32_1 = arith.constant 0 : i32
    return %c0_i32, %c0_i32_0, %arg0 : i32, i32, i32
  }
  func.func @transform_1(%arg0: i32) -> (i32, i32) {
    %c0_i32 = arith.constant 0 : i32
    %c0_i32_0 = arith.constant 0 : i32
    return %c0_i32, %arg0 : i32, i32
  }
}

module attributes {stable_mosaic.version = 11 : i64} {
  func.func @_conv_kernel(%arg0: i32, %arg1: memref<8x216xbf16, #tpu.memory_space<vmem>>, %arg2: memref<216x128xbf16, #tpu.memory_space<vmem>>, %arg3: memref<8x1xf32, #tpu.memory_space<vmem>>, %arg4: memref<8x128xf32, #tpu.memory_space<vmem>>) attributes {dimension_semantics = [#tpu.dimension_semantics<parallel>], iteration_bounds = array<i64: 1>, scalar_prefetch = 0 : i64, scratch_operands = 0 : i64, tpu.core_type = #tpu.core_type<tc>, window_params = [{pipeline_mode = #tpu.pipeline_mode<synchronous>, transform_indices = @transform_0, window_bounds = array<i64: 8, 216>}, {transform_indices = @transform_1, window_bounds = array<i64: 216, 128>}, {pipeline_mode = #tpu.pipeline_mode<synchronous>, transform_indices = @transform_2, window_bounds = array<i64: 8, 1>}, {transform_indices = @transform_3, window_bounds = array<i64: 8, 128>}]} {
    %c0 = arith.constant 0 : index
    %c0_0 = arith.constant 0 : index
    %0 = vector.load %arg1[%c0, %c0_0] : memref<8x216xbf16, #tpu.memory_space<vmem>>, vector<8x216xbf16>
    %c0_1 = arith.constant 0 : index
    %c0_2 = arith.constant 0 : index
    %1 = vector.load %arg2[%c0_1, %c0_2] : memref<216x128xbf16, #tpu.memory_space<vmem>>, vector<216x128xbf16>
    %cst = arith.constant dense<0.000000e+00> : vector<8x128xf32>
    %2 = tpu.matmul %0, %1, %cst {dimension_numbers = #tpu.dot_dimension_numbers<[1], [0], [0], [1], [0, 0, 1, 1], [], []>} : vector<8x216xbf16>, vector<216x128xbf16>, vector<8x128xf32> -> vector<8x128xf32>
    %c0_3 = arith.constant 0 : index
    %c0_4 = arith.constant 0 : index
    %3 = vector.load %arg3[%c0_3, %c0_4] : memref<8x1xf32, #tpu.memory_space<vmem>>, vector<8x1xf32>
    %4 = vector.broadcast %3 : vector<8x1xf32> to vector<8x128xf32>
    %5 = arith.addf %2, %4 : vector<8x128xf32>
    %cst_5 = arith.constant 0.000000e+00 : f32
    %6 = vector.broadcast %cst_5 : f32 to vector<8x128xf32>
    %7 = arith.maximumf %5, %6 : vector<8x128xf32>
    %c0_6 = arith.constant 0 : index
    %c0_7 = arith.constant 0 : index
    %8 = vector.load %arg4[%c0_6, %c0_7] : memref<8x128xf32, #tpu.memory_space<vmem>>, vector<8x128xf32>
    tpu.vector_store %arg4[%c0_6, %c0_7], %7 {strides = array<i32>} : memref<8x128xf32, #tpu.memory_space<vmem>>, vector<8x128xf32>,
    return
  }
  func.func @transform_0(%arg0: i32) -> (i32, i32) {
    %c0_i32 = arith.constant 0 : i32
    %c0_i32_0 = arith.constant 0 : i32
    %c0_i32_1 = arith.constant 0 : i32
    return %c0_i32, %c0_i32_0 : i32, i32
  }
  func.func @transform_1(%arg0: i32) -> (i32, i32) {
    %c0_i32 = arith.constant 0 : i32
    %c0_i32_0 = arith.constant 0 : i32
    return %c0_i32, %arg0 : i32, i32
  }
  func.func @transform_2(%arg0: i32) -> (i32, i32) {
    %c0_i32 = arith.constant 0 : i32
    %c0_i32_0 = arith.constant 0 : i32
    %c0_i32_1 = arith.constant 0 : i32
    return %c0_i32, %c0_i32_0 : i32, i32
  }
  func.func @transform_3(%arg0: i32) -> (i32, i32) {
    %c0_i32 = arith.constant 0 : i32
    %c0_i32_0 = arith.constant 0 : i32
    return %c0_i32, %arg0 : i32, i32
  }
}

module attributes {stable_mosaic.version = 11 : i64} {
  func.func @_conv_res_kernel(%arg0: i32, %arg1: memref<8x216xbf16, #tpu.memory_space<vmem>>, %arg2: memref<216x128xbf16, #tpu.memory_space<vmem>>, %arg3: memref<8x1xf32, #tpu.memory_space<vmem>>, %arg4: memref<8x128xf32, #tpu.memory_space<vmem>>, %arg5: memref<8x128xf32, #tpu.memory_space<vmem>>) attributes {dimension_semantics = [#tpu.dimension_semantics<parallel>], iteration_bounds = array<i64: 1>, scalar_prefetch = 0 : i64, scratch_operands = 0 : i64, tpu.core_type = #tpu.core_type<tc>, window_params = [{pipeline_mode = #tpu.pipeline_mode<synchronous>, transform_indices = @transform_0, window_bounds = array<i64: 8, 216>}, {transform_indices = @transform_1, window_bounds = array<i64: 216, 128>}, {pipeline_mode = #tpu.pipeline_mode<synchronous>, transform_indices = @transform_2, window_bounds = array<i64: 8, 1>}, {transform_indices = @transform_3, window_bounds = array<i64: 8, 128>}, {transform_indices = @transform_4, window_bounds = array<i64: 8, 128>}]} {
    %c0 = arith.constant 0 : index
    %c0_0 = arith.constant 0 : index
    %0 = vector.load %arg1[%c0, %c0_0] : memref<8x216xbf16, #tpu.memory_space<vmem>>, vector<8x216xbf16>
    %c0_1 = arith.constant 0 : index
    %c0_2 = arith.constant 0 : index
    %1 = vector.load %arg2[%c0_1, %c0_2] : memref<216x128xbf16, #tpu.memory_space<vmem>>, vector<216x128xbf16>
    %cst = arith.constant dense<0.000000e+00> : vector<8x128xf32>
    %2 = tpu.matmul %0, %1, %cst {dimension_numbers = #tpu.dot_dimension_numbers<[1], [0], [0], [1], [0, 0, 1, 1], [], []>} : vector<8x216xbf16>, vector<216x128xbf16>, vector<8x128xf32> -> vector<8x128xf32>
    %c0_3 = arith.constant 0 : index
    %c0_4 = arith.constant 0 : index
    %3 = vector.load %arg3[%c0_3, %c0_4] : memref<8x1xf32, #tpu.memory_space<vmem>>, vector<8x1xf32>
    %4 = vector.broadcast %3 : vector<8x1xf32> to vector<8x128xf32>
    %5 = arith.addf %2, %4 : vector<8x128xf32>
    %c0_5 = arith.constant 0 : index
    %c0_6 = arith.constant 0 : index
    %6 = vector.load %arg4[%c0_5, %c0_6] : memref<8x128xf32, #tpu.memory_space<vmem>>, vector<8x128xf32>
    %7 = arith.addf %5, %6 : vector<8x128xf32>
    %cst_7 = arith.constant 0.000000e+00 : f32
    %8 = vector.broadcast %cst_7 : f32 to vector<8x128xf32>
    %9 = arith.maximumf %7, %8 : vector<8x128xf32>
    %c0_8 = arith.constant 0 : index
    %c0_9 = arith.constant 0 : index
    %10 = vector.load %arg5[%c0_8, %c0_9] : memref<8x128xf32, #tpu.memory_space<vmem>>, vector<8x128xf32>
    tpu.vector_store %arg5[%c0_8, %c0_9], %9 {strides = array<i32>} : memref<8x128xf32, #tpu.memory_space<vmem>>, vector<8x128xf32>,
    return
  }
  func.func @transform_0(%arg0: i32) -> (i32, i32) {
    %c0_i32 = arith.constant 0 : i32
    %c0_i32_0 = arith.constant 0 : i32
    %c0_i32_1 = arith.constant 0 : i32
    return %c0_i32, %c0_i32_0 : i32, i32
  }
  func.func @transform_1(%arg0: i32) -> (i32, i32) {
    %c0_i32 = arith.constant 0 : i32
    %c0_i32_0 = arith.constant 0 : i32
    return %c0_i32, %arg0 : i32, i32
  }
  func.func @transform_2(%arg0: i32) -> (i32, i32) {
    %c0_i32 = arith.constant 0 : i32
    %c0_i32_0 = arith.constant 0 : i32
    %c0_i32_1 = arith.constant 0 : i32
    return %c0_i32, %c0_i32_0 : i32, i32
  }
  func.func @transform_3(%arg0: i32) -> (i32, i32) {
    %c0_i32 = arith.constant 0 : i32
    %c0_i32_0 = arith.constant 0 : i32
    return %c0_i32, %arg0 : i32, i32
  }
  func.func @transform_4(%arg0: i32) -> (i32, i32) {
    %c0_i32 = arith.constant 0 : i32
    %c0_i32_0 = arith.constant 0 : i32
    return %c0_i32, %arg0 : i32, i32
  }
}

module attributes {stable_mosaic.version = 11 : i64} {
  func.func @_conv_kernel(%arg0: i32, %arg1: memref<16x216xbf16, #tpu.memory_space<vmem>>, %arg2: memref<216x16xbf16, #tpu.memory_space<vmem>>, %arg3: memref<16x1xf32, #tpu.memory_space<vmem>>, %arg4: memref<16x16xf32, #tpu.memory_space<vmem>>) attributes {dimension_semantics = [#tpu.dimension_semantics<parallel>], iteration_bounds = array<i64: 1>, scalar_prefetch = 0 : i64, scratch_operands = 0 : i64, tpu.core_type = #tpu.core_type<tc>, window_params = [{pipeline_mode = #tpu.pipeline_mode<synchronous>, transform_indices = @transform_0, window_bounds = array<i64: 16, 216>}, {transform_indices = @transform_1, window_bounds = array<i64: 216, 16>}, {pipeline_mode = #tpu.pipeline_mode<synchronous>, transform_indices = @transform_2, window_bounds = array<i64: 16, 1>}, {transform_indices = @transform_3, window_bounds = array<i64: 16, 16>}]} {
    %c0 = arith.constant 0 : index
    %c0_0 = arith.constant 0 : index
    %0 = vector.load %arg1[%c0, %c0_0] : memref<16x216xbf16, #tpu.memory_space<vmem>>, vector<16x216xbf16>
    %c0_1 = arith.constant 0 : index
    %c0_2 = arith.constant 0 : index
    %1 = vector.load %arg2[%c0_1, %c0_2] : memref<216x16xbf16, #tpu.memory_space<vmem>>, vector<216x16xbf16>
    %cst = arith.constant dense<0.000000e+00> : vector<16x16xf32>
    %2 = tpu.matmul %0, %1, %cst {dimension_numbers = #tpu.dot_dimension_numbers<[1], [0], [0], [1], [0, 0, 1, 1], [], []>} : vector<16x216xbf16>, vector<216x16xbf16>, vector<16x16xf32> -> vector<16x16xf32>
    %c0_3 = arith.constant 0 : index
    %c0_4 = arith.constant 0 : index
    %3 = vector.load %arg3[%c0_3, %c0_4] : memref<16x1xf32, #tpu.memory_space<vmem>>, vector<16x1xf32>
    %4 = vector.broadcast %3 : vector<16x1xf32> to vector<16x16xf32>
    %5 = arith.addf %2, %4 : vector<16x16xf32>
    %cst_5 = arith.constant 0.000000e+00 : f32
    %6 = vector.broadcast %cst_5 : f32 to vector<16x16xf32>
    %7 = arith.maximumf %5, %6 : vector<16x16xf32>
    %c0_6 = arith.constant 0 : index
    %c0_7 = arith.constant 0 : index
    %8 = vector.load %arg4[%c0_6, %c0_7] : memref<16x16xf32, #tpu.memory_space<vmem>>, vector<16x16xf32>
    tpu.vector_store %arg4[%c0_6, %c0_7], %7 {strides = array<i32>} : memref<16x16xf32, #tpu.memory_space<vmem>>, vector<16x16xf32>,
    return
  }
  func.func @transform_0(%arg0: i32) -> (i32, i32) {
    %c0_i32 = arith.constant 0 : i32
    %c0_i32_0 = arith.constant 0 : i32
    %c0_i32_1 = arith.constant 0 : i32
    return %c0_i32, %c0_i32_0 : i32, i32
  }
  func.func @transform_1(%arg0: i32) -> (i32, i32) {
    %c0_i32 = arith.constant 0 : i32
    %c0_i32_0 = arith.constant 0 : i32
    return %c0_i32, %arg0 : i32, i32
  }
  func.func @transform_2(%arg0: i32) -> (i32, i32) {
    %c0_i32 = arith.constant 0 : i32
    %c0_i32_0 = arith.constant 0 : i32
    %c0_i32_1 = arith.constant 0 : i32
    return %c0_i32, %c0_i32_0 : i32, i32
  }
  func.func @transform_3(%arg0: i32) -> (i32, i32) {
    %c0_i32 = arith.constant 0 : i32
    %c0_i32_0 = arith.constant 0 : i32
    return %c0_i32, %arg0 : i32, i32
  }
}

module attributes {stable_mosaic.version = 11 : i64} {
  func.func @_conv_kernel(%arg0: i32, %arg1: memref<16x8xbf16, #tpu.memory_space<vmem>>, %arg2: memref<8x16xbf16, #tpu.memory_space<vmem>>, %arg3: memref<16x1xf32, #tpu.memory_space<vmem>>, %arg4: memref<16x16xf32, #tpu.memory_space<vmem>>) attributes {dimension_semantics = [#tpu.dimension_semantics<parallel>], iteration_bounds = array<i64: 1>, scalar_prefetch = 0 : i64, scratch_operands = 0 : i64, tpu.core_type = #tpu.core_type<tc>, window_params = [{pipeline_mode = #tpu.pipeline_mode<synchronous>, transform_indices = @transform_0, window_bounds = array<i64: 16, 8>}, {transform_indices = @transform_1, window_bounds = array<i64: 8, 16>}, {pipeline_mode = #tpu.pipeline_mode<synchronous>, transform_indices = @transform_2, window_bounds = array<i64: 16, 1>}, {transform_indices = @transform_3, window_bounds = array<i64: 16, 16>}]} {
    %c0 = arith.constant 0 : index
    %c0_0 = arith.constant 0 : index
    %0 = vector.load %arg1[%c0, %c0_0] : memref<16x8xbf16, #tpu.memory_space<vmem>>, vector<16x8xbf16>
    %c0_1 = arith.constant 0 : index
    %c0_2 = arith.constant 0 : index
    %1 = vector.load %arg2[%c0_1, %c0_2] : memref<8x16xbf16, #tpu.memory_space<vmem>>, vector<8x16xbf16>
    %cst = arith.constant dense<0.000000e+00> : vector<16x16xf32>
    %2 = tpu.matmul %0, %1, %cst {dimension_numbers = #tpu.dot_dimension_numbers<[1], [0], [0], [1], [0, 0, 1, 1], [], []>} : vector<16x8xbf16>, vector<8x16xbf16>, vector<16x16xf32> -> vector<16x16xf32>
    %c0_3 = arith.constant 0 : index
    %c0_4 = arith.constant 0 : index
    %3 = vector.load %arg3[%c0_3, %c0_4] : memref<16x1xf32, #tpu.memory_space<vmem>>, vector<16x1xf32>
    %4 = vector.broadcast %3 : vector<16x1xf32> to vector<16x16xf32>
    %5 = arith.addf %2, %4 : vector<16x16xf32>
    %c0_5 = arith.constant 0 : index
    %c0_6 = arith.constant 0 : index
    %6 = vector.load %arg4[%c0_5, %c0_6] : memref<16x16xf32, #tpu.memory_space<vmem>>, vector<16x16xf32>
    tpu.vector_store %arg4[%c0_5, %c0_6], %5 {strides = array<i32>} : memref<16x16xf32, #tpu.memory_space<vmem>>, vector<16x16xf32>,
    return
  }
  func.func @transform_0(%arg0: i32) -> (i32, i32) {
    %c0_i32 = arith.constant 0 : i32
    %c0_i32_0 = arith.constant 0 : i32
    %c0_i32_1 = arith.constant 0 : i32
    return %c0_i32, %c0_i32_0 : i32, i32
  }
  func.func @transform_1(%arg0: i32) -> (i32, i32) {
    %c0_i32 = arith.constant 0 : i32
    %c0_i32_0 = arith.constant 0 : i32
    return %c0_i32, %arg0 : i32, i32
  }
  func.func @transform_2(%arg0: i32) -> (i32, i32) {
    %c0_i32 = arith.constant 0 : i32
    %c0_i32_0 = arith.constant 0 : i32
    %c0_i32_1 = arith.constant 0 : i32
    return %c0_i32, %c0_i32_0 : i32, i32
  }
  func.func @transform_3(%arg0: i32) -> (i32, i32) {
    %c0_i32 = arith.constant 0 : i32
    %c0_i32_0 = arith.constant 0 : i32
    return %c0_i32, %arg0 : i32, i32
  }
}

module attributes {stable_mosaic.version = 11 : i64} {
  func.func @_conv_res_kernel(%arg0: i32, %arg1: memref<16x432xbf16, #tpu.memory_space<vmem>>, %arg2: memref<432x16xbf16, #tpu.memory_space<vmem>>, %arg3: memref<16x1xf32, #tpu.memory_space<vmem>>, %arg4: memref<16x16xf32, #tpu.memory_space<vmem>>, %arg5: memref<16x16xf32, #tpu.memory_space<vmem>>) attributes {dimension_semantics = [#tpu.dimension_semantics<parallel>], iteration_bounds = array<i64: 1>, scalar_prefetch = 0 : i64, scratch_operands = 0 : i64, tpu.core_type = #tpu.core_type<tc>, window_params = [{pipeline_mode = #tpu.pipeline_mode<synchronous>, transform_indices = @transform_0, window_bounds = array<i64: 16, 432>}, {transform_indices = @transform_1, window_bounds = array<i64: 432, 16>}, {pipeline_mode = #tpu.pipeline_mode<synchronous>, transform_indices = @transform_2, window_bounds = array<i64: 16, 1>}, {transform_indices = @transform_3, window_bounds = array<i64: 16, 16>}, {transform_indices = @transform_4, window_bounds = array<i64: 16, 16>}]} {
    %c0 = arith.constant 0 : index
    %c0_0 = arith.constant 0 : index
    %0 = vector.load %arg1[%c0, %c0_0] : memref<16x432xbf16, #tpu.memory_space<vmem>>, vector<16x432xbf16>
    %c0_1 = arith.constant 0 : index
    %c0_2 = arith.constant 0 : index
    %1 = vector.load %arg2[%c0_1, %c0_2] : memref<432x16xbf16, #tpu.memory_space<vmem>>, vector<432x16xbf16>
    %cst = arith.constant dense<0.000000e+00> : vector<16x16xf32>
    %2 = tpu.matmul %0, %1, %cst {dimension_numbers = #tpu.dot_dimension_numbers<[1], [0], [0], [1], [0, 0, 1, 1], [], []>} : vector<16x432xbf16>, vector<432x16xbf16>, vector<16x16xf32> -> vector<16x16xf32>
    %c0_3 = arith.constant 0 : index
    %c0_4 = arith.constant 0 : index
    %3 = vector.load %arg3[%c0_3, %c0_4] : memref<16x1xf32, #tpu.memory_space<vmem>>, vector<16x1xf32>
    %4 = vector.broadcast %3 : vector<16x1xf32> to vector<16x16xf32>
    %5 = arith.addf %2, %4 : vector<16x16xf32>
    %c0_5 = arith.constant 0 : index
    %c0_6 = arith.constant 0 : index
    %6 = vector.load %arg4[%c0_5, %c0_6] : memref<16x16xf32, #tpu.memory_space<vmem>>, vector<16x16xf32>
    %7 = arith.addf %5, %6 : vector<16x16xf32>
    %cst_7 = arith.constant 0.000000e+00 : f32
    %8 = vector.broadcast %cst_7 : f32 to vector<16x16xf32>
    %9 = arith.maximumf %7, %8 : vector<16x16xf32>
    %c0_8 = arith.constant 0 : index
    %c0_9 = arith.constant 0 : index
    %10 = vector.load %arg5[%c0_8, %c0_9] : memref<16x16xf32, #tpu.memory_space<vmem>>, vector<16x16xf32>
    tpu.vector_store %arg5[%c0_8, %c0_9], %9 {strides = array<i32>} : memref<16x16xf32, #tpu.memory_space<vmem>>, vector<16x16xf32>,
    return
  }
  func.func @transform_0(%arg0: i32) -> (i32, i32) {
    %c0_i32 = arith.constant 0 : i32
    %c0_i32_0 = arith.constant 0 : i32
    %c0_i32_1 = arith.constant 0 : i32
    return %c0_i32, %c0_i32_0 : i32, i32
  }
  func.func @transform_1(%arg0: i32) -> (i32, i32) {
    %c0_i32 = arith.constant 0 : i32
    %c0_i32_0 = arith.constant 0 : i32
    return %c0_i32, %arg0 : i32, i32
  }
  func.func @transform_2(%arg0: i32) -> (i32, i32) {
    %c0_i32 = arith.constant 0 : i32
    %c0_i32_0 = arith.constant 0 : i32
    %c0_i32_1 = arith.constant 0 : i32
    return %c0_i32, %c0_i32_0 : i32, i32
  }
  func.func @transform_3(%arg0: i32) -> (i32, i32) {
    %c0_i32 = arith.constant 0 : i32
    %c0_i32_0 = arith.constant 0 : i32
    return %c0_i32, %arg0 : i32, i32
  }
  func.func @transform_4(%arg0: i32) -> (i32, i32) {
    %c0_i32 = arith.constant 0 : i32
    %c0_i32_0 = arith.constant 0 : i32
    return %c0_i32, %arg0 : i32, i32
  }
}

module attributes {stable_mosaic.version = 11 : i64} {
  func.func @_conv_kernel(%arg0: i32, %arg1: memref<32x432xbf16, #tpu.memory_space<vmem>>, %arg2: memref<432x2xbf16, #tpu.memory_space<vmem>>, %arg3: memref<32x1xf32, #tpu.memory_space<vmem>>, %arg4: memref<32x2xf32, #tpu.memory_space<vmem>>) attributes {dimension_semantics = [#tpu.dimension_semantics<parallel>], iteration_bounds = array<i64: 1>, scalar_prefetch = 0 : i64, scratch_operands = 0 : i64, tpu.core_type = #tpu.core_type<tc>, window_params = [{pipeline_mode = #tpu.pipeline_mode<synchronous>, transform_indices = @transform_0, window_bounds = array<i64: 32, 432>}, {transform_indices = @transform_1, window_bounds = array<i64: 432, 2>}, {pipeline_mode = #tpu.pipeline_mode<synchronous>, transform_indices = @transform_2, window_bounds = array<i64: 32, 1>}, {transform_indices = @transform_3, window_bounds = array<i64: 32, 2>}]} {
    %c0 = arith.constant 0 : index
    %c0_0 = arith.constant 0 : index
    %0 = vector.load %arg1[%c0, %c0_0] : memref<32x432xbf16, #tpu.memory_space<vmem>>, vector<32x432xbf16>
    %c0_1 = arith.constant 0 : index
    %c0_2 = arith.constant 0 : index
    %1 = vector.load %arg2[%c0_1, %c0_2] : memref<432x2xbf16, #tpu.memory_space<vmem>>, vector<432x2xbf16>
    %cst = arith.constant dense<0.000000e+00> : vector<32x2xf32>
    %2 = tpu.matmul %0, %1, %cst {dimension_numbers = #tpu.dot_dimension_numbers<[1], [0], [0], [1], [0, 0, 1, 1], [], []>} : vector<32x432xbf16>, vector<432x2xbf16>, vector<32x2xf32> -> vector<32x2xf32>
    %c0_3 = arith.constant 0 : index
    %c0_4 = arith.constant 0 : index
    %3 = vector.load %arg3[%c0_3, %c0_4] : memref<32x1xf32, #tpu.memory_space<vmem>>, vector<32x1xf32>
    %4 = vector.broadcast %3 : vector<32x1xf32> to vector<32x2xf32>
    %5 = arith.addf %2, %4 : vector<32x2xf32>
    %cst_5 = arith.constant 0.000000e+00 : f32
    %6 = vector.broadcast %cst_5 : f32 to vector<32x2xf32>
    %7 = arith.maximumf %5, %6 : vector<32x2xf32>
    %c0_6 = arith.constant 0 : index
    %c0_7 = arith.constant 0 : index
    %8 = vector.load %arg4[%c0_6, %c0_7] : memref<32x2xf32, #tpu.memory_space<vmem>>, vector<32x2xf32>
    tpu.vector_store %arg4[%c0_6, %c0_7], %7 {strides = array<i32>} : memref<32x2xf32, #tpu.memory_space<vmem>>, vector<32x2xf32>,
    return
  }
  func.func @transform_0(%arg0: i32) -> (i32, i32) {
    %c0_i32 = arith.constant 0 : i32
    %c0_i32_0 = arith.constant 0 : i32
    %c0_i32_1 = arith.constant 0 : i32
    return %c0_i32, %c0_i32_0 : i32, i32
  }
  func.func @transform_1(%arg0: i32) -> (i32, i32) {
    %c0_i32 = arith.constant 0 : i32
    %c0_i32_0 = arith.constant 0 : i32
    return %c0_i32, %arg0 : i32, i32
  }
  func.func @transform_2(%arg0: i32) -> (i32, i32) {
    %c0_i32 = arith.constant 0 : i32
    %c0_i32_0 = arith.constant 0 : i32
    %c0_i32_1 = arith.constant 0 : i32
    return %c0_i32, %c0_i32_0 : i32, i32
  }
  func.func @transform_3(%arg0: i32) -> (i32, i32) {
    %c0_i32 = arith.constant 0 : i32
    %c0_i32_0 = arith.constant 0 : i32
    return %c0_i32, %arg0 : i32, i32
  }
}

module attributes {stable_mosaic.version = 11 : i64} {
  func.func @_conv_res_kernel(%arg0: i32, %arg1: memref<32x864xbf16, #tpu.memory_space<vmem>>, %arg2: memref<864x2xbf16, #tpu.memory_space<vmem>>, %arg3: memref<32x1xf32, #tpu.memory_space<vmem>>, %arg4: memref<32x2xf32, #tpu.memory_space<vmem>>, %arg5: memref<32x2xf32, #tpu.memory_space<vmem>>) attributes {dimension_semantics = [#tpu.dimension_semantics<parallel>], iteration_bounds = array<i64: 1>, scalar_prefetch = 0 : i64, scratch_operands = 0 : i64, tpu.core_type = #tpu.core_type<tc>, window_params = [{pipeline_mode = #tpu.pipeline_mode<synchronous>, transform_indices = @transform_0, window_bounds = array<i64: 32, 864>}, {transform_indices = @transform_1, window_bounds = array<i64: 864, 2>}, {pipeline_mode = #tpu.pipeline_mode<synchronous>, transform_indices = @transform_2, window_bounds = array<i64: 32, 1>}, {transform_indices = @transform_3, window_bounds = array<i64: 32, 2>}, {transform_indices = @transform_4, window_bounds = array<i64: 32, 2>}]} {
    %c0 = arith.constant 0 : index
    %c0_0 = arith.constant 0 : index
    %0 = vector.load %arg1[%c0, %c0_0] : memref<32x864xbf16, #tpu.memory_space<vmem>>, vector<32x864xbf16>
    %c0_1 = arith.constant 0 : index
    %c0_2 = arith.constant 0 : index
    %1 = vector.load %arg2[%c0_1, %c0_2] : memref<864x2xbf16, #tpu.memory_space<vmem>>, vector<864x2xbf16>
    %cst = arith.constant dense<0.000000e+00> : vector<32x2xf32>
    %2 = tpu.matmul %0, %1, %cst {dimension_numbers = #tpu.dot_dimension_numbers<[1], [0], [0], [1], [0, 0, 1, 1], [], []>} : vector<32x864xbf16>, vector<864x2xbf16>, vector<32x2xf32> -> vector<32x2xf32>
    %c0_3 = arith.constant 0 : index
    %c0_4 = arith.constant 0 : index
    %3 = vector.load %arg3[%c0_3, %c0_4] : memref<32x1xf32, #tpu.memory_space<vmem>>, vector<32x1xf32>
    %4 = vector.broadcast %3 : vector<32x1xf32> to vector<32x2xf32>
    %5 = arith.addf %2, %4 : vector<32x2xf32>
    %c0_5 = arith.constant 0 : index
    %c0_6 = arith.constant 0 : index
    %6 = vector.load %arg4[%c0_5, %c0_6] : memref<32x2xf32, #tpu.memory_space<vmem>>, vector<32x2xf32>
    %7 = arith.addf %5, %6 : vector<32x2xf32>
    %cst_7 = arith.constant 0.000000e+00 : f32
    %8 = vector.broadcast %cst_7 : f32 to vector<32x2xf32>
    %9 = arith.maximumf %7, %8 : vector<32x2xf32>
    %c0_8 = arith.constant 0 : index
    %c0_9 = arith.constant 0 : index
    %10 = vector.load %arg5[%c0_8, %c0_9] : memref<32x2xf32, #tpu.memory_space<vmem>>, vector<32x2xf32>
    tpu.vector_store %arg5[%c0_8, %c0_9], %9 {strides = array<i32>} : memref<32x2xf32, #tpu.memory_space<vmem>>, vector<32x2xf32>,
    return
  }
  func.func @transform_0(%arg0: i32) -> (i32, i32) {
    %c0_i32 = arith.constant 0 : i32
    %c0_i32_0 = arith.constant 0 : i32
    %c0_i32_1 = arith.constant 0 : i32
    return %c0_i32, %c0_i32_0 : i32, i32
  }
  func.func @transform_1(%arg0: i32) -> (i32, i32) {
    %c0_i32 = arith.constant 0 : i32
    %c0_i32_0 = arith.constant 0 : i32
    return %c0_i32, %arg0 : i32, i32
  }
  func.func @transform_2(%arg0: i32) -> (i32, i32) {
    %c0_i32 = arith.constant 0 : i32
    %c0_i32_0 = arith.constant 0 : i32
    %c0_i32_1 = arith.constant 0 : i32
    return %c0_i32, %c0_i32_0 : i32, i32
  }
  func.func @transform_3(%arg0: i32) -> (i32, i32) {
    %c0_i32 = arith.constant 0 : i32
    %c0_i32_0 = arith.constant 0 : i32
    return %c0_i32, %arg0 : i32, i32
  }
  func.func @transform_4(%arg0: i32) -> (i32, i32) {
    %c0_i32 = arith.constant 0 : i32
    %c0_i32_0 = arith.constant 0 : i32
    return %c0_i32, %arg0 : i32, i32
  }
}

module attributes {stable_mosaic.version = 11 : i64} {
  func.func @_conv_kernel(%arg0: i32, %arg1: memref<32x16xbf16, #tpu.memory_space<vmem>>, %arg2: memref<16x2xbf16, #tpu.memory_space<vmem>>, %arg3: memref<32x1xf32, #tpu.memory_space<vmem>>, %arg4: memref<32x2xf32, #tpu.memory_space<vmem>>) attributes {dimension_semantics = [#tpu.dimension_semantics<parallel>], iteration_bounds = array<i64: 1>, scalar_prefetch = 0 : i64, scratch_operands = 0 : i64, tpu.core_type = #tpu.core_type<tc>, window_params = [{pipeline_mode = #tpu.pipeline_mode<synchronous>, transform_indices = @transform_0, window_bounds = array<i64: 32, 16>}, {transform_indices = @transform_1, window_bounds = array<i64: 16, 2>}, {pipeline_mode = #tpu.pipeline_mode<synchronous>, transform_indices = @transform_2, window_bounds = array<i64: 32, 1>}, {transform_indices = @transform_3, window_bounds = array<i64: 32, 2>}]} {
    %c0 = arith.constant 0 : index
    %c0_0 = arith.constant 0 : index
    %0 = vector.load %arg1[%c0, %c0_0] : memref<32x16xbf16, #tpu.memory_space<vmem>>, vector<32x16xbf16>
    %c0_1 = arith.constant 0 : index
    %c0_2 = arith.constant 0 : index
    %1 = vector.load %arg2[%c0_1, %c0_2] : memref<16x2xbf16, #tpu.memory_space<vmem>>, vector<16x2xbf16>
    %cst = arith.constant dense<0.000000e+00> : vector<32x2xf32>
    %2 = tpu.matmul %0, %1, %cst {dimension_numbers = #tpu.dot_dimension_numbers<[1], [0], [0], [1], [0, 0, 1, 1], [], []>} : vector<32x16xbf16>, vector<16x2xbf16>, vector<32x2xf32> -> vector<32x2xf32>
    %c0_3 = arith.constant 0 : index
    %c0_4 = arith.constant 0 : index
    %3 = vector.load %arg3[%c0_3, %c0_4] : memref<32x1xf32, #tpu.memory_space<vmem>>, vector<32x1xf32>
    %4 = vector.broadcast %3 : vector<32x1xf32> to vector<32x2xf32>
    %5 = arith.addf %2, %4 : vector<32x2xf32>
    %c0_5 = arith.constant 0 : index
    %c0_6 = arith.constant 0 : index
    %6 = vector.load %arg4[%c0_5, %c0_6] : memref<32x2xf32, #tpu.memory_space<vmem>>, vector<32x2xf32>
    tpu.vector_store %arg4[%c0_5, %c0_6], %5 {strides = array<i32>} : memref<32x2xf32, #tpu.memory_space<vmem>>, vector<32x2xf32>,
    return
  }
  func.func @transform_0(%arg0: i32) -> (i32, i32) {
    %c0_i32 = arith.constant 0 : i32
    %c0_i32_0 = arith.constant 0 : i32
    %c0_i32_1 = arith.constant 0 : i32
    return %c0_i32, %c0_i32_0 : i32, i32
  }
  func.func @transform_1(%arg0: i32) -> (i32, i32) {
    %c0_i32 = arith.constant 0 : i32
    %c0_i32_0 = arith.constant 0 : i32
    return %c0_i32, %arg0 : i32, i32
  }
  func.func @transform_2(%arg0: i32) -> (i32, i32) {
    %c0_i32 = arith.constant 0 : i32
    %c0_i32_0 = arith.constant 0 : i32
    %c0_i32_1 = arith.constant 0 : i32
    return %c0_i32, %c0_i32_0 : i32, i32
  }
  func.func @transform_3(%arg0: i32) -> (i32, i32) {
    %c0_i32 = arith.constant 0 : i32
    %c0_i32_0 = arith.constant 0 : i32
    return %c0_i32, %arg0 : i32, i32
  }
}

module attributes {stable_mosaic.version = 11 : i64} {
  func.func @_conv_kernel(%arg0: i32, %arg1: memref<64x864xbf16, #tpu.memory_space<vmem>>, %arg2: memref<864x2xbf16, #tpu.memory_space<vmem>>, %arg3: memref<64x1xf32, #tpu.memory_space<vmem>>, %arg4: memref<64x2xf32, #tpu.memory_space<vmem>>) attributes {dimension_semantics = [#tpu.dimension_semantics<parallel>], iteration_bounds = array<i64: 1>, scalar_prefetch = 0 : i64, scratch_operands = 0 : i64, tpu.core_type = #tpu.core_type<tc>, window_params = [{pipeline_mode = #tpu.pipeline_mode<synchronous>, transform_indices = @transform_0, window_bounds = array<i64: 64, 864>}, {transform_indices = @transform_1, window_bounds = array<i64: 864, 2>}, {pipeline_mode = #tpu.pipeline_mode<synchronous>, transform_indices = @transform_2, window_bounds = array<i64: 64, 1>}, {transform_indices = @transform_3, window_bounds = array<i64: 64, 2>}]} {
    %c0 = arith.constant 0 : index
    %c0_0 = arith.constant 0 : index
    %0 = vector.load %arg1[%c0, %c0_0] : memref<64x864xbf16, #tpu.memory_space<vmem>>, vector<64x864xbf16>
    %c0_1 = arith.constant 0 : index
    %c0_2 = arith.constant 0 : index
    %1 = vector.load %arg2[%c0_1, %c0_2] : memref<864x2xbf16, #tpu.memory_space<vmem>>, vector<864x2xbf16>
    %cst = arith.constant dense<0.000000e+00> : vector<64x2xf32>
    %2 = tpu.matmul %0, %1, %cst {dimension_numbers = #tpu.dot_dimension_numbers<[1], [0], [0], [1], [0, 0, 1, 1], [], []>} : vector<64x864xbf16>, vector<864x2xbf16>, vector<64x2xf32> -> vector<64x2xf32>
    %c0_3 = arith.constant 0 : index
    %c0_4 = arith.constant 0 : index
    %3 = vector.load %arg3[%c0_3, %c0_4] : memref<64x1xf32, #tpu.memory_space<vmem>>, vector<64x1xf32>
    %4 = vector.broadcast %3 : vector<64x1xf32> to vector<64x2xf32>
    %5 = arith.addf %2, %4 : vector<64x2xf32>
    %cst_5 = arith.constant 0.000000e+00 : f32
    %6 = vector.broadcast %cst_5 : f32 to vector<64x2xf32>
    %7 = arith.maximumf %5, %6 : vector<64x2xf32>
    %c0_6 = arith.constant 0 : index
    %c0_7 = arith.constant 0 : index
    %8 = vector.load %arg4[%c0_6, %c0_7] : memref<64x2xf32, #tpu.memory_space<vmem>>, vector<64x2xf32>
    tpu.vector_store %arg4[%c0_6, %c0_7], %7 {strides = array<i32>} : memref<64x2xf32, #tpu.memory_space<vmem>>, vector<64x2xf32>,
    return
  }
  func.func @transform_0(%arg0: i32) -> (i32, i32) {
    %c0_i32 = arith.constant 0 : i32
    %c0_i32_0 = arith.constant 0 : i32
    %c0_i32_1 = arith.constant 0 : i32
    return %c0_i32, %c0_i32_0 : i32, i32
  }
  func.func @transform_1(%arg0: i32) -> (i32, i32) {
    %c0_i32 = arith.constant 0 : i32
    %c0_i32_0 = arith.constant 0 : i32
    return %c0_i32, %arg0 : i32, i32
  }
  func.func @transform_2(%arg0: i32) -> (i32, i32) {
    %c0_i32 = arith.constant 0 : i32
    %c0_i32_0 = arith.constant 0 : i32
    %c0_i32_1 = arith.constant 0 : i32
    return %c0_i32, %c0_i32_0 : i32, i32
  }
  func.func @transform_3(%arg0: i32) -> (i32, i32) {
    %c0_i32 = arith.constant 0 : i32
    %c0_i32_0 = arith.constant 0 : i32
    return %c0_i32, %arg0 : i32, i32
  }
}

module attributes {stable_mosaic.version = 11 : i64} {
  func.func @_conv_kernel(%arg0: i32, %arg1: memref<64x32xbf16, #tpu.memory_space<vmem>>, %arg2: memref<32x2xbf16, #tpu.memory_space<vmem>>, %arg3: memref<64x1xf32, #tpu.memory_space<vmem>>, %arg4: memref<64x2xf32, #tpu.memory_space<vmem>>) attributes {dimension_semantics = [#tpu.dimension_semantics<parallel>], iteration_bounds = array<i64: 1>, scalar_prefetch = 0 : i64, scratch_operands = 0 : i64, tpu.core_type = #tpu.core_type<tc>, window_params = [{pipeline_mode = #tpu.pipeline_mode<synchronous>, transform_indices = @transform_0, window_bounds = array<i64: 64, 32>}, {transform_indices = @transform_1, window_bounds = array<i64: 32, 2>}, {pipeline_mode = #tpu.pipeline_mode<synchronous>, transform_indices = @transform_2, window_bounds = array<i64: 64, 1>}, {transform_indices = @transform_3, window_bounds = array<i64: 64, 2>}]} {
    %c0 = arith.constant 0 : index
    %c0_0 = arith.constant 0 : index
    %0 = vector.load %arg1[%c0, %c0_0] : memref<64x32xbf16, #tpu.memory_space<vmem>>, vector<64x32xbf16>
    %c0_1 = arith.constant 0 : index
    %c0_2 = arith.constant 0 : index
    %1 = vector.load %arg2[%c0_1, %c0_2] : memref<32x2xbf16, #tpu.memory_space<vmem>>, vector<32x2xbf16>
    %cst = arith.constant dense<0.000000e+00> : vector<64x2xf32>
    %2 = tpu.matmul %0, %1, %cst {dimension_numbers = #tpu.dot_dimension_numbers<[1], [0], [0], [1], [0, 0, 1, 1], [], []>} : vector<64x32xbf16>, vector<32x2xbf16>, vector<64x2xf32> -> vector<64x2xf32>
    %c0_3 = arith.constant 0 : index
    %c0_4 = arith.constant 0 : index
    %3 = vector.load %arg3[%c0_3, %c0_4] : memref<64x1xf32, #tpu.memory_space<vmem>>, vector<64x1xf32>
    %4 = vector.broadcast %3 : vector<64x1xf32> to vector<64x2xf32>
    %5 = arith.addf %2, %4 : vector<64x2xf32>
    %c0_5 = arith.constant 0 : index
    %c0_6 = arith.constant 0 : index
    %6 = vector.load %arg4[%c0_5, %c0_6] : memref<64x2xf32, #tpu.memory_space<vmem>>, vector<64x2xf32>
    tpu.vector_store %arg4[%c0_5, %c0_6], %5 {strides = array<i32>} : memref<64x2xf32, #tpu.memory_space<vmem>>, vector<64x2xf32>,
    return
  }
  func.func @transform_0(%arg0: i32) -> (i32, i32) {
    %c0_i32 = arith.constant 0 : i32
    %c0_i32_0 = arith.constant 0 : i32
    %c0_i32_1 = arith.constant 0 : i32
    return %c0_i32, %c0_i32_0 : i32, i32
  }
  func.func @transform_1(%arg0: i32) -> (i32, i32) {
    %c0_i32 = arith.constant 0 : i32
    %c0_i32_0 = arith.constant 0 : i32
    return %c0_i32, %arg0 : i32, i32
  }
  func.func @transform_2(%arg0: i32) -> (i32, i32) {
    %c0_i32 = arith.constant 0 : i32
    %c0_i32_0 = arith.constant 0 : i32
    %c0_i32_1 = arith.constant 0 : i32
    return %c0_i32, %c0_i32_0 : i32, i32
  }
  func.func @transform_3(%arg0: i32) -> (i32, i32) {
    %c0_i32 = arith.constant 0 : i32
    %c0_i32_0 = arith.constant 0 : i32
    return %c0_i32, %arg0 : i32, i32
  }
}

module attributes {stable_mosaic.version = 11 : i64} {
  func.func @_conv_res_kernel(%arg0: i32, %arg1: memref<64x1728xbf16, #tpu.memory_space<vmem>>, %arg2: memref<1728x2xbf16, #tpu.memory_space<vmem>>, %arg3: memref<64x1xf32, #tpu.memory_space<vmem>>, %arg4: memref<64x2xf32, #tpu.memory_space<vmem>>, %arg5: memref<64x2xf32, #tpu.memory_space<vmem>>) attributes {dimension_semantics = [#tpu.dimension_semantics<parallel>], iteration_bounds = array<i64: 1>, scalar_prefetch = 0 : i64, scratch_operands = 0 : i64, tpu.core_type = #tpu.core_type<tc>, window_params = [{pipeline_mode = #tpu.pipeline_mode<synchronous>, transform_indices = @transform_0, window_bounds = array<i64: 64, 1728>}, {transform_indices = @transform_1, window_bounds = array<i64: 1728, 2>}, {pipeline_mode = #tpu.pipeline_mode<synchronous>, transform_indices = @transform_2, window_bounds = array<i64: 64, 1>}, {transform_indices = @transform_3, window_bounds = array<i64: 64, 2>}, {transform_indices = @transform_4, window_bounds = array<i64: 64, 2>}]} {
    %c0 = arith.constant 0 : index
    %c0_0 = arith.constant 0 : index
    %0 = vector.load %arg1[%c0, %c0_0] : memref<64x1728xbf16, #tpu.memory_space<vmem>>, vector<64x1728xbf16>
    %c0_1 = arith.constant 0 : index
    %c0_2 = arith.constant 0 : index
    %1 = vector.load %arg2[%c0_1, %c0_2] : memref<1728x2xbf16, #tpu.memory_space<vmem>>, vector<1728x2xbf16>
    %cst = arith.constant dense<0.000000e+00> : vector<64x2xf32>
    %2 = tpu.matmul %0, %1, %cst {dimension_numbers = #tpu.dot_dimension_numbers<[1], [0], [0], [1], [0, 0, 1, 1], [], []>} : vector<64x1728xbf16>, vector<1728x2xbf16>, vector<64x2xf32> -> vector<64x2xf32>
    %c0_3 = arith.constant 0 : index
    %c0_4 = arith.constant 0 : index
    %3 = vector.load %arg3[%c0_3, %c0_4] : memref<64x1xf32, #tpu.memory_space<vmem>>, vector<64x1xf32>
    %4 = vector.broadcast %3 : vector<64x1xf32> to vector<64x2xf32>
    %5 = arith.addf %2, %4 : vector<64x2xf32>
    %c0_5 = arith.constant 0 : index
    %c0_6 = arith.constant 0 : index
    %6 = vector.load %arg4[%c0_5, %c0_6] : memref<64x2xf32, #tpu.memory_space<vmem>>, vector<64x2xf32>
    %7 = arith.addf %5, %6 : vector<64x2xf32>
    %cst_7 = arith.constant 0.000000e+00 : f32
    %8 = vector.broadcast %cst_7 : f32 to vector<64x2xf32>
    %9 = arith.maximumf %7, %8 : vector<64x2xf32>
    %c0_8 = arith.constant 0 : index
    %c0_9 = arith.constant 0 : index
    %10 = vector.load %arg5[%c0_8, %c0_9] : memref<64x2xf32, #tpu.memory_space<vmem>>, vector<64x2xf32>
    tpu.vector_store %arg5[%c0_8, %c0_9], %9 {strides = array<i32>} : memref<64x2xf32, #tpu.memory_space<vmem>>, vector<64x2xf32>,
    return
  }
  func.func @transform_0(%arg0: i32) -> (i32, i32) {
    %c0_i32 = arith.constant 0 : i32
    %c0_i32_0 = arith.constant 0 : i32
    %c0_i32_1 = arith.constant 0 : i32
    return %c0_i32, %c0_i32_0 : i32, i32
  }
  func.func @transform_1(%arg0: i32) -> (i32, i32) {
    %c0_i32 = arith.constant 0 : i32
    %c0_i32_0 = arith.constant 0 : i32
    return %c0_i32, %arg0 : i32, i32
  }
  func.func @transform_2(%arg0: i32) -> (i32, i32) {
    %c0_i32 = arith.constant 0 : i32
    %c0_i32_0 = arith.constant 0 : i32
    %c0_i32_1 = arith.constant 0 : i32
    return %c0_i32, %c0_i32_0 : i32, i32
  }
  func.func @transform_3(%arg0: i32) -> (i32, i32) {
    %c0_i32 = arith.constant 0 : i32
    %c0_i32_0 = arith.constant 0 : i32
    return %c0_i32, %arg0 : i32, i32
  }
  func.func @transform_4(%arg0: i32) -> (i32, i32) {
    %c0_i32 = arith.constant 0 : i32
    %c0_i32_0 = arith.constant 0 : i32
    return %c0_i32, %arg0 : i32, i32
  }
}

</mosaic_0001>

<llo_original>
// kernel: _lambda_.13
$region0: #{_lambda_.13}
  #allocation0 [shape = 'u32[]', space=smem, size = 0x4, offset = 0x4, fixed_abs, tag = 'smem constant byte address 0x4 - core index']
  #allocation1 [shape = 'u32[72,128]{1,0:T(1,128)}', space=vmem, size = 0x9000, scoped, tag = 'internal scratch']
  %s0 = inlined_call_operand.vmem [shape: bf16[8,343], index: 0, kind: input, shape index: {}]
  %s1 = inlined_call_operand.vmem [shape: bf16[343,1024], index: 1, kind: input, shape index: {}]
  %s2 = inlined_call_operand.vmem [shape: f32[8,1], index: 2, kind: input, shape index: {}]
  %s3 = inlined_call_operand.vmem [shape: f32[8,1024], index: 3, kind: output, shape index: {}]
  %s4 = sld [smem:[#allocation0]]
  $region68: #{_lambda_.13} parent=0
    _
  %s6 = ssub.s32 1, %s4
  %s7 = scalar_select 0, %s6, %s4
  $region1: #{_lambda_.13} parent=0
    #allocation2 [shape = 'u8[704512]{0}', space=vmem, size = 0xac000, scoped, tag = 'input window, operand 1']
    loop: start=0, step=1, limit=4
    $region2: #{_lambda_.13} parent=1 // loop_pre_header
      _
    $region3: #{_lambda_.13} parent=1 // loop_header
      %s9 = sphi 0, %s13
      %p10 = scmp.ge.s32.totalorder %s9, 4
      %s17 = sphi 0, %s17
      %s19 = sphi 0, %s17
      %s20 = sphi 0, %s19
      %s34 = sphi 0, %s20
      %s40 = sphi 0, %s42
      %s43 = sphi 0, %s40
      %s44 = sphi 0, %s43
      %s60 = sphi 0, %s44
      %s64 = sphi 0, %s64
      %s66 = sphi 0, %s64
      %s67 = sphi 0, %s66
      %s81 = sphi 0, %s67
      %s87 = sphi 0, %s89
      %s90 = sphi 0, %s87
      %s91 = sphi 0, %s90
      %s107 = sphi 0, %s91
    $region4: #{_lambda_.13} parent=1 // loop_header_branch
      %12 = sbr.rel (%p10) target = $region8
    $region5: #{_lambda_.13} parent=1 // loop_body
      %s14 = ssub.s32 %s9, 1
      %s15 = ssub.s32 %s9, 2
      %s16 = sadd.s32 %s9, 1
      %s18 = sadd.s32 %s17, 1
      %p21 = scmp.eq.s32.totalorder %s9, 1
      %p22 = scmp.ne.s32.totalorder %s17, %s19
      %p23 = scmp.eq.s32.totalorder %s9, 0
      %p24 = por %p22, %p23
      %p25 = scmp.ne.s32.totalorder %s17, %s19
      %p26 = scmp.eq.s32.totalorder %s14, 1
      %p27 = por %p25, %p26
      %p28 = scmp.ne.s32.totalorder %s19, %s20
      %p29 = scmp.eq.s32.totalorder %s14, 0
      %p30 = por %p28, %p29
      %p31 = scmp.ne.s32.totalorder %s19, %s20
      %p32 = scmp.eq.s32.totalorder %s15, 1
      %p33 = por %p31, %p32
      %p35 = scmp.ne.s32.totalorder %s20, %s34
      %p36 = scmp.eq.s32.totalorder %s15, 0
      %p37 = por %p35, %p36
      %s38 = ssub.s32 %s9, %s16
      %p39 = scmp.eq.s32.totalorder %s38, 0
      %s41 = sadd.s32 %s40, 1
      %s42 = scalar_select %p39, %s40, %s41
      %p45 = pneg %p39
      %p46 = scmp.eq.s32.totalorder %s9, 1
      %p47 = por %p45, %p46
      %p48 = scmp.ne.s32.totalorder %s40, %s43
      %p49 = scmp.eq.s32.totalorder %s9, 0
      %p50 = por %p48, %p49
      %p51 = scmp.ne.s32.totalorder %s40, %s43
      %p52 = scmp.eq.s32.totalorder %s14, 1
      %p53 = por %p51, %p52
      %p54 = scmp.ne.s32.totalorder %s43, %s44
      %p55 = scmp.eq.s32.totalorder %s14, 0
      %p56 = por %p54, %p55
      %p57 = scmp.ne.s32.totalorder %s43, %s44
      %p58 = scmp.eq.s32.totalorder %s15, 1
      %p59 = por %p57, %p58
      %p61 = scmp.ne.s32.totalorder %s44, %s60
      %p62 = scmp.eq.s32.totalorder %s15, 0
      %p63 = por %p61, %p62
      %s65 = sadd.s32 %s64, 1
      %p68 = scmp.eq.s32.totalorder %s9, 1
      %p69 = scmp.ne.s32.totalorder %s64, %s66
      %p70 = scmp.eq.s32.totalorder %s9, 0
      %p71 = por %p69, %p70
      %p72 = scmp.ne.s32.totalorder %s64, %s66
      %p73 = scmp.eq.s32.totalorder %s14, 1
      %p74 = por %p72, %p73
      %p75 = scmp.ne.s32.totalorder %s66, %s67
      %p76 = scmp.eq.s32.totalorder %s14, 0
      %p77 = por %p75, %p76
      %p78 = scmp.ne.s32.totalorder %s66, %s67
      %p79 = scmp.eq.s32.totalorder %s15, 1
      %p80 = por %p78, %p79
      %p82 = scmp.ne.s32.totalorder %s67, %s81
      %p83 = scmp.eq.s32.totalorder %s15, 0
      %p84 = por %p82, %p83
      %s85 = ssub.s32 %s9, %s16
      %p86 = scmp.eq.s32.totalorder %s85, 0
      %s88 = sadd.s32 %s87, 1
      %s89 = scalar_select %p86, %s87, %s88
      %p92 = pneg %p86
      %p93 = scmp.eq.s32.totalorder %s9, 1
      %p94 = por %p92, %p93
      %p95 = scmp.ne.s32.totalorder %s87, %s90
      %p96 = scmp.eq.s32.totalorder %s9, 0
      %p97 = por %p95, %p96
      %p98 = scmp.ne.s32.totalorder %s87, %s90
      %p99 = scmp.eq.s32.totalorder %s14, 1
      %p100 = por %p98, %p99
      %p101 = scmp.ne.s32.totalorder %s90, %s91
      %p102 = scmp.eq.s32.totalorder %s14, 0
      %p103 = por %p101, %p102
      %p104 = scmp.ne.s32.totalorder %s90, %s91
      %p105 = scmp.eq.s32.totalorder %s15, 1
      %p106 = por %p104, %p105
      %p108 = scmp.ne.s32.totalorder %s91, %s107
      %p109 = scmp.eq.s32.totalorder %s15, 0
      %p110 = por %p108, %p109
      %p111 = scmp.le.s32.totalorder 1, %s9
      %p112 = scmp.lt.s32.totalorder %s9, 3
      %p113 = pnand %p111, %p112
      %p114 = pneg %p113
      // Predicated region
      $region9: #{_lambda_.13} parent=5 // pred_check
        _
      $region10: #{_lambda_.13} parent=5 // pred_check_branch
        %116 = sbr.rel (%p113) target = $region12
      $region11: #{_lambda_.13} parent=5 // pred_region
        %s117 = ssub.s32 %s9, 1
        // Predicated region
        $region13: #{_lambda_.13} parent=11 // pred_check
          %p118 = pneg %p30
        $region14: #{_lambda_.13} parent=11 // pred_check_branch
          %120 = sbr.rel (%p118) target = $region16
        $region15: #{_lambda_.13} parent=11 // pred_region
          _
        $region16: #{_lambda_.13} parent=11 // pred_fallthru
          _
        // Predicated region
        $region17: #{_lambda_.13} parent=11 // pred_check
          %p121 = pneg %p77
        $region18: #{_lambda_.13} parent=11 // pred_check_branch
          %123 = sbr.rel (%p121) target = $region20
        $region19: #{_lambda_.13} parent=11 // pred_region
          _
        $region20: #{_lambda_.13} parent=11 // pred_fallthru
          _
      $region12: #{_lambda_.13} parent=5 // pred_fallthru
        _
      %p124 = scmp.lt.s32.totalorder %s9, 2
      // Predicated region
      $region21: #{_lambda_.13} parent=5 // pred_check
        %p125 = pneg %p124
      $region22: #{_lambda_.13} parent=5 // pred_check_branch
        %127 = sbr.rel (%p125) target = $region24
      $region23: #{_lambda_.13} parent=5 // pred_region
        // Predicated region
        $region25: #{_lambda_.13} parent=23 // pred_check
          %p128 = pneg %p50
        $region26: #{_lambda_.13} parent=23 // pred_check_branch
          %130 = sbr.rel (%p128) target = $region28
        $region27: #{_lambda_.13} parent=23 // pred_region
          %s131 = sand.u32 %s40, 1
          %s132 = sand.u32 %s40, 1
          %s133 = smul.addr %s132, 688
          %s134 = scalar_lea.vmem [#allocation2], %s133
          %s135 = smul.u32 4, %s9
          %s136 = smul.addr %s135, 4
          %s137 = scalar_lea.vmem %s1, %s136
          // Predicated region
          $region29: #{_lambda_.13} parent=27 // pred_check
            _
          $region30: #{_lambda_.13} parent=27 // pred_check_branch
            %139 = sbr.rel (0) target = $region32
          $region31: #{_lambda_.13} parent=27 // pred_region
            // Predicated region
            $region33: #{_lambda_.13} parent=31 // pred_check
              _
            $region34: #{_lambda_.13} parent=31 // pred_check_branch
              %141 = sbr.rel (0) target = $region36
            $region35: #{_lambda_.13} parent=31 // pred_region
              loop: start=0, step=1, limit=1
              $region37: #{_lambda_.13} parent=35 // loop_pre_header
                _
              $region38: #{_lambda_.13} parent=35 // loop_header
                %s143 = sphi 0, %s147
                %p144 = scmp.ge.s32.totalorder %s143, 1
                %s148 = sphi %s137, %s137
                %s149 = sphi %s134, %s134
              $region39: #{_lambda_.13} parent=35 // loop_header_branch
                %146 = sbr.rel (%p144) target = $region43
              $region40: #{_lambda_.13} parent=35 // loop_body
                %v150 = vld [vmem:[%s148] sm:$0xff]
                %151 = vst [vmem:[%s149] sm:$0xff] %v150
                %v152 = vld [vmem:[%s148 + $0x8] sm:$0xff]
                %153 = vst [vmem:[%s149 + $0x8] sm:$0xff] %v152
                %v154 = vld [vmem:[%s148 + $0x20] sm:$0xff]
                %155 = vst [vmem:[%s149 + $0x10] sm:$0xff] %v154
                %v156 = vld [vmem:[%s148 + $0x28] sm:$0xff]
                %157 = vst [vmem:[%s149 + $0x18] sm:$0xff] %v156
                %v158 = vld [vmem:[%s148 + $0x40] sm:$0xff]
                %159 = vst [vmem:[%s149 + $0x20] sm:$0xff] %v158
                %v160 = vld [vmem:[%s148 + $0x48] sm:$0xff]
                %161 = vst [vmem:[%s149 + $0x28] sm:$0xff] %v160
                %v162 = vld [vmem:[%s148 + $0x60] sm:$0xff]
                %163 = vst [vmem:[%s149 + $0x30] sm:$0xff] %v162
                %v164 = vld [vmem:[%s148 + $0x68] sm:$0xff]
                %165 = vst [vmem:[%s149 + $0x38] sm:$0xff] %v164
                %v166 = vld [vmem:[%s148 + $0x80] sm:$0xff]
                %167 = vst [vmem:[%s149 + $0x40] sm:$0xff] %v166
                %v168 = vld [vmem:[%s148 + $0x88] sm:$0xff]
                %169 = vst [vmem:[%s149 + $0x48] sm:$0xff] %v168
                %v170 = vld [vmem:[%s148 + $0xa0] sm:$0xff]
                %171 = vst [vmem:[%s149 + $0x50] sm:$0xff] %v170
                %v172 = vld [vmem:[%s148 + $0xa8] sm:$0xff]
                %173 = vst [vmem:[%s149 + $0x58] sm:$0xff] %v172
                %v174 = vld [vmem:[%s148 + $0xc0] sm:$0xff]
                %175 = vst [vmem:[%s149 + $0x60] sm:$0xff] %v174
                %v176 = vld [vmem:[%s148 + $0xc8] sm:$0xff]
                %177 = vst [vmem:[%s149 + $0x68] sm:$0xff] %v176
                %v178 = vld [vmem:[%s148 + $0xe0] sm:$0xff]
                %179 = vst [vmem:[%s149 + $0x70] sm:$0xff] %v178
                %v180 = vld [vmem:[%s148 + $0xe8] sm:$0xff]
                %181 = vst [vmem:[%s149 + $0x78] sm:$0xff] %v180
                %v182 = vld [vmem:[%s148 + $0x100] sm:$0xff]
                %183 = vst [vmem:[%s149 + $0x80] sm:$0xff] %v182
                %v184 = vld [vmem:[%s148 + $0x108] sm:$0xff]
                %185 = vst [vmem:[%s149 + $0x88] sm:$0xff] %v184
                %v186 = vld [vmem:[%s148 + $0x120] sm:$0xff]
                %187 = vst [vmem:[%s149 + $0x90] sm:$0xff] %v186
                %v188 = vld [vmem:[%s148 + $0x128] sm:$0xff]
                %189 = vst [vmem:[%s149 + $0x98] sm:$0xff] %v188
                %v190 = vld [vmem:[%s148 + $0x140] sm:$0xff]
                %191 = vst [vmem:[%s149 + $0xa0] sm:$0xff] %v190
                %v192 = vld [vmem:[%s148 + $0x148] sm:$0xff]
                %193 = vst [vmem:[%s149 + $0xa8] sm:$0xff] %v192
                %v194 = vld [vmem:[%s148 + $0x160] sm:$0xff]
                %195 = vst [vmem:[%s149 + $0xb0] sm:$0xff] %v194
                %v196 = vld [vmem:[%s148 + $0x168] sm:$0xff]
                %197 = vst [vmem:[%s149 + $0xb8] sm:$0xff] %v196
                %v198 = vld [vmem:[%s148 + $0x180] sm:$0xff]
                %199 = vst [vmem:[%s149 + $0xc0] sm:$0xff] %v198
                %v200 = vld [vmem:[%s148 + $0x188] sm:$0xff]
                %201 = vst [vmem:[%s149 + $0xc8] sm:$0xff] %v200
                %v202 = vld [vmem:[%s148 + $0x1a0] sm:$0xff]
                %203 = vst [vmem:[%s149 + $0xd0] sm:$0xff] %v202
                %v204 = vld [vmem:[%s148 + $0x1a8] sm:$0xff]
                %205 = vst [vmem:[%s149 + $0xd8] sm:$0xff] %v204
                %v206 = vld [vmem:[%s148 + $0x1c0] sm:$0xff]
                %207 = vst [vmem:[%s149 + $0xe0] sm:$0xff] %v206
                %v208 = vld [vmem:[%s148 + $0x1c8] sm:$0xff]
                %209 = vst [vmem:[%s149 + $0xe8] sm:$0xff] %v208
                %v210 = vld [vmem:[%s148 + $0x1e0] sm:$0xff]
                %211 = vst [vmem:[%s149 + $0xf0] sm:$0xff] %v210
                %v212 = vld [vmem:[%s148 + $0x1e8] sm:$0xff]
                %213 = vst [vmem:[%s149 + $0xf8] sm:$0xff] %v212
                %v214 = vld [vmem:[%s148 + $0x200] sm:$0xff]
                %215 = vst [vmem:[%s149 + $0x100] sm:$0xff] %v214
                %v216 = vld [vmem:[%s148 + $0x208] sm:$0xff]
                %217 = vst [vmem:[%s149 + $0x108] sm:$0xff] %v216
                %v218 = vld [vmem:[%s148 + $0x220] sm:$0xff]
                %219 = vst [vmem:[%s149 + $0x110] sm:$0xff] %v218
                %v220 = vld [vmem:[%s148 + $0x228] sm:$0xff]
                %221 = vst [vmem:[%s149 + $0x118] sm:$0xff] %v220
                %v222 = vld [vmem:[%s148 + $0x240] sm:$0xff]
                %223 = vst [vmem:[%s149 + $0x120] sm:$0xff] %v222
                %v224 = vld [vmem:[%s148 + $0x248] sm:$0xff]
                %225 = vst [vmem:[%s149 + $0x128] sm:$0xff] %v224
                %v226 = vld [vmem:[%s148 + $0x260] sm:$0xff]
                %227 = vst [vmem:[%s149 + $0x130] sm:$0xff] %v226
                %v228 = vld [vmem:[%s148 + $0x268] sm:$0xff]
                %229 = vst [vmem:[%s149 + $0x138] sm:$0xff] %v228
                %v230 = vld [vmem:[%s148 + $0x280] sm:$0xff]
                %231 = vst [vmem:[%s149 + $0x140] sm:$0xff] %v230
                %v232 = vld [vmem:[%s148 + $0x288] sm:$0xff]
                %233 = vst [vmem:[%s149 + $0x148] sm:$0xff] %v232
                %v234 = vld [vmem:[%s148 + $0x2a0] sm:$0xff]
                %235 = vst [vmem:[%s149 + $0x150] sm:$0xff] %v234
                %v236 = vld [vmem:[%s148 + $0x2a8] sm:$0xff]
                %237 = vst [vmem:[%s149 + $0x158] sm:$0xff] %v236
                %v238 = vld [vmem:[%s148 + $0x2c0] sm:$0xff]
                %239 = vst [vmem:[%s149 + $0x160] sm:$0xff] %v238
                %v240 = vld [vmem:[%s148 + $0x2c8] sm:$0xff]
                %241 = vst [vmem:[%s149 + $0x168] sm:$0xff] %v240
                %v242 = vld [vmem:[%s148 + $0x2e0] sm:$0xff]
                %243 = vst [vmem:[%s149 + $0x170] sm:$0xff] %v242
                %v244 = vld [vmem:[%s148 + $0x2e8] sm:$0xff]
                %245 = vst [vmem:[%s149 + $0x178] sm:$0xff] %v244
                %v246 = vld [vmem:[%s148 + $0x300] sm:$0xff]
                %247 = vst [vmem:[%s149 + $0x180] sm:$0xff] %v246
                %v248 = vld [vmem:[%s148 + $0x308] sm:$0xff]
                %249 = vst [vmem:[%s149 + $0x188] sm:$0xff] %v248
                %v250 = vld [vmem:[%s148 + $0x320] sm:$0xff]
                %251 = vst [vmem:[%s149 + $0x190] sm:$0xff] %v250
                %v252 = vld [vmem:[%s148 + $0x328] sm:$0xff]
                %253 = vst [vmem:[%s149 + $0x198] sm:$0xff] %v252
                %v254 = vld [vmem:[%s148 + $0x340] sm:$0xff]
                %255 = vst [vmem:[%s149 + $0x1a0] sm:$0xff] %v254
                %v256 = vld [vmem:[%s148 + $0x348] sm:$0xff]
                %257 = vst [vmem:[%s149 + $0x1a8] sm:$0xff] %v256
                %v258 = vld [vmem:[%s148 + $0x360] sm:$0xff]
                %259 = vst [vmem:[%s149 + $0x1b0] sm:$0xff] %v258
                %v260 = vld [vmem:[%s148 + $0x368] sm:$0xff]
                %261 = vst [vmem:[%s149 + $0x1b8] sm:$0xff] %v260
                %v262 = vld [vmem:[%s148 + $0x380] sm:$0xff]
                %263 = vst [vmem:[%s149 + $0x1c0] sm:$0xff] %v262
                %v264 = vld [vmem:[%s148 + $0x388] sm:$0xff]
                %265 = vst [vmem:[%s149 + $0x1c8] sm:$0xff] %v264
                %v266 = vld [vmem:[%s148 + $0x3a0] sm:$0xff]
                %267 = vst [vmem:[%s149 + $0x1d0] sm:$0xff] %v266
                %v268 = vld [vmem:[%s148 + $0x3a8] sm:$0xff]
                %269 = vst [vmem:[%s149 + $0x1d8] sm:$0xff] %v268
                %v270 = vld [vmem:[%s148 + $0x3c0] sm:$0xff]
                %271 = vst [vmem:[%s149 + $0x1e0] sm:$0xff] %v270
                %v272 = vld [vmem:[%s148 + $0x3c8] sm:$0xff]
                %273 = vst [vmem:[%s149 + $0x1e8] sm:$0xff] %v272
                %v274 = vld [vmem:[%s148 + $0x3e0] sm:$0xff]
                %275 = vst [vmem:[%s149 + $0x1f0] sm:$0xff] %v274
                %v276 = vld [vmem:[%s148 + $0x3e8] sm:$0xff]
                %277 = vst [vmem:[%s149 + $0x1f8] sm:$0xff] %v276
                %v278 = vld [vmem:[%s148 + $0x400] sm:$0xff]
                %279 = vst [vmem:[%s149 + $0x200] sm:$0xff] %v278
                %v280 = vld [vmem:[%s148 + $0x408] sm:$0xff]
                %281 = vst [vmem:[%s149 + $0x208] sm:$0xff] %v280
                %v282 = vld [vmem:[%s148 + $0x420] sm:$0xff]
                %283 = vst [vmem:[%s149 + $0x210] sm:$0xff] %v282
                %v284 = vld [vmem:[%s148 + $0x428] sm:$0xff]
                %285 = vst [vmem:[%s149 + $0x218] sm:$0xff] %v284
                %v286 = vld [vmem:[%s148 + $0x440] sm:$0xff]
                %287 = vst [vmem:[%s149 + $0x220] sm:$0xff] %v286
                %v288 = vld [vmem:[%s148 + $0x448] sm:$0xff]
                %289 = vst [vmem:[%s149 + $0x228] sm:$0xff] %v288
                %v290 = vld [vmem:[%s148 + $0x460] sm:$0xff]
                %291 = vst [vmem:[%s149 + $0x230] sm:$0xff] %v290
                %v292 = vld [vmem:[%s148 + $0x468] sm:$0xff]
                %293 = vst [vmem:[%s149 + $0x238] sm:$0xff] %v292
                %v294 = vld [vmem:[%s148 + $0x480] sm:$0xff]
                %295 = vst [vmem:[%s149 + $0x240] sm:$0xff] %v294
                %v296 = vld [vmem:[%s148 + $0x488] sm:$0xff]
                %297 = vst [vmem:[%s149 + $0x248] sm:$0xff] %v296
                %v298 = vld [vmem:[%s148 + $0x4a0] sm:$0xff]
                %299 = vst [vmem:[%s149 + $0x250] sm:$0xff] %v298
                %v300 = vld [vmem:[%s148 + $0x4a8] sm:$0xff]
                %301 = vst [vmem:[%s149 + $0x258] sm:$0xff] %v300
                %v302 = vld [vmem:[%s148 + $0x4c0] sm:$0xff]
                %303 = vst [vmem:[%s149 + $0x260] sm:$0xff] %v302
                %v304 = vld [vmem:[%s148 + $0x4c8] sm:$0xff]
                %305 = vst [vmem:[%s149 + $0x268] sm:$0xff] %v304
                %v306 = vld [vmem:[%s148 + $0x4e0] sm:$0xff]
                %307 = vst [vmem:[%s149 + $0x270] sm:$0xff] %v306
                %v308 = vld [vmem:[%s148 + $0x4e8] sm:$0xff]
                %309 = vst [vmem:[%s149 + $0x278] sm:$0xff] %v308
                %v310 = vld [vmem:[%s148 + $0x500] sm:$0xff]
                %311 = vst [vmem:[%s149 + $0x280] sm:$0xff] %v310
                %v312 = vld [vmem:[%s148 + $0x508] sm:$0xff]
                %313 = vst [vmem:[%s149 + $0x288] sm:$0xff] %v312
                %v314 = vld [vmem:[%s148 + $0x520] sm:$0xff]
                %315 = vst [vmem:[%s149 + $0x290] sm:$0xff] %v314
                %v316 = vld [vmem:[%s148 + $0x528] sm:$0xff]
                %317 = vst [vmem:[%s149 + $0x298] sm:$0xff] %v316
                %v318 = vld [vmem:[%s148 + $0x540] sm:$0xff]
                %319 = vst [vmem:[%s149 + $0x2a0] sm:$0xff] %v318
                %v320 = vld [vmem:[%s148 + $0x548] sm:$0xff]
                %321 = vst [vmem:[%s149 + $0x2a8] sm:$0xff] %v320
              $region41: #{_lambda_.13} parent=35 // loop_footer
                %s147 = sadd.s32 1, %s143
              $region42: #{_lambda_.13} parent=35 // loop_footer_branch
                %142 = sbr.rel target = $region38
              $region43: #{_lambda_.13} parent=35 // loop_exit
                _
            $region36: #{_lambda_.13} parent=31 // pred_fallthru
              _
            // Predicated region
            $region44: #{_lambda_.13} parent=31 // pred_check
              _
            $region45: #{_lambda_.13} parent=31 // pred_check_branch
              %323 = sbr.rel target = $region47
            $region46: #{_lambda_.13} parent=31 // pred_region
              _
            $region47: #{_lambda_.13} parent=31 // pred_fallthru
              _
          $region32: #{_lambda_.13} parent=27 // pred_fallthru
            _
          %324 = vnop
        $region28: #{_lambda_.13} parent=23 // pred_fallthru
          _
      $region24: #{_lambda_.13} parent=5 // pred_fallthru
        _
      %p325 = scmp.le.s32.totalorder 1, %s9
      %p326 = scmp.lt.s32.totalorder %s9, 3
      %p327 = pnand %p325, %p326
      %p328 = pneg %p327
      // Predicated region
      $region48: #{_lambda_.13} parent=5 // pred_check
        _
      $region49: #{_lambda_.13} parent=5 // pred_check_branch
        %330 = sbr.rel (%p327) target = $region51
      $region50: #{_lambda_.13} parent=5 // pred_region
        %s331 = ssub.s32 %s9, 1
        %s332 = sand.u32 %s43, 1
        %s333 = sand.u32 %s43, 1
        %s334 = smul.addr %s333, 688
        %s335 = scalar_lea.vmem [#allocation2], %s334
        // Predicated region
        $region52: #{_lambda_.13} parent=50 // pred_check
          %p336 = pneg %p56
        $region53: #{_lambda_.13} parent=50 // pred_check_branch
          %338 = sbr.rel (%p336) target = $region55
        $region54: #{_lambda_.13} parent=50 // pred_region
          _
        $region55: #{_lambda_.13} parent=50 // pred_fallthru
          _
        %p339 = pneg %p30
        %p340 = pneg %p27
        %s341 = sand.u32 %s43, 1
        %s342 = sand.u32 %s43, 1
        %s343 = smul.addr %s342, 688
        %s344 = scalar_lea.vmem [#allocation2], %s343
        %p345 = pneg %p56
        %p346 = pneg %p53
        %p347 = pneg %p77
        %p348 = pneg %p74
        %p349 = pneg %p103
        %p350 = pneg %p100
        %s351 = smul.u32 4, %s14
        %p352 = scmp.lt.s32.totalorder %s351, 7
        %s353 = scalar_select %p352, %s351, 7
        %s354 = smul.addr %s353, 8
        %s355 = scalar_lea.vmem %s3, %s354
        %s356 = smul.u32 4, %s14
        %s357 = smul.u32 4, %s14
        %p358 = scmp.lt.s32.totalorder %s357, 7
        %s359 = scalar_select %p358, %s357, 7
        %s360 = smul.addr %s359, 8
        %s361 = scalar_lea.vmem %s3, %s360
        %s362 = smul.u32 4, %s14
        %v364 = vld [vmem:[%s0] sm:$0xff]
        %v365 = vld [vmem:[%s0 + $0x8] sm:$0xf]
        %v366 = vld [vmem:[%s335] sm:$0xff]
        %v367 = vld [vmem:[%s335 + $0x8] sm:$0xff]
        %v368 = vld [vmem:[%s335 + $0x10] sm:$0xff]
        %v369 = vld [vmem:[%s335 + $0x18] sm:$0xff]
        %v370 = vld [vmem:[%s335 + $0x20] sm:$0xff]
        %v371 = vld [vmem:[%s335 + $0x28] sm:$0xff]
        %v372 = vld [vmem:[%s335 + $0x30] sm:$0xff]
        %v373 = vld [vmem:[%s335 + $0x38] sm:$0xff]
        %v374 = vld [vmem:[%s335 + $0x40] sm:$0xff]
        %v375 = vld [vmem:[%s335 + $0x48] sm:$0xff]
        %v376 = vld [vmem:[%s335 + $0x50] sm:$0xff]
        %v377 = vld [vmem:[%s335 + $0x58] sm:$0xff]
        %v378 = vld [vmem:[%s335 + $0x60] sm:$0xff]
        %v379 = vld [vmem:[%s335 + $0x68] sm:$0xff]
        %v380 = vld [vmem:[%s335 + $0x70] sm:$0xff]
        %v381 = vld [vmem:[%s335 + $0x78] sm:$0xff]
        %v382 = vld [vmem:[%s335 + $0x80] sm:$0xff]
        %v383 = vld [vmem:[%s335 + $0x88] sm:$0xff]
        %v384 = vld [vmem:[%s335 + $0x90] sm:$0xff]
        %v385 = vld [vmem:[%s335 + $0x98] sm:$0xff]
        %v386 = vld [vmem:[%s335 + $0xa0] sm:$0xff]
        %v387 = vld [vmem:[%s335 + $0xa8] sm:$0xff]
        %v388 = vld [vmem:[%s335 + $0xb0] sm:$0xff]
        %v389 = vld [vmem:[%s335 + $0xb8] sm:$0xff]
        %v390 = vld [vmem:[%s335 + $0xc0] sm:$0xff]
        %v391 = vld [vmem:[%s335 + $0xc8] sm:$0xff]
        %v392 = vld [vmem:[%s335 + $0xd0] sm:$0xff]
        %v393 = vld [vmem:[%s335 + $0xd8] sm:$0xff]
        %v394 = vld [vmem:[%s335 + $0xe0] sm:$0xff]
        %v395 = vld [vmem:[%s335 + $0xe8] sm:$0xff]
        %v396 = vld [vmem:[%s335 + $0xf0] sm:$0xff]
        %v397 = vld [vmem:[%s335 + $0xf8] sm:$0xff]
        %v398 = vld [vmem:[%s335 + $0x100] sm:$0xff]
        %v399 = vld [vmem:[%s335 + $0x108] sm:$0xff]
        %v400 = vld [vmem:[%s335 + $0x110] sm:$0xff]
        %v401 = vld [vmem:[%s335 + $0x118] sm:$0xff]
        %v402 = vld [vmem:[%s335 + $0x120] sm:$0xff]
        %v403 = vld [vmem:[%s335 + $0x128] sm:$0xff]
        %v404 = vld [vmem:[%s335 + $0x130] sm:$0xff]
        %v405 = vld [vmem:[%s335 + $0x138] sm:$0xff]
        %v406 = vld [vmem:[%s335 + $0x140] sm:$0xff]
        %v407 = vld [vmem:[%s335 + $0x148] sm:$0xff]
        %v408 = vld [vmem:[%s335 + $0x150] sm:$0xff]
        %v409 = vld [vmem:[%s335 + $0x158] sm:$0xff]
        %v410 = vld [vmem:[%s335 + $0x160] sm:$0xff]
        %v411 = vld [vmem:[%s335 + $0x168] sm:$0xff]
        %v412 = vld [vmem:[%s335 + $0x170] sm:$0xff]
        %v413 = vld [vmem:[%s335 + $0x178] sm:$0xff]
        %v414 = vld [vmem:[%s335 + $0x180] sm:$0xff]
        %v415 = vld [vmem:[%s335 + $0x188] sm:$0xff]
        %v416 = vld [vmem:[%s335 + $0x190] sm:$0xff]
        %v417 = vld [vmem:[%s335 + $0x198] sm:$0xff]
        %v418 = vld [vmem:[%s335 + $0x1a0] sm:$0xff]
        %v419 = vld [vmem:[%s335 + $0x1a8] sm:$0xff]
        %v420 = vld [vmem:[%s335 + $0x1b0] sm:$0xff]
        %v421 = vld [vmem:[%s335 + $0x1b8] sm:$0xff]
        %v422 = vld [vmem:[%s335 + $0x1c0] sm:$0xff]
        %v423 = vld [vmem:[%s335 + $0x1c8] sm:$0xff]
        %v424 = vld [vmem:[%s335 + $0x1d0] sm:$0xff]
        %v425 = vld [vmem:[%s335 + $0x1d8] sm:$0xff]
        %v426 = vld [vmem:[%s335 + $0x1e0] sm:$0xff]
        %v427 = vld [vmem:[%s335 + $0x1e8] sm:$0xff]
        %v428 = vld [vmem:[%s335 + $0x1f0] sm:$0xff]
        %v429 = vld [vmem:[%s335 + $0x1f8] sm:$0xff]
        %v430 = vld [vmem:[%s335 + $0x200] sm:$0xff]
        %v431 = vld [vmem:[%s335 + $0x208] sm:$0xff]
        %v432 = vld [vmem:[%s335 + $0x210] sm:$0xff]
        %v433 = vld [vmem:[%s335 + $0x218] sm:$0xff]
        %v434 = vld [vmem:[%s335 + $0x220] sm:$0xff]
        %v435 = vld [vmem:[%s335 + $0x228] sm:$0xff]
        %v436 = vld [vmem:[%s335 + $0x230] sm:$0xff]
        %v437 = vld [vmem:[%s335 + $0x238] sm:$0xff]
        %v438 = vld [vmem:[%s335 + $0x240] sm:$0xff]
        %v439 = vld [vmem:[%s335 + $0x248] sm:$0xff]
        %v440 = vld [vmem:[%s335 + $0x250] sm:$0xff]
        %v441 = vld [vmem:[%s335 + $0x258] sm:$0xff]
        %v442 = vld [vmem:[%s335 + $0x260] sm:$0xff]
        %v443 = vld [vmem:[%s335 + $0x268] sm:$0xff]
        %v444 = vld [vmem:[%s335 + $0x270] sm:$0xff]
        %v445 = vld [vmem:[%s335 + $0x278] sm:$0xff]
        %v446 = vld [vmem:[%s335 + $0x280] sm:$0xff]
        %v447 = vld [vmem:[%s335 + $0x288] sm:$0xff]
        %v448 = vld [vmem:[%s335 + $0x290] sm:$0xff]
        %v449 = vld [vmem:[%s335 + $0x298] sm:$0xff]
        %v450 = vld [vmem:[%s335 + $0x2a0] sm:$0xff]
        %v451 = vld [vmem:[%s335 + $0x2a8] sm:$0xff]
        %v452 = vld [vmem:[%s2] sm:$0xff]
        %454 = vset.pattern.permute.xlu0 0
        %455 = vperm.xlu0 %454, %v452
        %v456 = vpop.permute.xlu0 %455
        %v460 = vunpack.c.l.b16 %v364
        %v461 = vunpack.c.h.b16 %v364
        %v462 = vunpack.c.l.b16 %v365
        %v463 = vpack.c.b16 %v460, %v460
        %v464 = vpack.c.b16 %v461, %v461
        %v465 = vpack.c.b16 %v462, %v462
        %v554 = vunpack.c.l.b16 %v366
        %v555 = vunpack.c.h.b16 %v366
        %v556 = vunpack.c.l.b16 %v367
        %v557 = vunpack.c.h.b16 %v367
        %v558 = vunpack.c.l.b16 %v368
        %v559 = vunpack.c.h.b16 %v368
        %v560 = vunpack.c.l.b16 %v369
        %v561 = vunpack.c.h.b16 %v369
        %v562 = vunpack.c.l.b16 %v370
        %v563 = vunpack.c.h.b16 %v370
        %v564 = vunpack.c.l.b16 %v371
        %v565 = vunpack.c.h.b16 %v371
        %v566 = vunpack.c.l.b16 %v372
        %v567 = vunpack.c.h.b16 %v372
        %v568 = vunpack.c.l.b16 %v373
        %v569 = vunpack.c.h.b16 %v373
        %v570 = vunpack.c.l.b16 %v374
        %v571 = vunpack.c.h.b16 %v374
        %v572 = vunpack.c.l.b16 %v375
        %v573 = vunpack.c.h.b16 %v375
        %v574 = vunpack.c.l.b16 %v376
        %v575 = vunpack.c.h.b16 %v376
        %v576 = vunpack.c.l.b16 %v377
        %v577 = vunpack.c.h.b16 %v377
        %v578 = vunpack.c.l.b16 %v378
        %v579 = vunpack.c.h.b16 %v378
        %v580 = vunpack.c.l.b16 %v379
        %v581 = vunpack.c.h.b16 %v379
        %v582 = vunpack.c.l.b16 %v380
        %v583 = vunpack.c.h.b16 %v380
        %v584 = vunpack.c.l.b16 %v381
        %v585 = vunpack.c.h.b16 %v381
        %v586 = vunpack.c.l.b16 %v382
        %v587 = vunpack.c.h.b16 %v382
        %v588 = vunpack.c.l.b16 %v383
        %v589 = vunpack.c.h.b16 %v383
        %v590 = vunpack.c.l.b16 %v384
        %v591 = vunpack.c.h.b16 %v384
        %v592 = vunpack.c.l.b16 %v385
        %v593 = vunpack.c.h.b16 %v385
        %v594 = vunpack.c.l.b16 %v386
        %v595 = vunpack.c.h.b16 %v386
        %v596 = vunpack.c.l.b16 %v387
        %v597 = vunpack.c.h.b16 %v387
        %v598 = vunpack.c.l.b16 %v388
        %v599 = vunpack.c.h.b16 %v388
        %v600 = vunpack.c.l.b16 %v389
        %v601 = vunpack.c.h.b16 %v389
        %v602 = vunpack.c.l.b16 %v390
        %v603 = vunpack.c.h.b16 %v390
        %v604 = vunpack.c.l.b16 %v391
        %v605 = vunpack.c.h.b16 %v391
        %v606 = vunpack.c.l.b16 %v392
        %v607 = vunpack.c.h.b16 %v392
        %v608 = vunpack.c.l.b16 %v393
        %v609 = vunpack.c.h.b16 %v393
        %v610 = vunpack.c.l.b16 %v394
        %v611 = vunpack.c.h.b16 %v394
        %v612 = vunpack.c.l.b16 %v395
        %v613 = vunpack.c.h.b16 %v395
        %v614 = vunpack.c.l.b16 %v396
        %v615 = vunpack.c.h.b16 %v396
        %v616 = vunpack.c.l.b16 %v397
        %v617 = vunpack.c.h.b16 %v397
        %v618 = vunpack.c.l.b16 %v398
        %v619 = vunpack.c.h.b16 %v398
        %v620 = vunpack.c.l.b16 %v399
        %v621 = vunpack.c.h.b16 %v399
        %v622 = vunpack.c.l.b16 %v400
        %v623 = vunpack.c.h.b16 %v400
        %v624 = vunpack.c.l.b16 %v401
        %v625 = vunpack.c.h.b16 %v401
        %v626 = vunpack.c.l.b16 %v402
        %v627 = vunpack.c.h.b16 %v402
        %v628 = vunpack.c.l.b16 %v403
        %v629 = vunpack.c.h.b16 %v403
        %v630 = vunpack.c.l.b16 %v404
        %v631 = vunpack.c.h.b16 %v404
        %v632 = vunpack.c.l.b16 %v405
        %v633 = vunpack.c.h.b16 %v405
        %v634 = vunpack.c.l.b16 %v406
        %v635 = vunpack.c.h.b16 %v406
        %v636 = vunpack.c.l.b16 %v407
        %v637 = vunpack.c.h.b16 %v407
        %v638 = vunpack.c.l.b16 %v408
        %v639 = vunpack.c.h.b16 %v408
        %v640 = vunpack.c.l.b16 %v409
        %v641 = vunpack.c.h.b16 %v409
        %v642 = vunpack.c.l.b16 %v410
        %v643 = vunpack.c.h.b16 %v410
        %v644 = vunpack.c.l.b16 %v411
        %v645 = vunpack.c.h.b16 %v411
        %v646 = vunpack.c.l.b16 %v412
        %v647 = vunpack.c.h.b16 %v412
        %v648 = vunpack.c.l.b16 %v413
        %v649 = vunpack.c.h.b16 %v413
        %v650 = vunpack.c.l.b16 %v414
        %v651 = vunpack.c.h.b16 %v414
        %v652 = vunpack.c.l.b16 %v415
        %v653 = vunpack.c.h.b16 %v415
        %v654 = vunpack.c.l.b16 %v416
        %v655 = vunpack.c.h.b16 %v416
        %v656 = vunpack.c.l.b16 %v417
        %v657 = vunpack.c.h.b16 %v417
        %v658 = vunpack.c.l.b16 %v418
        %v659 = vunpack.c.h.b16 %v418
        %v660 = vunpack.c.l.b16 %v419
        %v661 = vunpack.c.h.b16 %v419
        %v662 = vunpack.c.l.b16 %v420
        %v663 = vunpack.c.h.b16 %v420
        %v664 = vunpack.c.l.b16 %v421
        %v665 = vunpack.c.h.b16 %v421
        %v666 = vunpack.c.l.b16 %v422
        %v667 = vunpack.c.h.b16 %v422
        %v668 = vunpack.c.l.b16 %v423
        %v669 = vunpack.c.h.b16 %v423
        %v670 = vunpack.c.l.b16 %v424
        %v671 = vunpack.c.h.b16 %v424
        %v672 = vunpack.c.l.b16 %v425
        %v673 = vunpack.c.h.b16 %v425
        %v674 = vunpack.c.l.b16 %v426
        %v675 = vunpack.c.h.b16 %v426
        %v676 = vunpack.c.l.b16 %v427
        %v677 = vunpack.c.h.b16 %v427
        %v678 = vunpack.c.l.b16 %v428
        %v679 = vunpack.c.h.b16 %v428
        %v680 = vunpack.c.l.b16 %v429
        %v681 = vunpack.c.h.b16 %v429
        %v682 = vunpack.c.l.b16 %v430
        %v683 = vunpack.c.h.b16 %v430
        %v684 = vunpack.c.l.b16 %v431
        %v685 = vunpack.c.h.b16 %v431
        %v686 = vunpack.c.l.b16 %v432
        %v687 = vunpack.c.h.b16 %v432
        %v688 = vunpack.c.l.b16 %v433
        %v689 = vunpack.c.h.b16 %v433
        %v690 = vunpack.c.l.b16 %v434
        %v691 = vunpack.c.h.b16 %v434
        %v692 = vunpack.c.l.b16 %v435
        %v693 = vunpack.c.h.b16 %v435
        %v694 = vunpack.c.l.b16 %v436
        %v695 = vunpack.c.h.b16 %v436
        %v696 = vunpack.c.l.b16 %v437
        %v697 = vunpack.c.h.b16 %v437
        %v698 = vunpack.c.l.b16 %v438
        %v699 = vunpack.c.h.b16 %v438
        %v700 = vunpack.c.l.b16 %v439
        %v701 = vunpack.c.h.b16 %v439
        %v702 = vunpack.c.l.b16 %v440
        %v703 = vunpack.c.h.b16 %v440
        %v704 = vunpack.c.l.b16 %v441
        %v705 = vunpack.c.h.b16 %v441
        %v706 = vunpack.c.l.b16 %v442
        %v707 = vunpack.c.h.b16 %v442
        %v708 = vunpack.c.l.b16 %v443
        %v709 = vunpack.c.h.b16 %v443
        %v710 = vunpack.c.l.b16 %v444
        %v711 = vunpack.c.h.b16 %v444
        %v712 = vunpack.c.l.b16 %v445
        %v713 = vunpack.c.h.b16 %v445
        %v714 = vunpack.c.l.b16 %v446
        %v715 = vunpack.c.h.b16 %v446
        %v716 = vunpack.c.l.b16 %v447
        %v717 = vunpack.c.h.b16 %v447
        %v718 = vunpack.c.l.b16 %v448
        %v719 = vunpack.c.h.b16 %v448
        %v720 = vunpack.c.l.b16 %v449
        %v721 = vunpack.c.h.b16 %v449
        %v722 = vunpack.c.l.b16 %v450
        %v723 = vunpack.c.h.b16 %v450
        %v724 = vunpack.c.l.b16 %v451
        %v725 = vunpack.c.h.b16 %v451
        %v726 = vpack.c.b16 %v558, %v554
        %v727 = vpack.c.b16 %v559, %v555
        %v728 = vpack.c.b16 %v560, %v556
        %v729 = vpack.c.b16 %v561, %v557
        %v730 = vpack.c.b16 %v566, %v562
        %v731 = vpack.c.b16 %v567, %v563
        %v732 = vpack.c.b16 %v568, %v564
        %v733 = vpack.c.b16 %v569, %v565
        %v734 = vpack.c.b16 %v574, %v570
        %v735 = vpack.c.b16 %v575, %v571
        %v736 = vpack.c.b16 %v576, %v572
        %v737 = vpack.c.b16 %v577, %v573
        %v738 = vpack.c.b16 %v582, %v578
        %v739 = vpack.c.b16 %v583, %v579
        %v740 = vpack.c.b16 %v584, %v580
        %v741 = vpack.c.b16 %v585, %v581
        %v742 = vpack.c.b16 %v590, %v586
        %v743 = vpack.c.b16 %v591, %v587
        %v744 = vpack.c.b16 %v592, %v588
        %v745 = vpack.c.b16 %v593, %v589
        %v746 = vpack.c.b16 %v598, %v594
        %v747 = vpack.c.b16 %v599, %v595
        %v748 = vpack.c.b16 %v600, %v596
        %v749 = vpack.c.b16 %v601, %v597
        %v750 = vpack.c.b16 %v606, %v602
        %v751 = vpack.c.b16 %v607, %v603
        %v752 = vpack.c.b16 %v608, %v604
        %v753 = vpack.c.b16 %v609, %v605
        %v754 = vpack.c.b16 %v614, %v610
        %v755 = vpack.c.b16 %v615, %v611
        %v756 = vpack.c.b16 %v616, %v612
        %v757 = vpack.c.b16 %v617, %v613
        %v758 = vpack.c.b16 %v622, %v618
        %v759 = vpack.c.b16 %v623, %v619
        %v760 = vpack.c.b16 %v624, %v620
        %v761 = vpack.c.b16 %v625, %v621
        %v762 = vpack.c.b16 %v630, %v626
        %v763 = vpack.c.b16 %v631, %v627
        %v764 = vpack.c.b16 %v632, %v628
        %v765 = vpack.c.b16 %v633, %v629
        %v766 = vpack.c.b16 %v638, %v634
        %v767 = vpack.c.b16 %v639, %v635
        %v768 = vpack.c.b16 %v640, %v636
        %v769 = vpack.c.b16 %v641, %v637
        %v770 = vpack.c.b16 %v646, %v642
        %v771 = vpack.c.b16 %v647, %v643
        %v772 = vpack.c.b16 %v648, %v644
        %v773 = vpack.c.b16 %v649, %v645
        %v774 = vpack.c.b16 %v654, %v650
        %v775 = vpack.c.b16 %v655, %v651
        %v776 = vpack.c.b16 %v656, %v652
        %v777 = vpack.c.b16 %v657, %v653
        %v778 = vpack.c.b16 %v662, %v658
        %v779 = vpack.c.b16 %v663, %v659
        %v780 = vpack.c.b16 %v664, %v660
        %v781 = vpack.c.b16 %v665, %v661
        %v782 = vpack.c.b16 %v670, %v666
        %v783 = vpack.c.b16 %v671, %v667
        %v784 = vpack.c.b16 %v672, %v668
        %v785 = vpack.c.b16 %v673, %v669
        %v786 = vpack.c.b16 %v678, %v674
        %v787 = vpack.c.b16 %v679, %v675
        %v788 = vpack.c.b16 %v680, %v676
        %v789 = vpack.c.b16 %v681, %v677
        %v790 = vpack.c.b16 %v686, %v682
        %v791 = vpack.c.b16 %v687, %v683
        %v792 = vpack.c.b16 %v688, %v684
        %v793 = vpack.c.b16 %v689, %v685
        %v794 = vpack.c.b16 %v694, %v690
        %v795 = vpack.c.b16 %v695, %v691
        %v796 = vpack.c.b16 %v696, %v692
        %v797 = vpack.c.b16 %v697, %v693
        %v798 = vpack.c.b16 %v702, %v698
        %v799 = vpack.c.b16 %v703, %v699
        %v800 = vpack.c.b16 %v704, %v700
        %v801 = vpack.c.b16 %v705, %v701
        %v802 = vpack.c.b16 %v710, %v706
        %v803 = vpack.c.b16 %v711, %v707
        %v804 = vpack.c.b16 %v712, %v708
        %v805 = vpack.c.b16 %v713, %v709
        %v806 = vpack.c.b16 %v718, %v714
        %v807 = vpack.c.b16 %v719, %v715
        %v808 = vpack.c.b16 %v720, %v716
        %v809 = vpack.c.b16 %v721, %v717
        %v810 = vpack.c.b16 %v722, %v722
        %v811 = vpack.c.b16 %v723, %v723
        %v812 = vpack.c.b16 %v724, %v724
        %v813 = vpack.c.b16 %v725, %v725
        %vm898 = vcmask 711680
        %v900 = vsel %vm898, %v465, 0
        %vm902 = vcmask 1042432
        %vm903 = vcmask 1043456
        %v904 = vsel %vm902, 4294967295, 65535
        %v905 = vsel %vm903, %v904, 0
        %v907 = vand.u32 %v810, %v905
        %v910 = vand.u32 %v811, %v905
        %v913 = vand.u32 %v812, %v905
        %v916 = vand.u32 %v813, %v905
        %918 = vmatpush.bf16.msra.mxu0 %v754
        %919 = vmatpush.bf16.msra.mxu0 %v750
        %920 = vmatpush.bf16.msra.mxu0 %v746
        %921 = vmatpush.bf16.msra.mxu0 %v742
        %922 = vmatpush.bf16.msra.mxu0 %v738
        %923 = vmatpush.bf16.msra.mxu0 %v734
        %924 = vmatpush.bf16.msra.mxu0 %v730
        %925 = vmatpush.bf16.msra.mxu0 %v726
        %926 = vmatmul.bf16.gmra.mxu0 %v463
        %v927 = vpop.f32.mrf.mxu0
        %v928 = vadd.f32 %v456, %v927
        %v929 = vpop.f32.mrf.mxu0
        %930 = vdwg.mxu0
        %931 = vmatpush.bf16.msra.mxu0 %v786
        %932 = vmatpush.bf16.msra.mxu0 %v782
        %933 = vmatpush.bf16.msra.mxu0 %v778
        %934 = vmatpush.bf16.msra.mxu0 %v774
        %935 = vmatpush.bf16.msra.mxu0 %v770
        %936 = vmatpush.bf16.msra.mxu0 %v766
        %937 = vmatpush.bf16.msra.mxu0 %v762
        %938 = vmatpush.bf16.msra.mxu0 %v758
        %939 = vmatmul.bf16.gmra.mxu0 %v464
        %v940 = vpop.f32.mrf.mxu0
        %v941 = vadd.f32 %v928, %v940
        %v942 = vpop.f32.mrf.mxu0
        %943 = vdwg.mxu0
        %944 = vmatpush.bf16.msra.mxu0 0
        %945 = vmatpush.bf16.msra.mxu0 0
        %946 = vmatpush.bf16.msra.mxu0 %v907
        %947 = vmatpush.bf16.msra.mxu0 %v806
        %948 = vmatpush.bf16.msra.mxu0 %v802
        %949 = vmatpush.bf16.msra.mxu0 %v798
        %950 = vmatpush.bf16.msra.mxu0 %v794
        %951 = vmatpush.bf16.msra.mxu0 %v790
        %952 = vmatmul.bf16.gmra.mxu0 %v900
        %v953 = vpop.f32.mrf.mxu0
        %v954 = vadd.f32 %v941, %v953
        %v955 = vpop.f32.mrf.mxu0
        %956 = vdwg.mxu0
        %957 = vmatpush.bf16.msra.mxu0 %v755
        %958 = vmatpush.bf16.msra.mxu0 %v751
        %959 = vmatpush.bf16.msra.mxu0 %v747
        %960 = vmatpush.bf16.msra.mxu0 %v743
        %961 = vmatpush.bf16.msra.mxu0 %v739
        %962 = vmatpush.bf16.msra.mxu0 %v735
        %963 = vmatpush.bf16.msra.mxu0 %v731
        %964 = vmatpush.bf16.msra.mxu0 %v727
        %965 = vmatmul.bf16.gmra.mxu0 %v463
        %v966 = vpop.f32.mrf.mxu0
        %v967 = vadd.f32 %v456, %v966
        %v968 = vpop.f32.mrf.mxu0
        %969 = vdwg.mxu0
        %970 = vmatpush.bf16.msra.mxu0 %v787
        %971 = vmatpush.bf16.msra.mxu0 %v783
        %972 = vmatpush.bf16.msra.mxu0 %v779
        %973 = vmatpush.bf16.msra.mxu0 %v775
        %974 = vmatpush.bf16.msra.mxu0 %v771
        %975 = vmatpush.bf16.msra.mxu0 %v767
        %976 = vmatpush.bf16.msra.mxu0 %v763
        %977 = vmatpush.bf16.msra.mxu0 %v759
        %978 = vmatmul.bf16.gmra.mxu0 %v464
        %v979 = vpop.f32.mrf.mxu0
        %v980 = vadd.f32 %v967, %v979
        %v981 = vpop.f32.mrf.mxu0
        %982 = vdwg.mxu0
        %983 = vmatpush.bf16.msra.mxu0 0
        %984 = vmatpush.bf16.msra.mxu0 0
        %985 = vmatpush.bf16.msra.mxu0 %v910
        %986 = vmatpush.bf16.msra.mxu0 %v807
        %987 = vmatpush.bf16.msra.mxu0 %v803
        %988 = vmatpush.bf16.msra.mxu0 %v799
        %989 = vmatpush.bf16.msra.mxu0 %v795
        %990 = vmatpush.bf16.msra.mxu0 %v791
        %991 = vmatmul.bf16.gmra.mxu0 %v900
        %v992 = vpop.f32.mrf.mxu0
        %v993 = vadd.f32 %v980, %v992
        %v994 = vpop.f32.mrf.mxu0
        %995 = vdwg.mxu0
        %996 = vmatpush.bf16.msra.mxu0 %v756
        %997 = vmatpush.bf16.msra.mxu0 %v752
        %998 = vmatpush.bf16.msra.mxu0 %v748
        %999 = vmatpush.bf16.msra.mxu0 %v744
        %1000 = vmatpush.bf16.msra.mxu0 %v740
        %1001 = vmatpush.bf16.msra.mxu0 %v736
        %1002 = vmatpush.bf16.msra.mxu0 %v732
        %1003 = vmatpush.bf16.msra.mxu0 %v728
        %1004 = vmatmul.bf16.gmra.mxu0 %v463
        %v1005 = vpop.f32.mrf.mxu0
        %v1006 = vadd.f32 %v456, %v1005
        %v1007 = vpop.f32.mrf.mxu0
        %1008 = vdwg.mxu0
        %1009 = vmatpush.bf16.msra.mxu0 %v788
        %1010 = vmatpush.bf16.msra.mxu0 %v784
        %1011 = vmatpush.bf16.msra.mxu0 %v780
        %1012 = vmatpush.bf16.msra.mxu0 %v776
        %1013 = vmatpush.bf16.msra.mxu0 %v772
        %1014 = vmatpush.bf16.msra.mxu0 %v768
        %1015 = vmatpush.bf16.msra.mxu0 %v764
        %1016 = vmatpush.bf16.msra.mxu0 %v760
        %1017 = vmatmul.bf16.gmra.mxu0 %v464
        %v1018 = vpop.f32.mrf.mxu0
        %v1019 = vadd.f32 %v1006, %v1018
        %v1020 = vpop.f32.mrf.mxu0
        %1021 = vdwg.mxu0
        %1022 = vmatpush.bf16.msra.mxu0 0
        %1023 = vmatpush.bf16.msra.mxu0 0
        %1024 = vmatpush.bf16.msra.mxu0 %v913
        %1025 = vmatpush.bf16.msra.mxu0 %v808
        %1026 = vmatpush.bf16.msra.mxu0 %v804
        %1027 = vmatpush.bf16.msra.mxu0 %v800
        %1028 = vmatpush.bf16.msra.mxu0 %v796
        %1029 = vmatpush.bf16.msra.mxu0 %v792
        %1030 = vmatmul.bf16.gmra.mxu0 %v900
        %v1031 = vpop.f32.mrf.mxu0
        %v1032 = vadd.f32 %v1019, %v1031
        %v1033 = vpop.f32.mrf.mxu0
        %1034 = vdwg.mxu0
        %1035 = vmatpush.bf16.msra.mxu0 %v757
        %1036 = vmatpush.bf16.msra.mxu0 %v753
        %1037 = vmatpush.bf16.msra.mxu0 %v749
        %1038 = vmatpush.bf16.msra.mxu0 %v745
        %1039 = vmatpush.bf16.msra.mxu0 %v741
        %1040 = vmatpush.bf16.msra.mxu0 %v737
        %1041 = vmatpush.bf16.msra.mxu0 %v733
        %1042 = vmatpush.bf16.msra.mxu0 %v729
        %1043 = vmatmul.bf16.gmra.mxu0 %v463
        %v1044 = vpop.f32.mrf.mxu0
        %v1045 = vadd.f32 %v456, %v1044
        %v1046 = vpop.f32.mrf.mxu0
        %1047 = vdwg.mxu0
        %1048 = vmatpush.bf16.msra.mxu0 %v789
        %1049 = vmatpush.bf16.msra.mxu0 %v785
        %1050 = vmatpush.bf16.msra.mxu0 %v781
        %1051 = vmatpush.bf16.msra.mxu0 %v777
        %1052 = vmatpush.bf16.msra.mxu0 %v773
        %1053 = vmatpush.bf16.msra.mxu0 %v769
        %1054 = vmatpush.bf16.msra.mxu0 %v765
        %1055 = vmatpush.bf16.msra.mxu0 %v761
        %1056 = vmatmul.bf16.gmra.mxu0 %v464
        %v1057 = vpop.f32.mrf.mxu0
        %v1058 = vadd.f32 %v1045, %v1057
        %v1059 = vpop.f32.mrf.mxu0
        %1060 = vdwg.mxu0
        %1061 = vmatpush.bf16.msra.mxu0 0
        %1062 = vmatpush.bf16.msra.mxu0 0
        %1063 = vmatpush.bf16.msra.mxu0 %v916
        %1064 = vmatpush.bf16.msra.mxu0 %v809
        %1065 = vmatpush.bf16.msra.mxu0 %v805
        %1066 = vmatpush.bf16.msra.mxu0 %v801
        %1067 = vmatpush.bf16.msra.mxu0 %v797
        %1068 = vmatpush.bf16.msra.mxu0 %v793
        %1069 = vmatmul.bf16.gmra.mxu0 %v900
        %v1070 = vpop.f32.mrf.mxu0
        %v1071 = vadd.f32 %v1058, %v1070
        %v1072 = vpop.f32.mrf.mxu0
        %1073 = vdwg.mxu0
        %v1074 = vmax.f32 %v954, 0.0
        %v1075 = vmax.f32 %v993, 0.0
        %v1076 = vmax.f32 %v1032, 0.0
        %v1077 = vmax.f32 %v1071, 0.0
        %1078 = vst [vmem:[%s361] sm:$0xff] %v1074
        %1079 = vst [vmem:[%s361 + $0x8] sm:$0xff] %v1075
        %1080 = vst [vmem:[%s361 + $0x10] sm:$0xff] %v1076
        %1081 = vst [vmem:[%s361 + $0x18] sm:$0xff] %v1077
        %s1082 = smul.u32 4, %s14
        %p1083 = scmp.lt.s32.totalorder %s1082, 7
        %s1084 = scalar_select %p1083, %s1082, 7
        %s1085 = smul.addr %s1084, 8
        %s1086 = scalar_lea.vmem %s3, %s1085
        // Predicated region
        $region56: #{_lambda_.13} parent=50 // pred_check
          %p1087 = pneg %p100
        $region57: #{_lambda_.13} parent=50 // pred_check_branch
          %1089 = sbr.rel (%p1087) target = $region59
        $region58: #{_lambda_.13} parent=50 // pred_region
          %s1090 = smul.u32 4, %s14
        $region59: #{_lambda_.13} parent=50 // pred_fallthru
          _
      $region51: #{_lambda_.13} parent=5 // pred_fallthru
        _
      %p1091 = scmp.le.s32.totalorder 2, %s9
      // Predicated region
      $region60: #{_lambda_.13} parent=5 // pred_check
        %p1092 = pneg %p1091
      $region61: #{_lambda_.13} parent=5 // pred_check_branch
        %1094 = sbr.rel (%p1092) target = $region63
      $region62: #{_lambda_.13} parent=5 // pred_region
        %s1095 = ssub.s32 %s9, 2
        // Predicated region
        $region64: #{_lambda_.13} parent=62 // pred_check
          %p1096 = pneg %p106
        $region65: #{_lambda_.13} parent=62 // pred_check_branch
          %1098 = sbr.rel (%p1096) target = $region67
        $region66: #{_lambda_.13} parent=62 // pred_region
          %s1099 = smul.u32 4, %s15
          %p1100 = scmp.lt.s32.totalorder %s1099, 7
          %s1101 = scalar_select %p1100, %s1099, 7
          %s1102 = smul.addr %s1101, 8
          %s1103 = scalar_lea.vmem %s3, %s1102
        $region67: #{_lambda_.13} parent=62 // pred_fallthru
          _
      $region63: #{_lambda_.13} parent=5 // pred_fallthru
        _
    $region6: #{_lambda_.13} parent=1 // loop_footer
      %s13 = sadd.s32 1, %s9
    $region7: #{_lambda_.13} parent=1 // loop_footer_branch
      %8 = sbr.rel target = $region3
    $region8: #{_lambda_.13} parent=1 // loop_exit
      _

// kernel: _lambda_.14
$region0: #{_lambda_.14}
  #allocation0 [shape = 'u32[]', space=smem, size = 0x4, offset = 0x4, fixed_abs, tag = 'smem constant byte address 0x4 - core index']
  #allocation1 [shape = 'u32[72,128]{1,0:T(1,128)}', space=vmem, size = 0x9000, scoped, tag = 'internal scratch']
  %s0 = inlined_call_operand.vmem [shape: f32[27,8,128], index: 0, kind: input, shape index: {}]
  %s1 = inlined_call_operand.vmem [shape: f32[8,128], index: 1, kind: output, shape index: {}]
  %s2 = sld [smem:[#allocation0]]
  $region14: #{_lambda_.14} parent=0
    _
  %s4 = ssub.s32 1, %s2
  %s5 = scalar_select 0, %s4, %s2
  // Predicated region
  $region2: #{_lambda_.14} parent=0 // pred_check
    _
  $region3: #{_lambda_.14} parent=0 // pred_check_branch
    %7 = sbr.rel (0) target = $region5
  $region4: #{_lambda_.14} parent=0 // pred_region
    _
  $region5: #{_lambda_.14} parent=0 // pred_fallthru
    _
  %v8 = vld [vmem:[%s0] sm:$0xff]
  %v9 = vld [vmem:[%s0 + $0x8] sm:$0xff]
  %v10 = vld [vmem:[%s0 + $0x10] sm:$0xff]
  %v11 = vld [vmem:[%s0 + $0x18] sm:$0xff]
  %v12 = vld [vmem:[%s0 + $0x20] sm:$0xff]
  %v13 = vld [vmem:[%s0 + $0x28] sm:$0xff]
  %v14 = vld [vmem:[%s0 + $0x30] sm:$0xff]
  %v15 = vld [vmem:[%s0 + $0x38] sm:$0xff]
  %v16 = vld [vmem:[%s0 + $0x40] sm:$0xff]
  %v17 = vld [vmem:[%s0 + $0x48] sm:$0xff]
  %v18 = vld [vmem:[%s0 + $0x50] sm:$0xff]
  %v19 = vld [vmem:[%s0 + $0x58] sm:$0xff]
  %v20 = vld [vmem:[%s0 + $0x60] sm:$0xff]
  %v21 = vld [vmem:[%s0 + $0x68] sm:$0xff]
  %v22 = vld [vmem:[%s0 + $0x70] sm:$0xff]
  %v23 = vld [vmem:[%s0 + $0x78] sm:$0xff]
  %v24 = vld [vmem:[%s0 + $0x80] sm:$0xff]
  %v25 = vld [vmem:[%s0 + $0x88] sm:$0xff]
  %v26 = vld [vmem:[%s0 + $0x90] sm:$0xff]
  %v27 = vld [vmem:[%s0 + $0x98] sm:$0xff]
  %v28 = vld [vmem:[%s0 + $0xa0] sm:$0xff]
  %v29 = vld [vmem:[%s0 + $0xa8] sm:$0xff]
  %v30 = vld [vmem:[%s0 + $0xb0] sm:$0xff]
  %v31 = vld [vmem:[%s0 + $0xb8] sm:$0xff]
  %v32 = vld [vmem:[%s0 + $0xc0] sm:$0xff]
  %v33 = vld [vmem:[%s0 + $0xc8] sm:$0xff]
  %v34 = vld [vmem:[%s0 + $0xd0] sm:$0xff]
  %v35 = vmax.f32 %v8, %v12
  %v36 = vmax.f32 %v9, %v13
  %v37 = vmax.f32 %v10, %v14
  %v38 = vmax.f32 %v11, %v15
  %v39 = vmax.f32 %v35, %v16
  %v40 = vmax.f32 %v36, %v17
  %v41 = vmax.f32 %v37, %v18
  %v42 = vmax.f32 %v38, %v19
  %v43 = vmax.f32 %v39, %v20
  %v44 = vmax.f32 %v40, %v21
  %v45 = vmax.f32 %v41, %v22
  %v46 = vmax.f32 %v42, %v23
  %v47 = vmax.f32 %v43, %v24
  %v48 = vmax.f32 %v44, %v25
  %v49 = vmax.f32 %v45, %v26
  %v50 = vmax.f32 %v46, %v27
  %v51 = vmax.f32 %v47, %v28
  %v52 = vmax.f32 %v48, %v29
  %v53 = vmax.f32 %v49, %v30
  %v54 = vmax.f32 %v50, %v31
  %v55 = vmax.f32 %v51, %v32
  %v56 = vmax.f32 %v52, %v33
  %v57 = vmax.f32 %v53, %v34
  %v58 = vmax.f32 %v55, %v56
  %v59 = vmax.f32 %v57, %v54
  %v60 = vmax.f32 %v58, %v59
  %61 = vst [vmem:[%s1] sm:$0xff] %v60
  // Predicated region
  $region6: #{_lambda_.14} parent=0 // pred_check
    _
  $region7: #{_lambda_.14} parent=0 // pred_check_branch
    %63 = sbr.rel (0) target = $region9
  $region8: #{_lambda_.14} parent=0 // pred_region
    _
  $region9: #{_lambda_.14} parent=0 // pred_fallthru
    _
  // Predicated region
  $region10: #{_lambda_.14} parent=0 // pred_check
    _
  $region11: #{_lambda_.14} parent=0 // pred_check_branch
    %65 = sbr.rel (0) target = $region13
  $region12: #{_lambda_.14} parent=0 // pred_region
    _
  $region13: #{_lambda_.14} parent=0 // pred_fallthru
    _

// kernel: _lambda_.15
$region0: #{_lambda_.15}
  #allocation0 [shape = 'u32[]', space=smem, size = 0x4, offset = 0x4, fixed_abs, tag = 'smem constant byte address 0x4 - core index']
  #allocation1 [shape = 'u32[72,128]{1,0:T(1,128)}', space=vmem, size = 0x9000, scoped, tag = 'internal scratch']
  %s0 = inlined_call_operand.vmem [shape: bf16[8,216], index: 0, kind: input, shape index: {}]
  %s1 = inlined_call_operand.vmem [shape: bf16[216,128], index: 1, kind: input, shape index: {}]
  %s2 = inlined_call_operand.vmem [shape: f32[8,1], index: 2, kind: input, shape index: {}]
  %s3 = inlined_call_operand.vmem [shape: f32[8,128], index: 3, kind: output, shape index: {}]
  %s4 = sld [smem:[#allocation0]]
  $region22: #{_lambda_.15} parent=0
    _
  %s6 = ssub.s32 1, %s4
  %s7 = scalar_select 0, %s6, %s4
  // Predicated region
  $region2: #{_lambda_.15} parent=0 // pred_check
    _
  $region3: #{_lambda_.15} parent=0 // pred_check_branch
    %9 = sbr.rel (0) target = $region5
  $region4: #{_lambda_.15} parent=0 // pred_region
    _
  $region5: #{_lambda_.15} parent=0 // pred_fallthru
    _
  // Predicated region
  $region6: #{_lambda_.15} parent=0 // pred_check
    _
  $region7: #{_lambda_.15} parent=0 // pred_check_branch
    %11 = sbr.rel (0) target = $region9
  $region8: #{_lambda_.15} parent=0 // pred_region
    _
  $region9: #{_lambda_.15} parent=0 // pred_fallthru
    _
  // Predicated region
  $region10: #{_lambda_.15} parent=0 // pred_check
    _
  $region11: #{_lambda_.15} parent=0 // pred_check_branch
    %13 = sbr.rel (0) target = $region13
  $region12: #{_lambda_.15} parent=0 // pred_region
    _
  $region13: #{_lambda_.15} parent=0 // pred_fallthru
    _
  %v15 = vld [vmem:[%s0] sm:$0xff]
  %v16 = vld [vmem:[%s1] sm:$0xf]
  %v17 = vld [vmem:[%s1 + $0x4] sm:$0xf]
  %v18 = vld [vmem:[%s1 + $0x8] sm:$0xf]
  %v19 = vld [vmem:[%s1 + $0xc] sm:$0xf]
  %v20 = vld [vmem:[%s1 + $0x10] sm:$0xf]
  %v21 = vld [vmem:[%s1 + $0x14] sm:$0xf]
  %v22 = vld [vmem:[%s1 + $0x18] sm:$0xf]
  %v23 = vld [vmem:[%s1 + $0x1c] sm:$0xf]
  %v24 = vld [vmem:[%s1 + $0x20] sm:$0xf]
  %v25 = vld [vmem:[%s1 + $0x24] sm:$0xf]
  %v26 = vld [vmem:[%s1 + $0x28] sm:$0xf]
  %v27 = vld [vmem:[%s1 + $0x2c] sm:$0xf]
  %v28 = vld [vmem:[%s1 + $0x30] sm:$0xf]
  %v29 = vld [vmem:[%s1 + $0x34] sm:$0xf]
  %v30 = vld [vmem:[%s1 + $0x38] sm:$0xf]
  %v31 = vld [vmem:[%s1 + $0x3c] sm:$0xf]
  %v32 = vld [vmem:[%s1 + $0x40] sm:$0xf]
  %v33 = vld [vmem:[%s1 + $0x44] sm:$0xf]
  %v34 = vld [vmem:[%s1 + $0x48] sm:$0xf]
  %v35 = vld [vmem:[%s1 + $0x4c] sm:$0xf]
  %v36 = vld [vmem:[%s1 + $0x50] sm:$0xf]
  %v37 = vld [vmem:[%s1 + $0x54] sm:$0xf]
  %v38 = vld [vmem:[%s1 + $0x58] sm:$0xf]
  %v39 = vld [vmem:[%s1 + $0x5c] sm:$0xf]
  %v40 = vld [vmem:[%s1 + $0x60] sm:$0xf]
  %v41 = vld [vmem:[%s1 + $0x64] sm:$0xf]
  %v42 = vld [vmem:[%s1 + $0x68] sm:$0xf]
  %v43 = vld [vmem:[%s2] sm:$0xff]
  %45 = vset.pattern.permute.xlu0 0
  %46 = vperm.xlu0 %45, %v43
  %v47 = vpop.permute.xlu0 %46
  %v50 = vunpack.c.l.b16 %v15
  %v51 = vunpack.c.h.b16 %v15
  %v52 = vpack.c.b16 %v50, %v50
  %v53 = vpack.c.b16 %v51, %v51
  %v82 = vunpack.c.l.b16 %v16
  %v83 = vunpack.c.l.b16 %v17
  %v84 = vunpack.c.l.b16 %v18
  %v85 = vunpack.c.l.b16 %v19
  %v86 = vunpack.c.l.b16 %v20
  %v87 = vunpack.c.l.b16 %v21
  %v88 = vunpack.c.l.b16 %v22
  %v89 = vunpack.c.l.b16 %v23
  %v90 = vunpack.c.l.b16 %v24
  %v91 = vunpack.c.l.b16 %v25
  %v92 = vunpack.c.l.b16 %v26
  %v93 = vunpack.c.l.b16 %v27
  %v94 = vunpack.c.l.b16 %v28
  %v95 = vunpack.c.l.b16 %v29
  %v96 = vunpack.c.l.b16 %v30
  %v97 = vunpack.c.l.b16 %v31
  %v98 = vunpack.c.l.b16 %v32
  %v99 = vunpack.c.l.b16 %v33
  %v100 = vunpack.c.l.b16 %v34
  %v101 = vunpack.c.l.b16 %v35
  %v102 = vunpack.c.l.b16 %v36
  %v103 = vunpack.c.l.b16 %v37
  %v104 = vunpack.c.l.b16 %v38
  %v105 = vunpack.c.l.b16 %v39
  %v106 = vunpack.c.l.b16 %v40
  %v107 = vunpack.c.l.b16 %v41
  %v108 = vunpack.c.l.b16 %v42
  %v109 = vpack.c.b16 %v83, %v82
  %v110 = vpack.c.b16 %v85, %v84
  %v111 = vpack.c.b16 %v87, %v86
  %v112 = vpack.c.b16 %v89, %v88
  %v113 = vpack.c.b16 %v91, %v90
  %v114 = vpack.c.b16 %v93, %v92
  %v115 = vpack.c.b16 %v95, %v94
  %v116 = vpack.c.b16 %v97, %v96
  %v117 = vpack.c.b16 %v99, %v98
  %v118 = vpack.c.b16 %v101, %v100
  %v119 = vpack.c.b16 %v103, %v102
  %v120 = vpack.c.b16 %v105, %v104
  %v121 = vpack.c.b16 %v107, %v106
  %v122 = vpack.c.b16 %v108, %v108
  %vm136 = vcmask 719872
  %v138 = vsel %vm136, %v53, 0
  %vm140 = vcmask 1043456
  %v142 = vsel %vm140, %v122, 0
  %144 = vmatpush.bf16.msra.mxu0 %v116
  %145 = vmatpush.bf16.msra.mxu0 %v115
  %146 = vmatpush.bf16.msra.mxu0 %v114
  %147 = vmatpush.bf16.msra.mxu0 %v113
  %148 = vmatpush.bf16.msra.mxu0 %v112
  %149 = vmatpush.bf16.msra.mxu0 %v111
  %150 = vmatpush.bf16.msra.mxu0 %v110
  %151 = vmatpush.bf16.msra.mxu0 %v109
  %152 = vmatmul.bf16.gmra.mxu0 %v52
  %v153 = vpop.f32.mrf.mxu0
  %v154 = vadd.f32 %v47, %v153
  %v155 = vpop.f32.mrf.mxu0
  %156 = vdwg.mxu0
  %157 = vmatpush.bf16.msra.mxu0 0
  %158 = vmatpush.bf16.msra.mxu0 0
  %159 = vmatpush.bf16.msra.mxu0 %v142
  %160 = vmatpush.bf16.msra.mxu0 %v121
  %161 = vmatpush.bf16.msra.mxu0 %v120
  %162 = vmatpush.bf16.msra.mxu0 %v119
  %163 = vmatpush.bf16.msra.mxu0 %v118
  %164 = vmatpush.bf16.msra.mxu0 %v117
  %165 = vmatmul.bf16.gmra.mxu0 %v138
  %v166 = vpop.f32.mrf.mxu0
  %v167 = vadd.f32 %v154, %v166
  %v168 = vpop.f32.mrf.mxu0
  %169 = vdwg.mxu0
  %v170 = vmax.f32 %v167, 0.0
  %171 = vst [vmem:[%s3] sm:$0xff] %v170
  // Predicated region
  $region14: #{_lambda_.15} parent=0 // pred_check
    _
  $region15: #{_lambda_.15} parent=0 // pred_check_branch
    %173 = sbr.rel (0) target = $region17
  $region16: #{_lambda_.15} parent=0 // pred_region
    _
  $region17: #{_lambda_.15} parent=0 // pred_fallthru
    _
  // Predicated region
  $region18: #{_lambda_.15} parent=0 // pred_check
    _
  $region19: #{_lambda_.15} parent=0 // pred_check_branch
    %175 = sbr.rel (0) target = $region21
  $region20: #{_lambda_.15} parent=0 // pred_region
    _
  $region21: #{_lambda_.15} parent=0 // pred_fallthru
    _

// kernel: _lambda_.16
$region0: #{_lambda_.16}
  #allocation0 [shape = 'u32[]', space=smem, size = 0x4, offset = 0x4, fixed_abs, tag = 'smem constant byte address 0x4 - core index']
  #allocation1 [shape = 'u32[72,128]{1,0:T(1,128)}', space=vmem, size = 0x9000, scoped, tag = 'internal scratch']
  %s0 = inlined_call_operand.vmem [shape: bf16[8,216], index: 0, kind: input, shape index: {}]
  %s1 = inlined_call_operand.vmem [shape: bf16[216,128], index: 1, kind: input, shape index: {}]
  %s2 = inlined_call_operand.vmem [shape: f32[8,1], index: 2, kind: input, shape index: {}]
  %s3 = inlined_call_operand.vmem [shape: f32[8,128], index: 3, kind: input, shape index: {}]
  %s4 = inlined_call_operand.vmem [shape: f32[8,128], index: 4, kind: output, shape index: {}]
  %s5 = sld [smem:[#allocation0]]
  $region26: #{_lambda_.16} parent=0
    _
  %s7 = ssub.s32 1, %s5
  %s8 = scalar_select 0, %s7, %s5
  // Predicated region
  $region2: #{_lambda_.16} parent=0 // pred_check
    _
  $region3: #{_lambda_.16} parent=0 // pred_check_branch
    %10 = sbr.rel (0) target = $region5
  $region4: #{_lambda_.16} parent=0 // pred_region
    _
  $region5: #{_lambda_.16} parent=0 // pred_fallthru
    _
  // Predicated region
  $region6: #{_lambda_.16} parent=0 // pred_check
    _
  $region7: #{_lambda_.16} parent=0 // pred_check_branch
    %12 = sbr.rel (0) target = $region9
  $region8: #{_lambda_.16} parent=0 // pred_region
    _
  $region9: #{_lambda_.16} parent=0 // pred_fallthru
    _
  // Predicated region
  $region10: #{_lambda_.16} parent=0 // pred_check
    _
  $region11: #{_lambda_.16} parent=0 // pred_check_branch
    %14 = sbr.rel (0) target = $region13
  $region12: #{_lambda_.16} parent=0 // pred_region
    _
  $region13: #{_lambda_.16} parent=0 // pred_fallthru
    _
  // Predicated region
  $region14: #{_lambda_.16} parent=0 // pred_check
    _
  $region15: #{_lambda_.16} parent=0 // pred_check_branch
    %16 = sbr.rel (0) target = $region17
  $region16: #{_lambda_.16} parent=0 // pred_region
    _
  $region17: #{_lambda_.16} parent=0 // pred_fallthru
    _
  %v18 = vld [vmem:[%s0] sm:$0xff]
  %v19 = vld [vmem:[%s1] sm:$0xf]
  %v20 = vld [vmem:[%s1 + $0x4] sm:$0xf]
  %v21 = vld [vmem:[%s1 + $0x8] sm:$0xf]
  %v22 = vld [vmem:[%s1 + $0xc] sm:$0xf]
  %v23 = vld [vmem:[%s1 + $0x10] sm:$0xf]
  %v24 = vld [vmem:[%s1 + $0x14] sm:$0xf]
  %v25 = vld [vmem:[%s1 + $0x18] sm:$0xf]
  %v26 = vld [vmem:[%s1 + $0x1c] sm:$0xf]
  %v27 = vld [vmem:[%s1 + $0x20] sm:$0xf]
  %v28 = vld [vmem:[%s1 + $0x24] sm:$0xf]
  %v29 = vld [vmem:[%s1 + $0x28] sm:$0xf]
  %v30 = vld [vmem:[%s1 + $0x2c] sm:$0xf]
  %v31 = vld [vmem:[%s1 + $0x30] sm:$0xf]
  %v32 = vld [vmem:[%s1 + $0x34] sm:$0xf]
  %v33 = vld [vmem:[%s1 + $0x38] sm:$0xf]
  %v34 = vld [vmem:[%s1 + $0x3c] sm:$0xf]
  %v35 = vld [vmem:[%s1 + $0x40] sm:$0xf]
  %v36 = vld [vmem:[%s1 + $0x44] sm:$0xf]
  %v37 = vld [vmem:[%s1 + $0x48] sm:$0xf]
  %v38 = vld [vmem:[%s1 + $0x4c] sm:$0xf]
  %v39 = vld [vmem:[%s1 + $0x50] sm:$0xf]
  %v40 = vld [vmem:[%s1 + $0x54] sm:$0xf]
  %v41 = vld [vmem:[%s1 + $0x58] sm:$0xf]
  %v42 = vld [vmem:[%s1 + $0x5c] sm:$0xf]
  %v43 = vld [vmem:[%s1 + $0x60] sm:$0xf]
  %v44 = vld [vmem:[%s1 + $0x64] sm:$0xf]
  %v45 = vld [vmem:[%s1 + $0x68] sm:$0xf]
  %v46 = vld [vmem:[%s2] sm:$0xff]
  %48 = vset.pattern.permute.xlu0 0
  %49 = vperm.xlu0 %48, %v46
  %v50 = vpop.permute.xlu0 %49
  %v53 = vunpack.c.l.b16 %v18
  %v54 = vunpack.c.h.b16 %v18
  %v55 = vpack.c.b16 %v53, %v53
  %v56 = vpack.c.b16 %v54, %v54
  %v85 = vunpack.c.l.b16 %v19
  %v86 = vunpack.c.l.b16 %v20
  %v87 = vunpack.c.l.b16 %v21
  %v88 = vunpack.c.l.b16 %v22
  %v89 = vunpack.c.l.b16 %v23
  %v90 = vunpack.c.l.b16 %v24
  %v91 = vunpack.c.l.b16 %v25
  %v92 = vunpack.c.l.b16 %v26
  %v93 = vunpack.c.l.b16 %v27
  %v94 = vunpack.c.l.b16 %v28
  %v95 = vunpack.c.l.b16 %v29
  %v96 = vunpack.c.l.b16 %v30
  %v97 = vunpack.c.l.b16 %v31
  %v98 = vunpack.c.l.b16 %v32
  %v99 = vunpack.c.l.b16 %v33
  %v100 = vunpack.c.l.b16 %v34
  %v101 = vunpack.c.l.b16 %v35
  %v102 = vunpack.c.l.b16 %v36
  %v103 = vunpack.c.l.b16 %v37
  %v104 = vunpack.c.l.b16 %v38
  %v105 = vunpack.c.l.b16 %v39
  %v106 = vunpack.c.l.b16 %v40
  %v107 = vunpack.c.l.b16 %v41
  %v108 = vunpack.c.l.b16 %v42
  %v109 = vunpack.c.l.b16 %v43
  %v110 = vunpack.c.l.b16 %v44
  %v111 = vunpack.c.l.b16 %v45
  %v112 = vpack.c.b16 %v86, %v85
  %v113 = vpack.c.b16 %v88, %v87
  %v114 = vpack.c.b16 %v90, %v89
  %v115 = vpack.c.b16 %v92, %v91
  %v116 = vpack.c.b16 %v94, %v93
  %v117 = vpack.c.b16 %v96, %v95
  %v118 = vpack.c.b16 %v98, %v97
  %v119 = vpack.c.b16 %v100, %v99
  %v120 = vpack.c.b16 %v102, %v101
  %v121 = vpack.c.b16 %v104, %v103
  %v122 = vpack.c.b16 %v106, %v105
  %v123 = vpack.c.b16 %v108, %v107
  %v124 = vpack.c.b16 %v110, %v109
  %v125 = vpack.c.b16 %v111, %v111
  %vm139 = vcmask 719872
  %v141 = vsel %vm139, %v56, 0
  %vm143 = vcmask 1043456
  %v145 = vsel %vm143, %v125, 0
  %147 = vmatpush.bf16.msra.mxu0 %v119
  %148 = vmatpush.bf16.msra.mxu0 %v118
  %149 = vmatpush.bf16.msra.mxu0 %v117
  %150 = vmatpush.bf16.msra.mxu0 %v116
  %151 = vmatpush.bf16.msra.mxu0 %v115
  %152 = vmatpush.bf16.msra.mxu0 %v114
  %153 = vmatpush.bf16.msra.mxu0 %v113
  %154 = vmatpush.bf16.msra.mxu0 %v112
  %155 = vmatmul.bf16.gmra.mxu0 %v55
  %v156 = vpop.f32.mrf.mxu0
  %v157 = vadd.f32 %v50, %v156
  %v158 = vpop.f32.mrf.mxu0
  %159 = vdwg.mxu0
  %160 = vmatpush.bf16.msra.mxu0 0
  %161 = vmatpush.bf16.msra.mxu0 0
  %162 = vmatpush.bf16.msra.mxu0 %v145
  %163 = vmatpush.bf16.msra.mxu0 %v124
  %164 = vmatpush.bf16.msra.mxu0 %v123
  %165 = vmatpush.bf16.msra.mxu0 %v122
  %166 = vmatpush.bf16.msra.mxu0 %v121
  %167 = vmatpush.bf16.msra.mxu0 %v120
  %168 = vmatmul.bf16.gmra.mxu0 %v141
  %v169 = vpop.f32.mrf.mxu0
  %v170 = vadd.f32 %v157, %v169
  %v171 = vpop.f32.mrf.mxu0
  %172 = vdwg.mxu0
  %v173 = vld [vmem:[%s3] sm:$0xff]
  %v174 = vadd.f32 %v170, %v173
  %v175 = vmax.f32 %v174, 0.0
  %176 = vst [vmem:[%s4] sm:$0xff] %v175
  // Predicated region
  $region18: #{_lambda_.16} parent=0 // pred_check
    _
  $region19: #{_lambda_.16} parent=0 // pred_check_branch
    %178 = sbr.rel (0) target = $region21
  $region20: #{_lambda_.16} parent=0 // pred_region
    _
  $region21: #{_lambda_.16} parent=0 // pred_fallthru
    _
  // Predicated region
  $region22: #{_lambda_.16} parent=0 // pred_check
    _
  $region23: #{_lambda_.16} parent=0 // pred_check_branch
    %180 = sbr.rel (0) target = $region25
  $region24: #{_lambda_.16} parent=0 // pred_region
    _
  $region25: #{_lambda_.16} parent=0 // pred_fallthru
    _

// kernel: _lambda_.17
$region0: #{_lambda_.17}
  #allocation0 [shape = 'u32[]', space=smem, size = 0x4, offset = 0x4, fixed_abs, tag = 'smem constant byte address 0x4 - core index']
  #allocation1 [shape = 'u32[72,128]{1,0:T(1,128)}', space=vmem, size = 0x9000, scoped, tag = 'internal scratch']
  %s0 = inlined_call_operand.vmem [shape: bf16[16,216], index: 0, kind: input, shape index: {}]
  %s1 = inlined_call_operand.vmem [shape: bf16[216,16], index: 1, kind: input, shape index: {}]
  %s2 = inlined_call_operand.vmem [shape: f32[16,1], index: 2, kind: input, shape index: {}]
  %s3 = inlined_call_operand.vmem [shape: f32[16,16], index: 3, kind: output, shape index: {}]
  %s4 = sld [smem:[#allocation0]]
  $region22: #{_lambda_.17} parent=0
    _
  %s6 = ssub.s32 1, %s4
  %s7 = scalar_select 0, %s6, %s4
  // Predicated region
  $region2: #{_lambda_.17} parent=0 // pred_check
    _
  $region3: #{_lambda_.17} parent=0 // pred_check_branch
    %9 = sbr.rel (0) target = $region5
  $region4: #{_lambda_.17} parent=0 // pred_region
    _
  $region5: #{_lambda_.17} parent=0 // pred_fallthru
    _
  // Predicated region
  $region6: #{_lambda_.17} parent=0 // pred_check
    _
  $region7: #{_lambda_.17} parent=0 // pred_check_branch
    %11 = sbr.rel (0) target = $region9
  $region8: #{_lambda_.17} parent=0 // pred_region
    _
  $region9: #{_lambda_.17} parent=0 // pred_fallthru
    _
  // Predicated region
  $region10: #{_lambda_.17} parent=0 // pred_check
    _
  $region11: #{_lambda_.17} parent=0 // pred_check_branch
    %13 = sbr.rel (0) target = $region13
  $region12: #{_lambda_.17} parent=0 // pred_region
    _
  $region13: #{_lambda_.17} parent=0 // pred_fallthru
    _
  %v15 = vld [vmem:[%s0] sm:$0xff]
  %v16 = vld [vmem:[%s0 + $0x8] sm:$0xff]
  %v17 = vld [vmem:[%s1] sm:$0xf]
  %v18 = vld [vmem:[%s1 + $0x4] sm:$0xf]
  %v19 = vld [vmem:[%s1 + $0x8] sm:$0xf]
  %v20 = vld [vmem:[%s1 + $0xc] sm:$0xf]
  %v21 = vld [vmem:[%s1 + $0x10] sm:$0xf]
  %v22 = vld [vmem:[%s1 + $0x14] sm:$0xf]
  %v23 = vld [vmem:[%s1 + $0x18] sm:$0xf]
  %v24 = vld [vmem:[%s1 + $0x1c] sm:$0xf]
  %v25 = vld [vmem:[%s1 + $0x20] sm:$0xf]
  %v26 = vld [vmem:[%s1 + $0x24] sm:$0xf]
  %v27 = vld [vmem:[%s1 + $0x28] sm:$0xf]
  %v28 = vld [vmem:[%s1 + $0x2c] sm:$0xf]
  %v29 = vld [vmem:[%s1 + $0x30] sm:$0xf]
  %v30 = vld [vmem:[%s1 + $0x34] sm:$0xf]
  %v31 = vld [vmem:[%s1 + $0x38] sm:$0xf]
  %v32 = vld [vmem:[%s1 + $0x3c] sm:$0xf]
  %v33 = vld [vmem:[%s1 + $0x40] sm:$0xf]
  %v34 = vld [vmem:[%s1 + $0x44] sm:$0xf]
  %v35 = vld [vmem:[%s1 + $0x48] sm:$0xf]
  %v36 = vld [vmem:[%s1 + $0x4c] sm:$0xf]
  %v37 = vld [vmem:[%s1 + $0x50] sm:$0xf]
  %v38 = vld [vmem:[%s1 + $0x54] sm:$0xf]
  %v39 = vld [vmem:[%s1 + $0x58] sm:$0xf]
  %v40 = vld [vmem:[%s1 + $0x5c] sm:$0xf]
  %v41 = vld [vmem:[%s1 + $0x60] sm:$0xf]
  %v42 = vld [vmem:[%s1 + $0x64] sm:$0xf]
  %v43 = vld [vmem:[%s1 + $0x68] sm:$0xf]
  %v44 = vld [vmem:[%s2] sm:$0xff]
  %v45 = vld [vmem:[%s2 + $0x8] sm:$0xff]
  %47 = vset.pattern.permute.xlu0 0
  %48 = vperm.xlu0 %47, %v44
  %v49 = vpop.permute.xlu0 %48
  %52 = vset.pattern.permute.xlu0 0
  %53 = vperm.xlu0 %52, %v45
  %v54 = vpop.permute.xlu0 %53
  %v58 = vunpack.c.l.b16 %v15
  %v59 = vunpack.c.h.b16 %v15
  %v60 = vunpack.c.l.b16 %v16
  %v61 = vunpack.c.h.b16 %v16
  %v62 = vpack.c.b16 %v60, %v58
  %v63 = vpack.c.b16 %v61, %v59
  %v92 = vunpack.c.l.b16 %v17
  %v93 = vunpack.c.l.b16 %v18
  %v94 = vunpack.c.l.b16 %v19
  %v95 = vunpack.c.l.b16 %v20
  %v96 = vunpack.c.l.b16 %v21
  %v97 = vunpack.c.l.b16 %v22
  %v98 = vunpack.c.l.b16 %v23
  %v99 = vunpack.c.l.b16 %v24
  %v100 = vunpack.c.l.b16 %v25
  %v101 = vunpack.c.l.b16 %v26
  %v102 = vunpack.c.l.b16 %v27
  %v103 = vunpack.c.l.b16 %v28
  %v104 = vunpack.c.l.b16 %v29
  %v105 = vunpack.c.l.b16 %v30
  %v106 = vunpack.c.l.b16 %v31
  %v107 = vunpack.c.l.b16 %v32
  %v108 = vunpack.c.l.b16 %v33
  %v109 = vunpack.c.l.b16 %v34
  %v110 = vunpack.c.l.b16 %v35
  %v111 = vunpack.c.l.b16 %v36
  %v112 = vunpack.c.l.b16 %v37
  %v113 = vunpack.c.l.b16 %v38
  %v114 = vunpack.c.l.b16 %v39
  %v115 = vunpack.c.l.b16 %v40
  %v116 = vunpack.c.l.b16 %v41
  %v117 = vunpack.c.l.b16 %v42
  %v118 = vunpack.c.l.b16 %v43
  %v119 = vpack.c.b16 %v93, %v92
  %v120 = vpack.c.b16 %v95, %v94
  %v121 = vpack.c.b16 %v97, %v96
  %v122 = vpack.c.b16 %v99, %v98
  %v123 = vpack.c.b16 %v101, %v100
  %v124 = vpack.c.b16 %v103, %v102
  %v125 = vpack.c.b16 %v105, %v104
  %v126 = vpack.c.b16 %v107, %v106
  %v127 = vpack.c.b16 %v109, %v108
  %v128 = vpack.c.b16 %v111, %v110
  %v129 = vpack.c.b16 %v113, %v112
  %v130 = vpack.c.b16 %v115, %v114
  %v131 = vpack.c.b16 %v117, %v116
  %v132 = vpack.c.b16 %v118, %v118
  %vm146 = vcmask 719872
  %v148 = vsel %vm146, %v63, 0
  %vm150 = vcmask 1043456
  %v152 = vsel %vm150, %v132, 0
  %154 = vmatpush.bf16.msra.mxu0 %v126
  %155 = vmatpush.bf16.msra.mxu0 %v125
  %156 = vmatpush.bf16.msra.mxu0 %v124
  %157 = vmatpush.bf16.msra.mxu0 %v123
  %158 = vmatpush.bf16.msra.mxu0 %v122
  %159 = vmatpush.bf16.msra.mxu0 %v121
  %160 = vmatpush.bf16.msra.mxu0 %v120
  %161 = vmatpush.bf16.msra.mxu0 %v119
  %162 = vmatmul.bf16.gmra.mxu0 %v62
  %v163 = vpop.f32.mrf.mxu0
  %v164 = vadd.f32 %v49, %v163
  %v165 = vpop.f32.mrf.mxu0
  %v166 = vadd.f32 %v54, %v165
  %167 = vdwg.mxu0
  %168 = vmatpush.bf16.msra.mxu0 0
  %169 = vmatpush.bf16.msra.mxu0 0
  %170 = vmatpush.bf16.msra.mxu0 %v152
  %171 = vmatpush.bf16.msra.mxu0 %v131
  %172 = vmatpush.bf16.msra.mxu0 %v130
  %173 = vmatpush.bf16.msra.mxu0 %v129
  %174 = vmatpush.bf16.msra.mxu0 %v128
  %175 = vmatpush.bf16.msra.mxu0 %v127
  %176 = vmatmul.bf16.gmra.mxu0 %v148
  %v177 = vpop.f32.mrf.mxu0
  %v178 = vadd.f32 %v164, %v177
  %v179 = vpop.f32.mrf.mxu0
  %v180 = vadd.f32 %v166, %v179
  %181 = vdwg.mxu0
  %v182 = vmax.f32 %v178, 0.0
  %v183 = vmax.f32 %v180, 0.0
  %vm184 = vcmask 130048
  %185 = vst.msk [vmem:[%s3] sm:$0xff] %vm184, %v182
  %186 = vst.msk [vmem:[%s3 + $0x8] sm:$0xff] %vm184, %v183
  // Predicated region
  $region14: #{_lambda_.17} parent=0 // pred_check
    _
  $region15: #{_lambda_.17} parent=0 // pred_check_branch
    %188 = sbr.rel (0) target = $region17
  $region16: #{_lambda_.17} parent=0 // pred_region
    _
  $region17: #{_lambda_.17} parent=0 // pred_fallthru
    _
  // Predicated region
  $region18: #{_lambda_.17} parent=0 // pred_check
    _
  $region19: #{_lambda_.17} parent=0 // pred_check_branch
    %190 = sbr.rel (0) target = $region21
  $region20: #{_lambda_.17} parent=0 // pred_region
    _
  $region21: #{_lambda_.17} parent=0 // pred_fallthru
    _

// kernel: _lambda_.18
$region0: #{_lambda_.18}
  #allocation0 [shape = 'u32[]', space=smem, size = 0x4, offset = 0x4, fixed_abs, tag = 'smem constant byte address 0x4 - core index']
  #allocation1 [shape = 'u32[72,128]{1,0:T(1,128)}', space=vmem, size = 0x9000, scoped, tag = 'internal scratch']
  %s0 = inlined_call_operand.vmem [shape: bf16[16,8], index: 0, kind: input, shape index: {}]
  %s1 = inlined_call_operand.vmem [shape: bf16[8,16], index: 1, kind: input, shape index: {}]
  %s2 = inlined_call_operand.vmem [shape: f32[16,1], index: 2, kind: input, shape index: {}]
  %s3 = inlined_call_operand.vmem [shape: f32[16,16], index: 3, kind: output, shape index: {}]
  %s4 = sld [smem:[#allocation0]]
  $region22: #{_lambda_.18} parent=0
    _
  %s6 = ssub.s32 1, %s4
  %s7 = scalar_select 0, %s6, %s4
  // Predicated region
  $region2: #{_lambda_.18} parent=0 // pred_check
    _
  $region3: #{_lambda_.18} parent=0 // pred_check_branch
    %9 = sbr.rel (0) target = $region5
  $region4: #{_lambda_.18} parent=0 // pred_region
    _
  $region5: #{_lambda_.18} parent=0 // pred_fallthru
    _
  // Predicated region
  $region6: #{_lambda_.18} parent=0 // pred_check
    _
  $region7: #{_lambda_.18} parent=0 // pred_check_branch
    %11 = sbr.rel (0) target = $region9
  $region8: #{_lambda_.18} parent=0 // pred_region
    _
  $region9: #{_lambda_.18} parent=0 // pred_fallthru
    _
  // Predicated region
  $region10: #{_lambda_.18} parent=0 // pred_check
    _
  $region11: #{_lambda_.18} parent=0 // pred_check_branch
    %13 = sbr.rel (0) target = $region13
  $region12: #{_lambda_.18} parent=0 // pred_region
    _
  $region13: #{_lambda_.18} parent=0 // pred_fallthru
    _
  %v15 = vld [vmem:[%s0] sm:$0xf]
  %v16 = vld [vmem:[%s0 + $0x4] sm:$0xf]
  %v17 = vld [vmem:[%s1] sm:$0xf]
  %v18 = vld [vmem:[%s2] sm:$0xff]
  %v19 = vld [vmem:[%s2 + $0x8] sm:$0xff]
  %21 = vset.pattern.permute.xlu0 0
  %22 = vperm.xlu0 %21, %v18
  %v23 = vpop.permute.xlu0 %22
  %26 = vset.pattern.permute.xlu0 0
  %27 = vperm.xlu0 %26, %v19
  %v28 = vpop.permute.xlu0 %27
  %v32 = vunpack.c.l.b16 %v15
  %v33 = vunpack.c.l.b16 %v16
  %v34 = vpack.c.b16 %v33, %v32
  %vm35 = vcmask 64512
  %v37 = vsel %vm35, %v34, 0
  %vm39 = vcmask 1043456
  %v41 = vsel %vm39, %v17, 0
  %43 = vmatpush.bf16.msra.mxu0 0
  %44 = vmatpush.bf16.msra.mxu0 0
  %45 = vmatpush.bf16.msra.mxu0 0
  %46 = vmatpush.bf16.msra.mxu0 0
  %47 = vmatpush.bf16.msra.mxu0 0
  %48 = vmatpush.bf16.msra.mxu0 0
  %49 = vmatpush.bf16.msra.mxu0 0
  %50 = vmatpush.bf16.msra.mxu0 %v41
  %51 = vmatmul.bf16.gmra.mxu0 %v37
  %v52 = vpop.f32.mrf.mxu0
  %v53 = vadd.f32 %v23, %v52
  %v54 = vpop.f32.mrf.mxu0
  %v55 = vadd.f32 %v28, %v54
  %56 = vdwg.mxu0
  %vm57 = vcmask 130048
  %58 = vst.msk [vmem:[%s3] sm:$0xff] %vm57, %v53
  %59 = vst.msk [vmem:[%s3 + $0x8] sm:$0xff] %vm57, %v55
  // Predicated region
  $region14: #{_lambda_.18} parent=0 // pred_check
    _
  $region15: #{_lambda_.18} parent=0 // pred_check_branch
    %61 = sbr.rel (0) target = $region17
  $region16: #{_lambda_.18} parent=0 // pred_region
    _
  $region17: #{_lambda_.18} parent=0 // pred_fallthru
    _
  // Predicated region
  $region18: #{_lambda_.18} parent=0 // pred_check
    _
  $region19: #{_lambda_.18} parent=0 // pred_check_branch
    %63 = sbr.rel (0) target = $region21
  $region20: #{_lambda_.18} parent=0 // pred_region
    _
  $region21: #{_lambda_.18} parent=0 // pred_fallthru
    _

// kernel: _lambda_.19
$region0: #{_lambda_.19}
  #allocation0 [shape = 'u32[]', space=smem, size = 0x4, offset = 0x4, fixed_abs, tag = 'smem constant byte address 0x4 - core index']
  #allocation1 [shape = 'u32[72,128]{1,0:T(1,128)}', space=vmem, size = 0x9000, scoped, tag = 'internal scratch']
  %s0 = inlined_call_operand.vmem [shape: bf16[16,432], index: 0, kind: input, shape index: {}]
  %s1 = inlined_call_operand.vmem [shape: bf16[432,16], index: 1, kind: input, shape index: {}]
  %s2 = inlined_call_operand.vmem [shape: f32[16,1], index: 2, kind: input, shape index: {}]
  %s3 = inlined_call_operand.vmem [shape: f32[16,16], index: 3, kind: input, shape index: {}]
  %s4 = inlined_call_operand.vmem [shape: f32[16,16], index: 4, kind: output, shape index: {}]
  %s5 = sld [smem:[#allocation0]]
  $region26: #{_lambda_.19} parent=0
    _
  %s7 = ssub.s32 1, %s5
  %s8 = scalar_select 0, %s7, %s5
  // Predicated region
  $region2: #{_lambda_.19} parent=0 // pred_check
    _
  $region3: #{_lambda_.19} parent=0 // pred_check_branch
    %10 = sbr.rel (0) target = $region5
  $region4: #{_lambda_.19} parent=0 // pred_region
    _
  $region5: #{_lambda_.19} parent=0 // pred_fallthru
    _
  // Predicated region
  $region6: #{_lambda_.19} parent=0 // pred_check
    _
  $region7: #{_lambda_.19} parent=0 // pred_check_branch
    %12 = sbr.rel (0) target = $region9
  $region8: #{_lambda_.19} parent=0 // pred_region
    _
  $region9: #{_lambda_.19} parent=0 // pred_fallthru
    _
  // Predicated region
  $region10: #{_lambda_.19} parent=0 // pred_check
    _
  $region11: #{_lambda_.19} parent=0 // pred_check_branch
    %14 = sbr.rel (0) target = $region13
  $region12: #{_lambda_.19} parent=0 // pred_region
    _
  $region13: #{_lambda_.19} parent=0 // pred_fallthru
    _
  // Predicated region
  $region14: #{_lambda_.19} parent=0 // pred_check
    _
  $region15: #{_lambda_.19} parent=0 // pred_check_branch
    %16 = sbr.rel (0) target = $region17
  $region16: #{_lambda_.19} parent=0 // pred_region
    _
  $region17: #{_lambda_.19} parent=0 // pred_fallthru
    _
  %v18 = vld [vmem:[%s0] sm:$0xff]
  %v19 = vld [vmem:[%s0 + $0x8] sm:$0xff]
  %v20 = vld [vmem:[%s0 + $0x10] sm:$0xff]
  %v21 = vld [vmem:[%s0 + $0x18] sm:$0xff]
  %v22 = vld [vmem:[%s1] sm:$0xf]
  %v23 = vld [vmem:[%s1 + $0x4] sm:$0xf]
  %v24 = vld [vmem:[%s1 + $0x8] sm:$0xf]
  %v25 = vld [vmem:[%s1 + $0xc] sm:$0xf]
  %v26 = vld [vmem:[%s1 + $0x10] sm:$0xf]
  %v27 = vld [vmem:[%s1 + $0x14] sm:$0xf]
  %v28 = vld [vmem:[%s1 + $0x18] sm:$0xf]
  %v29 = vld [vmem:[%s1 + $0x1c] sm:$0xf]
  %v30 = vld [vmem:[%s1 + $0x20] sm:$0xf]
  %v31 = vld [vmem:[%s1 + $0x24] sm:$0xf]
  %v32 = vld [vmem:[%s1 + $0x28] sm:$0xf]
  %v33 = vld [vmem:[%s1 + $0x2c] sm:$0xf]
  %v34 = vld [vmem:[%s1 + $0x30] sm:$0xf]
  %v35 = vld [vmem:[%s1 + $0x34] sm:$0xf]
  %v36 = vld [vmem:[%s1 + $0x38] sm:$0xf]
  %v37 = vld [vmem:[%s1 + $0x3c] sm:$0xf]
  %v38 = vld [vmem:[%s1 + $0x40] sm:$0xf]
  %v39 = vld [vmem:[%s1 + $0x44] sm:$0xf]
  %v40 = vld [vmem:[%s1 + $0x48] sm:$0xf]
  %v41 = vld [vmem:[%s1 + $0x4c] sm:$0xf]
  %v42 = vld [vmem:[%s1 + $0x50] sm:$0xf]
  %v43 = vld [vmem:[%s1 + $0x54] sm:$0xf]
  %v44 = vld [vmem:[%s1 + $0x58] sm:$0xf]
  %v45 = vld [vmem:[%s1 + $0x5c] sm:$0xf]
  %v46 = vld [vmem:[%s1 + $0x60] sm:$0xf]
  %v47 = vld [vmem:[%s1 + $0x64] sm:$0xf]
  %v48 = vld [vmem:[%s1 + $0x68] sm:$0xf]
  %v49 = vld [vmem:[%s1 + $0x6c] sm:$0xf]
  %v50 = vld [vmem:[%s1 + $0x70] sm:$0xf]
  %v51 = vld [vmem:[%s1 + $0x74] sm:$0xf]
  %v52 = vld [vmem:[%s1 + $0x78] sm:$0xf]
  %v53 = vld [vmem:[%s1 + $0x7c] sm:$0xf]
  %v54 = vld [vmem:[%s1 + $0x80] sm:$0xf]
  %v55 = vld [vmem:[%s1 + $0x84] sm:$0xf]
  %v56 = vld [vmem:[%s1 + $0x88] sm:$0xf]
  %v57 = vld [vmem:[%s1 + $0x8c] sm:$0xf]
  %v58 = vld [vmem:[%s1 + $0x90] sm:$0xf]
  %v59 = vld [vmem:[%s1 + $0x94] sm:$0xf]
  %v60 = vld [vmem:[%s1 + $0x98] sm:$0xf]
  %v61 = vld [vmem:[%s1 + $0x9c] sm:$0xf]
  %v62 = vld [vmem:[%s1 + $0xa0] sm:$0xf]
  %v63 = vld [vmem:[%s1 + $0xa4] sm:$0xf]
  %v64 = vld [vmem:[%s1 + $0xa8] sm:$0xf]
  %v65 = vld [vmem:[%s1 + $0xac] sm:$0xf]
  %v66 = vld [vmem:[%s1 + $0xb0] sm:$0xf]
  %v67 = vld [vmem:[%s1 + $0xb4] sm:$0xf]
  %v68 = vld [vmem:[%s1 + $0xb8] sm:$0xf]
  %v69 = vld [vmem:[%s1 + $0xbc] sm:$0xf]
  %v70 = vld [vmem:[%s1 + $0xc0] sm:$0xf]
  %v71 = vld [vmem:[%s1 + $0xc4] sm:$0xf]
  %v72 = vld [vmem:[%s1 + $0xc8] sm:$0xf]
  %v73 = vld [vmem:[%s1 + $0xcc] sm:$0xf]
  %v74 = vld [vmem:[%s1 + $0xd0] sm:$0xf]
  %v75 = vld [vmem:[%s1 + $0xd4] sm:$0xf]
  %v76 = vld [vmem:[%s2] sm:$0xff]
  %v77 = vld [vmem:[%s2 + $0x8] sm:$0xff]
  %79 = vset.pattern.permute.xlu0 0
  %80 = vperm.xlu0 %79, %v76
  %v81 = vpop.permute.xlu0 %80
  %84 = vset.pattern.permute.xlu0 0
  %85 = vperm.xlu0 %84, %v77
  %v86 = vpop.permute.xlu0 %85
  %v92 = vunpack.c.l.b16 %v18
  %v93 = vunpack.c.h.b16 %v18
  %v94 = vunpack.c.l.b16 %v19
  %v95 = vunpack.c.h.b16 %v19
  %v96 = vunpack.c.l.b16 %v20
  %v97 = vunpack.c.h.b16 %v20
  %v98 = vunpack.c.l.b16 %v21
  %v99 = vunpack.c.h.b16 %v21
  %v100 = vpack.c.b16 %v96, %v92
  %v101 = vpack.c.b16 %v97, %v93
  %v102 = vpack.c.b16 %v98, %v94
  %v103 = vpack.c.b16 %v99, %v95
  %v161 = vunpack.c.l.b16 %v22
  %v162 = vunpack.c.l.b16 %v23
  %v163 = vunpack.c.l.b16 %v24
  %v164 = vunpack.c.l.b16 %v25
  %v165 = vunpack.c.l.b16 %v26
  %v166 = vunpack.c.l.b16 %v27
  %v167 = vunpack.c.l.b16 %v28
  %v168 = vunpack.c.l.b16 %v29
  %v169 = vunpack.c.l.b16 %v30
  %v170 = vunpack.c.l.b16 %v31
  %v171 = vunpack.c.l.b16 %v32
  %v172 = vunpack.c.l.b16 %v33
  %v173 = vunpack.c.l.b16 %v34
  %v174 = vunpack.c.l.b16 %v35
  %v175 = vunpack.c.l.b16 %v36
  %v176 = vunpack.c.l.b16 %v37
  %v177 = vunpack.c.l.b16 %v38
  %v178 = vunpack.c.l.b16 %v39
  %v179 = vunpack.c.l.b16 %v40
  %v180 = vunpack.c.l.b16 %v41
  %v181 = vunpack.c.l.b16 %v42
  %v182 = vunpack.c.l.b16 %v43
  %v183 = vunpack.c.l.b16 %v44
  %v184 = vunpack.c.l.b16 %v45
  %v185 = vunpack.c.l.b16 %v46
  %v186 = vunpack.c.l.b16 %v47
  %v187 = vunpack.c.l.b16 %v48
  %v188 = vunpack.c.l.b16 %v49
  %v189 = vunpack.c.l.b16 %v50
  %v190 = vunpack.c.l.b16 %v51
  %v191 = vunpack.c.l.b16 %v52
  %v192 = vunpack.c.l.b16 %v53
  %v193 = vunpack.c.l.b16 %v54
  %v194 = vunpack.c.l.b16 %v55
  %v195 = vunpack.c.l.b16 %v56
  %v196 = vunpack.c.l.b16 %v57
  %v197 = vunpack.c.l.b16 %v58
  %v198 = vunpack.c.l.b16 %v59
  %v199 = vunpack.c.l.b16 %v60
  %v200 = vunpack.c.l.b16 %v61
  %v201 = vunpack.c.l.b16 %v62
  %v202 = vunpack.c.l.b16 %v63
  %v203 = vunpack.c.l.b16 %v64
  %v204 = vunpack.c.l.b16 %v65
  %v205 = vunpack.c.l.b16 %v66
  %v206 = vunpack.c.l.b16 %v67
  %v207 = vunpack.c.l.b16 %v68
  %v208 = vunpack.c.l.b16 %v69
  %v209 = vunpack.c.l.b16 %v70
  %v210 = vunpack.c.l.b16 %v71
  %v211 = vunpack.c.l.b16 %v72
  %v212 = vunpack.c.l.b16 %v73
  %v213 = vunpack.c.l.b16 %v74
  %v214 = vunpack.c.l.b16 %v75
  %v215 = vpack.c.b16 %v162, %v161
  %v216 = vpack.c.b16 %v164, %v163
  %v217 = vpack.c.b16 %v166, %v165
  %v218 = vpack.c.b16 %v168, %v167
  %v219 = vpack.c.b16 %v170, %v169
  %v220 = vpack.c.b16 %v172, %v171
  %v221 = vpack.c.b16 %v174, %v173
  %v222 = vpack.c.b16 %v176, %v175
  %v223 = vpack.c.b16 %v178, %v177
  %v224 = vpack.c.b16 %v180, %v179
  %v225 = vpack.c.b16 %v182, %v181
  %v226 = vpack.c.b16 %v184, %v183
  %v227 = vpack.c.b16 %v186, %v185
  %v228 = vpack.c.b16 %v188, %v187
  %v229 = vpack.c.b16 %v190, %v189
  %v230 = vpack.c.b16 %v192, %v191
  %v231 = vpack.c.b16 %v194, %v193
  %v232 = vpack.c.b16 %v196, %v195
  %v233 = vpack.c.b16 %v198, %v197
  %v234 = vpack.c.b16 %v200, %v199
  %v235 = vpack.c.b16 %v202, %v201
  %v236 = vpack.c.b16 %v204, %v203
  %v237 = vpack.c.b16 %v206, %v205
  %v238 = vpack.c.b16 %v208, %v207
  %v239 = vpack.c.b16 %v210, %v209
  %v240 = vpack.c.b16 %v212, %v211
  %v241 = vpack.c.b16 %v214, %v213
  %vm269 = vcmask 392192
  %v271 = vsel %vm269, %v103, 0
  %273 = vmatpush.bf16.msra.mxu0 %v222
  %274 = vmatpush.bf16.msra.mxu0 %v221
  %275 = vmatpush.bf16.msra.mxu0 %v220
  %276 = vmatpush.bf16.msra.mxu0 %v219
  %277 = vmatpush.bf16.msra.mxu0 %v218
  %278 = vmatpush.bf16.msra.mxu0 %v217
  %279 = vmatpush.bf16.msra.mxu0 %v216
  %280 = vmatpush.bf16.msra.mxu0 %v215
  %281 = vmatmul.bf16.gmra.mxu0 %v100
  %v282 = vpop.f32.mrf.mxu0
  %v283 = vadd.f32 %v81, %v282
  %v284 = vpop.f32.mrf.mxu0
  %v285 = vadd.f32 %v86, %v284
  %286 = vdwg.mxu0
  %287 = vmatpush.bf16.msra.mxu0 %v230
  %288 = vmatpush.bf16.msra.mxu0 %v229
  %289 = vmatpush.bf16.msra.mxu0 %v228
  %290 = vmatpush.bf16.msra.mxu0 %v227
  %291 = vmatpush.bf16.msra.mxu0 %v226
  %292 = vmatpush.bf16.msra.mxu0 %v225
  %293 = vmatpush.bf16.msra.mxu0 %v224
  %294 = vmatpush.bf16.msra.mxu0 %v223
  %295 = vmatmul.bf16.gmra.mxu0 %v101
  %v296 = vpop.f32.mrf.mxu0
  %v297 = vadd.f32 %v283, %v296
  %v298 = vpop.f32.mrf.mxu0
  %v299 = vadd.f32 %v285, %v298
  %300 = vdwg.mxu0
  %301 = vmatpush.bf16.msra.mxu0 %v238
  %302 = vmatpush.bf16.msra.mxu0 %v237
  %303 = vmatpush.bf16.msra.mxu0 %v236
  %304 = vmatpush.bf16.msra.mxu0 %v235
  %305 = vmatpush.bf16.msra.mxu0 %v234
  %306 = vmatpush.bf16.msra.mxu0 %v233
  %307 = vmatpush.bf16.msra.mxu0 %v232
  %308 = vmatpush.bf16.msra.mxu0 %v231
  %309 = vmatmul.bf16.gmra.mxu0 %v102
  %v310 = vpop.f32.mrf.mxu0
  %v311 = vadd.f32 %v297, %v310
  %v312 = vpop.f32.mrf.mxu0
  %v313 = vadd.f32 %v299, %v312
  %314 = vdwg.mxu0
  %315 = vmatpush.bf16.msra.mxu0 0
  %316 = vmatpush.bf16.msra.mxu0 0
  %317 = vmatpush.bf16.msra.mxu0 0
  %318 = vmatpush.bf16.msra.mxu0 0
  %319 = vmatpush.bf16.msra.mxu0 0
  %320 = vmatpush.bf16.msra.mxu0 %v241
  %321 = vmatpush.bf16.msra.mxu0 %v240
  %322 = vmatpush.bf16.msra.mxu0 %v239
  %323 = vmatmul.bf16.gmra.mxu0 %v271
  %v324 = vpop.f32.mrf.mxu0
  %v325 = vadd.f32 %v311, %v324
  %v326 = vpop.f32.mrf.mxu0
  %v327 = vadd.f32 %v313, %v326
  %328 = vdwg.mxu0
  %v329 = vld [vmem:[%s3] sm:$0xff]
  %v330 = vld [vmem:[%s3 + $0x8] sm:$0xff]
  %v331 = vadd.f32 %v325, %v329
  %v332 = vadd.f32 %v327, %v330
  %v333 = vmax.f32 %v331, 0.0
  %v334 = vmax.f32 %v332, 0.0
  %vm335 = vcmask 130048
  %336 = vst.msk [vmem:[%s4] sm:$0xff] %vm335, %v333
  %337 = vst.msk [vmem:[%s4 + $0x8] sm:$0xff] %vm335, %v334
  // Predicated region
  $region18: #{_lambda_.19} parent=0 // pred_check
    _
  $region19: #{_lambda_.19} parent=0 // pred_check_branch
    %339 = sbr.rel (0) target = $region21
  $region20: #{_lambda_.19} parent=0 // pred_region
    _
  $region21: #{_lambda_.19} parent=0 // pred_fallthru
    _
  // Predicated region
  $region22: #{_lambda_.19} parent=0 // pred_check
    _
  $region23: #{_lambda_.19} parent=0 // pred_check_branch
    %341 = sbr.rel (0) target = $region25
  $region24: #{_lambda_.19} parent=0 // pred_region
    _
  $region25: #{_lambda_.19} parent=0 // pred_fallthru
    _

// kernel: _lambda_.20
$region0: #{_lambda_.20}
  #allocation0 [shape = 'u32[]', space=smem, size = 0x4, offset = 0x4, fixed_abs, tag = 'smem constant byte address 0x4 - core index']
  #allocation1 [shape = 'u32[72,128]{1,0:T(1,128)}', space=vmem, size = 0x9000, scoped, tag = 'internal scratch']
  %s0 = inlined_call_operand.vmem [shape: bf16[32,432], index: 0, kind: input, shape index: {}]
  %s1 = inlined_call_operand.vmem [shape: bf16[432,2], index: 1, kind: input, shape index: {}]
  %s2 = inlined_call_operand.vmem [shape: f32[32,1], index: 2, kind: input, shape index: {}]
  %s3 = inlined_call_operand.vmem [shape: f32[32,2], index: 3, kind: output, shape index: {}]
  %s4 = sld [smem:[#allocation0]]
  $region22: #{_lambda_.20} parent=0
    _
  %s6 = ssub.s32 1, %s4
  %s7 = scalar_select 0, %s6, %s4
  // Predicated region
  $region2: #{_lambda_.20} parent=0 // pred_check
    _
  $region3: #{_lambda_.20} parent=0 // pred_check_branch
    %9 = sbr.rel (0) target = $region5
  $region4: #{_lambda_.20} parent=0 // pred_region
    _
  $region5: #{_lambda_.20} parent=0 // pred_fallthru
    _
  // Predicated region
  $region6: #{_lambda_.20} parent=0 // pred_check
    _
  $region7: #{_lambda_.20} parent=0 // pred_check_branch
    %11 = sbr.rel (0) target = $region9
  $region8: #{_lambda_.20} parent=0 // pred_region
    _
  $region9: #{_lambda_.20} parent=0 // pred_fallthru
    _
  // Predicated region
  $region10: #{_lambda_.20} parent=0 // pred_check
    _
  $region11: #{_lambda_.20} parent=0 // pred_check_branch
    %13 = sbr.rel (0) target = $region13
  $region12: #{_lambda_.20} parent=0 // pred_region
    _
  $region13: #{_lambda_.20} parent=0 // pred_fallthru
    _
  %v15 = vld [vmem:[%s0] sm:$0xff]
  %v16 = vld [vmem:[%s0 + $0x8] sm:$0xff]
  %v17 = vld [vmem:[%s0 + $0x10] sm:$0xff]
  %v18 = vld [vmem:[%s0 + $0x18] sm:$0xff]
  %v19 = vld [vmem:[%s0 + $0x20] sm:$0xff]
  %v20 = vld [vmem:[%s0 + $0x28] sm:$0xff]
  %v21 = vld [vmem:[%s0 + $0x30] sm:$0xff]
  %v22 = vld [vmem:[%s0 + $0x38] sm:$0xff]
  %v23 = vld [vmem:[%s1] sm:$0xf]
  %v24 = vld [vmem:[%s1 + $0x4] sm:$0xf]
  %v25 = vld [vmem:[%s1 + $0x8] sm:$0xf]
  %v26 = vld [vmem:[%s1 + $0xc] sm:$0xf]
  %v27 = vld [vmem:[%s1 + $0x10] sm:$0xf]
  %v28 = vld [vmem:[%s1 + $0x14] sm:$0xf]
  %v29 = vld [vmem:[%s1 + $0x18] sm:$0xf]
  %v30 = vld [vmem:[%s1 + $0x1c] sm:$0xf]
  %v31 = vld [vmem:[%s1 + $0x20] sm:$0xf]
  %v32 = vld [vmem:[%s1 + $0x24] sm:$0xf]
  %v33 = vld [vmem:[%s1 + $0x28] sm:$0xf]
  %v34 = vld [vmem:[%s1 + $0x2c] sm:$0xf]
  %v35 = vld [vmem:[%s1 + $0x30] sm:$0xf]
  %v36 = vld [vmem:[%s1 + $0x34] sm:$0xf]
  %v37 = vld [vmem:[%s1 + $0x38] sm:$0xf]
  %v38 = vld [vmem:[%s1 + $0x3c] sm:$0xf]
  %v39 = vld [vmem:[%s1 + $0x40] sm:$0xf]
  %v40 = vld [vmem:[%s1 + $0x44] sm:$0xf]
  %v41 = vld [vmem:[%s1 + $0x48] sm:$0xf]
  %v42 = vld [vmem:[%s1 + $0x4c] sm:$0xf]
  %v43 = vld [vmem:[%s1 + $0x50] sm:$0xf]
  %v44 = vld [vmem:[%s1 + $0x54] sm:$0xf]
  %v45 = vld [vmem:[%s1 + $0x58] sm:$0xf]
  %v46 = vld [vmem:[%s1 + $0x5c] sm:$0xf]
  %v47 = vld [vmem:[%s1 + $0x60] sm:$0xf]
  %v48 = vld [vmem:[%s1 + $0x64] sm:$0xf]
  %v49 = vld [vmem:[%s1 + $0x68] sm:$0xf]
  %v50 = vld [vmem:[%s1 + $0x6c] sm:$0xf]
  %v51 = vld [vmem:[%s1 + $0x70] sm:$0xf]
  %v52 = vld [vmem:[%s1 + $0x74] sm:$0xf]
  %v53 = vld [vmem:[%s1 + $0x78] sm:$0xf]
  %v54 = vld [vmem:[%s1 + $0x7c] sm:$0xf]
  %v55 = vld [vmem:[%s1 + $0x80] sm:$0xf]
  %v56 = vld [vmem:[%s1 + $0x84] sm:$0xf]
  %v57 = vld [vmem:[%s1 + $0x88] sm:$0xf]
  %v58 = vld [vmem:[%s1 + $0x8c] sm:$0xf]
  %v59 = vld [vmem:[%s1 + $0x90] sm:$0xf]
  %v60 = vld [vmem:[%s1 + $0x94] sm:$0xf]
  %v61 = vld [vmem:[%s1 + $0x98] sm:$0xf]
  %v62 = vld [vmem:[%s1 + $0x9c] sm:$0xf]
  %v63 = vld [vmem:[%s1 + $0xa0] sm:$0xf]
  %v64 = vld [vmem:[%s1 + $0xa4] sm:$0xf]
  %v65 = vld [vmem:[%s1 + $0xa8] sm:$0xf]
  %v66 = vld [vmem:[%s1 + $0xac] sm:$0xf]
  %v67 = vld [vmem:[%s1 + $0xb0] sm:$0xf]
  %v68 = vld [vmem:[%s1 + $0xb4] sm:$0xf]
  %v69 = vld [vmem:[%s1 + $0xb8] sm:$0xf]
  %v70 = vld [vmem:[%s1 + $0xbc] sm:$0xf]
  %v71 = vld [vmem:[%s1 + $0xc0] sm:$0xf]
  %v72 = vld [vmem:[%s1 + $0xc4] sm:$0xf]
  %v73 = vld [vmem:[%s1 + $0xc8] sm:$0xf]
  %v74 = vld [vmem:[%s1 + $0xcc] sm:$0xf]
  %v75 = vld [vmem:[%s1 + $0xd0] sm:$0xf]
  %v76 = vld [vmem:[%s1 + $0xd4] sm:$0xf]
  %v77 = vld [vmem:[%s2] sm:$0xff]
  %v78 = vld [vmem:[%s2 + $0x8] sm:$0xff]
  %v79 = vld [vmem:[%s2 + $0x10] sm:$0xff]
  %v80 = vld [vmem:[%s2 + $0x18] sm:$0xff]
  %82 = vset.pattern.permute.xlu0 0
  %83 = vperm.xlu0 %82, %v77
  %v84 = vpop.permute.xlu0 %83
  %87 = vset.pattern.permute.xlu0 0
  %88 = vperm.xlu0 %87, %v78
  %v89 = vpop.permute.xlu0 %88
  %92 = vset.pattern.permute.xlu0 0
  %93 = vperm.xlu0 %92, %v79
  %v94 = vpop.permute.xlu0 %93
  %97 = vset.pattern.permute.xlu0 0
  %98 = vperm.xlu0 %97, %v80
  %v99 = vpop.permute.xlu0 %98
  %v109 = vunpack.c.l.b16 %v15
  %v110 = vunpack.c.h.b16 %v15
  %v111 = vunpack.c.l.b16 %v16
  %v112 = vunpack.c.h.b16 %v16
  %v113 = vunpack.c.l.b16 %v17
  %v114 = vunpack.c.h.b16 %v17
  %v115 = vunpack.c.l.b16 %v18
  %v116 = vunpack.c.h.b16 %v18
  %v117 = vunpack.c.l.b16 %v19
  %v118 = vunpack.c.h.b16 %v19
  %v119 = vunpack.c.l.b16 %v20
  %v120 = vunpack.c.h.b16 %v20
  %v121 = vunpack.c.l.b16 %v21
  %v122 = vunpack.c.h.b16 %v21
  %v123 = vunpack.c.l.b16 %v22
  %v124 = vunpack.c.h.b16 %v22
  %v125 = vpack.c.b16 %v113, %v109
  %v126 = vpack.c.b16 %v114, %v110
  %v127 = vpack.c.b16 %v115, %v111
  %v128 = vpack.c.b16 %v116, %v112
  %v129 = vpack.c.b16 %v121, %v117
  %v130 = vpack.c.b16 %v122, %v118
  %v131 = vpack.c.b16 %v123, %v119
  %v132 = vpack.c.b16 %v124, %v120
  %v193 = vunpack.c.l.b16 %v23
  %v194 = vunpack.c.l.b16 %v24
  %v195 = vunpack.c.l.b16 %v25
  %v196 = vunpack.c.l.b16 %v26
  %v197 = vunpack.c.l.b16 %v27
  %v198 = vunpack.c.l.b16 %v28
  %v199 = vunpack.c.l.b16 %v29
  %v200 = vunpack.c.l.b16 %v30
  %v201 = vunpack.c.l.b16 %v31
  %v202 = vunpack.c.l.b16 %v32
  %v203 = vunpack.c.l.b16 %v33
  %v204 = vunpack.c.l.b16 %v34
  %v205 = vunpack.c.l.b16 %v35
  %v206 = vunpack.c.l.b16 %v36
  %v207 = vunpack.c.l.b16 %v37
  %v208 = vunpack.c.l.b16 %v38
  %v209 = vunpack.c.l.b16 %v39
  %v210 = vunpack.c.l.b16 %v40
  %v211 = vunpack.c.l.b16 %v41
  %v212 = vunpack.c.l.b16 %v42
  %v213 = vunpack.c.l.b16 %v43
  %v214 = vunpack.c.l.b16 %v44
  %v215 = vunpack.c.l.b16 %v45
  %v216 = vunpack.c.l.b16 %v46
  %v217 = vunpack.c.l.b16 %v47
  %v218 = vunpack.c.l.b16 %v48
  %v219 = vunpack.c.l.b16 %v49
  %v220 = vunpack.c.l.b16 %v50
  %v221 = vunpack.c.l.b16 %v51
  %v222 = vunpack.c.l.b16 %v52
  %v223 = vunpack.c.l.b16 %v53
  %v224 = vunpack.c.l.b16 %v54
  %v225 = vunpack.c.l.b16 %v55
  %v226 = vunpack.c.l.b16 %v56
  %v227 = vunpack.c.l.b16 %v57
  %v228 = vunpack.c.l.b16 %v58
  %v229 = vunpack.c.l.b16 %v59
  %v230 = vunpack.c.l.b16 %v60
  %v231 = vunpack.c.l.b16 %v61
  %v232 = vunpack.c.l.b16 %v62
  %v233 = vunpack.c.l.b16 %v63
  %v234 = vunpack.c.l.b16 %v64
  %v235 = vunpack.c.l.b16 %v65
  %v236 = vunpack.c.l.b16 %v66
  %v237 = vunpack.c.l.b16 %v67
  %v238 = vunpack.c.l.b16 %v68
  %v239 = vunpack.c.l.b16 %v69
  %v240 = vunpack.c.l.b16 %v70
  %v241 = vunpack.c.l.b16 %v71
  %v242 = vunpack.c.l.b16 %v72
  %v243 = vunpack.c.l.b16 %v73
  %v244 = vunpack.c.l.b16 %v74
  %v245 = vunpack.c.l.b16 %v75
  %v246 = vunpack.c.l.b16 %v76
  %v247 = vpack.c.b16 %v194, %v193
  %v248 = vpack.c.b16 %v196, %v195
  %v249 = vpack.c.b16 %v198, %v197
  %v250 = vpack.c.b16 %v200, %v199
  %v251 = vpack.c.b16 %v202, %v201
  %v252 = vpack.c.b16 %v204, %v203
  %v253 = vpack.c.b16 %v206, %v205
  %v254 = vpack.c.b16 %v208, %v207
  %v255 = vpack.c.b16 %v210, %v209
  %v256 = vpack.c.b16 %v212, %v211
  %v257 = vpack.c.b16 %v214, %v213
  %v258 = vpack.c.b16 %v216, %v215
  %v259 = vpack.c.b16 %v218, %v217
  %v260 = vpack.c.b16 %v220, %v219
  %v261 = vpack.c.b16 %v222, %v221
  %v262 = vpack.c.b16 %v224, %v223
  %v263 = vpack.c.b16 %v226, %v225
  %v264 = vpack.c.b16 %v228, %v227
  %v265 = vpack.c.b16 %v230, %v229
  %v266 = vpack.c.b16 %v232, %v231
  %v267 = vpack.c.b16 %v234, %v233
  %v268 = vpack.c.b16 %v236, %v235
  %v269 = vpack.c.b16 %v238, %v237
  %v270 = vpack.c.b16 %v240, %v239
  %v271 = vpack.c.b16 %v242, %v241
  %v272 = vpack.c.b16 %v244, %v243
  %v273 = vpack.c.b16 %v246, %v245
  %vm301 = vcmask 392192
  %v303 = vsel %vm301, %v128, 0
  %v306 = vsel %vm301, %v132, 0
  %308 = vmatpush.bf16.msra.mxu0 %v254
  %309 = vmatpush.bf16.msra.mxu0 %v253
  %310 = vmatpush.bf16.msra.mxu0 %v252
  %311 = vmatpush.bf16.msra.mxu0 %v251
  %312 = vmatpush.bf16.msra.mxu0 %v250
  %313 = vmatpush.bf16.msra.mxu0 %v249
  %314 = vmatpush.bf16.msra.mxu0 %v248
  %315 = vmatpush.bf16.msra.mxu0 %v247
  %316 = vmatmul.bf16.gmra.mxu0 %v125
  %v317 = vpop.f32.mrf.mxu0
  %v318 = vadd.f32 %v84, %v317
  %v319 = vpop.f32.mrf.mxu0
  %v320 = vadd.f32 %v89, %v319
  %321 = vmatmul.bf16.gmra.mxu0 %v129
  %v322 = vpop.f32.mrf.mxu0
  %v323 = vadd.f32 %v94, %v322
  %v324 = vpop.f32.mrf.mxu0
  %v325 = vadd.f32 %v99, %v324
  %326 = vdwg.mxu0
  %327 = vmatpush.bf16.msra.mxu0 %v262
  %328 = vmatpush.bf16.msra.mxu0 %v261
  %329 = vmatpush.bf16.msra.mxu0 %v260
  %330 = vmatpush.bf16.msra.mxu0 %v259
  %331 = vmatpush.bf16.msra.mxu0 %v258
  %332 = vmatpush.bf16.msra.mxu0 %v257
  %333 = vmatpush.bf16.msra.mxu0 %v256
  %334 = vmatpush.bf16.msra.mxu0 %v255
  %335 = vmatmul.bf16.gmra.mxu0 %v126
  %v336 = vpop.f32.mrf.mxu0
  %v337 = vadd.f32 %v318, %v336
  %v338 = vpop.f32.mrf.mxu0
  %v339 = vadd.f32 %v320, %v338
  %340 = vmatmul.bf16.gmra.mxu0 %v130
  %v341 = vpop.f32.mrf.mxu0
  %v342 = vadd.f32 %v323, %v341
  %v343 = vpop.f32.mrf.mxu0
  %v344 = vadd.f32 %v325, %v343
  %345 = vdwg.mxu0
  %346 = vmatpush.bf16.msra.mxu0 %v270
  %347 = vmatpush.bf16.msra.mxu0 %v269
  %348 = vmatpush.bf16.msra.mxu0 %v268
  %349 = vmatpush.bf16.msra.mxu0 %v267
  %350 = vmatpush.bf16.msra.mxu0 %v266
  %351 = vmatpush.bf16.msra.mxu0 %v265
  %352 = vmatpush.bf16.msra.mxu0 %v264
  %353 = vmatpush.bf16.msra.mxu0 %v263
  %354 = vmatmul.bf16.gmra.mxu0 %v127
  %v355 = vpop.f32.mrf.mxu0
  %v356 = vadd.f32 %v337, %v355
  %v357 = vpop.f32.mrf.mxu0
  %v358 = vadd.f32 %v339, %v357
  %359 = vmatmul.bf16.gmra.mxu0 %v131
  %v360 = vpop.f32.mrf.mxu0
  %v361 = vadd.f32 %v342, %v360
  %v362 = vpop.f32.mrf.mxu0
  %v363 = vadd.f32 %v344, %v362
  %364 = vdwg.mxu0
  %365 = vmatpush.bf16.msra.mxu0 0
  %366 = vmatpush.bf16.msra.mxu0 0
  %367 = vmatpush.bf16.msra.mxu0 0
  %368 = vmatpush.bf16.msra.mxu0 0
  %369 = vmatpush.bf16.msra.mxu0 0
  %370 = vmatpush.bf16.msra.mxu0 %v273
  %371 = vmatpush.bf16.msra.mxu0 %v272
  %372 = vmatpush.bf16.msra.mxu0 %v271
  %373 = vmatmul.bf16.gmra.mxu0 %v303
  %v374 = vpop.f32.mrf.mxu0
  %v375 = vadd.f32 %v356, %v374
  %v376 = vpop.f32.mrf.mxu0
  %v377 = vadd.f32 %v358, %v376
  %378 = vmatmul.bf16.gmra.mxu0 %v306
  %v379 = vpop.f32.mrf.mxu0
  %v380 = vadd.f32 %v361, %v379
  %v381 = vpop.f32.mrf.mxu0
  %v382 = vadd.f32 %v363, %v381
  %383 = vdwg.mxu0
  %v384 = vmax.f32 %v375, 0.0
  %v385 = vmax.f32 %v377, 0.0
  %v386 = vmax.f32 %v380, 0.0
  %v387 = vmax.f32 %v382, 0.0
  %vm388 = vcmask 15360
  %389 = vst.msk [vmem:[%s3] sm:$0xff] %vm388, %v384
  %390 = vst.msk [vmem:[%s3 + $0x8] sm:$0xff] %vm388, %v385
  %391 = vst.msk [vmem:[%s3 + $0x10] sm:$0xff] %vm388, %v386
  %392 = vst.msk [vmem:[%s3 + $0x18] sm:$0xff] %vm388, %v387
  // Predicated region
  $region14: #{_lambda_.20} parent=0 // pred_check
    _
  $region15: #{_lambda_.20} parent=0 // pred_check_branch
    %394 = sbr.rel (0) target = $region17
  $region16: #{_lambda_.20} parent=0 // pred_region
    _
  $region17: #{_lambda_.20} parent=0 // pred_fallthru
    _
  // Predicated region
  $region18: #{_lambda_.20} parent=0 // pred_check
    _
  $region19: #{_lambda_.20} parent=0 // pred_check_branch
    %396 = sbr.rel (0) target = $region21
  $region20: #{_lambda_.20} parent=0 // pred_region
    _
  $region21: #{_lambda_.20} parent=0 // pred_fallthru
    _

// kernel: _lambda_.21
$region0: #{_lambda_.21}
  #allocation0 [shape = 'u32[]', space=smem, size = 0x4, offset = 0x4, fixed_abs, tag = 'smem constant byte address 0x4 - core index']
  #allocation1 [shape = 'u32[72,128]{1,0:T(1,128)}', space=vmem, size = 0x9000, scoped, tag = 'internal scratch']
  %s0 = inlined_call_operand.vmem [shape: bf16[32,16], index: 0, kind: input, shape index: {}]
  %s1 = inlined_call_operand.vmem [shape: bf16[16,2], index: 1, kind: input, shape index: {}]
  %s2 = inlined_call_operand.vmem [shape: f32[32,1], index: 2, kind: input, shape index: {}]
  %s3 = inlined_call_operand.vmem [shape: f32[32,2], index: 3, kind: output, shape index: {}]
  %s4 = sld [smem:[#allocation0]]
  $region22: #{_lambda_.21} parent=0
    _
  %s6 = ssub.s32 1, %s4
  %s7 = scalar_select 0, %s6, %s4
  // Predicated region
  $region2: #{_lambda_.21} parent=0 // pred_check
    _
  $region3: #{_lambda_.21} parent=0 // pred_check_branch
    %9 = sbr.rel (0) target = $region5
  $region4: #{_lambda_.21} parent=0 // pred_region
    _
  $region5: #{_lambda_.21} parent=0 // pred_fallthru
    _
  // Predicated region
  $region6: #{_lambda_.21} parent=0 // pred_check
    _
  $region7: #{_lambda_.21} parent=0 // pred_check_branch
    %11 = sbr.rel (0) target = $region9
  $region8: #{_lambda_.21} parent=0 // pred_region
    _
  $region9: #{_lambda_.21} parent=0 // pred_fallthru
    _
  // Predicated region
  $region10: #{_lambda_.21} parent=0 // pred_check
    _
  $region11: #{_lambda_.21} parent=0 // pred_check_branch
    %13 = sbr.rel (0) target = $region13
  $region12: #{_lambda_.21} parent=0 // pred_region
    _
  $region13: #{_lambda_.21} parent=0 // pred_fallthru
    _
  %v15 = vld [vmem:[%s0] sm:$0xf]
  %v16 = vld [vmem:[%s0 + $0x4] sm:$0xf]
  %v17 = vld [vmem:[%s0 + $0x8] sm:$0xf]
  %v18 = vld [vmem:[%s0 + $0xc] sm:$0xf]
  %v19 = vld [vmem:[%s1] sm:$0xf]
  %v20 = vld [vmem:[%s1 + $0x4] sm:$0xf]
  %v21 = vld [vmem:[%s2] sm:$0xff]
  %v22 = vld [vmem:[%s2 + $0x8] sm:$0xff]
  %v23 = vld [vmem:[%s2 + $0x10] sm:$0xff]
  %v24 = vld [vmem:[%s2 + $0x18] sm:$0xff]
  %26 = vset.pattern.permute.xlu0 0
  %27 = vperm.xlu0 %26, %v21
  %v28 = vpop.permute.xlu0 %27
  %31 = vset.pattern.permute.xlu0 0
  %32 = vperm.xlu0 %31, %v22
  %v33 = vpop.permute.xlu0 %32
  %36 = vset.pattern.permute.xlu0 0
  %37 = vperm.xlu0 %36, %v23
  %v38 = vpop.permute.xlu0 %37
  %41 = vset.pattern.permute.xlu0 0
  %42 = vperm.xlu0 %41, %v24
  %v43 = vpop.permute.xlu0 %42
  %v49 = vunpack.c.l.b16 %v15
  %v50 = vunpack.c.l.b16 %v16
  %v51 = vunpack.c.l.b16 %v17
  %v52 = vunpack.c.l.b16 %v18
  %v53 = vpack.c.b16 %v50, %v49
  %v54 = vpack.c.b16 %v52, %v51
  %v57 = vunpack.c.l.b16 %v19
  %v58 = vunpack.c.l.b16 %v20
  %v59 = vpack.c.b16 %v58, %v57
  %vm61 = vcmask 130048
  %v63 = vsel %vm61, %v53, 0
  %v66 = vsel %vm61, %v54, 0
  %68 = vmatpush.bf16.msra.mxu0 0
  %69 = vmatpush.bf16.msra.mxu0 0
  %70 = vmatpush.bf16.msra.mxu0 0
  %71 = vmatpush.bf16.msra.mxu0 0
  %72 = vmatpush.bf16.msra.mxu0 0
  %73 = vmatpush.bf16.msra.mxu0 0
  %74 = vmatpush.bf16.msra.mxu0 0
  %75 = vmatpush.bf16.msra.mxu0 %v59
  %76 = vmatmul.bf16.gmra.mxu0 %v63
  %v77 = vpop.f32.mrf.mxu0
  %v78 = vadd.f32 %v28, %v77
  %v79 = vpop.f32.mrf.mxu0
  %v80 = vadd.f32 %v33, %v79
  %81 = vmatmul.bf16.gmra.mxu0 %v66
  %v82 = vpop.f32.mrf.mxu0
  %v83 = vadd.f32 %v38, %v82
  %v84 = vpop.f32.mrf.mxu0
  %v85 = vadd.f32 %v43, %v84
  %86 = vdwg.mxu0
  %vm87 = vcmask 15360
  %88 = vst.msk [vmem:[%s3] sm:$0xff] %vm87, %v78
  %89 = vst.msk [vmem:[%s3 + $0x8] sm:$0xff] %vm87, %v80
  %90 = vst.msk [vmem:[%s3 + $0x10] sm:$0xff] %vm87, %v83
  %91 = vst.msk [vmem:[%s3 + $0x18] sm:$0xff] %vm87, %v85
  // Predicated region
  $region14: #{_lambda_.21} parent=0 // pred_check
    _
  $region15: #{_lambda_.21} parent=0 // pred_check_branch
    %93 = sbr.rel (0) target = $region17
  $region16: #{_lambda_.21} parent=0 // pred_region
    _
  $region17: #{_lambda_.21} parent=0 // pred_fallthru
    _
  // Predicated region
  $region18: #{_lambda_.21} parent=0 // pred_check
    _
  $region19: #{_lambda_.21} parent=0 // pred_check_branch
    %95 = sbr.rel (0) target = $region21
  $region20: #{_lambda_.21} parent=0 // pred_region
    _
  $region21: #{_lambda_.21} parent=0 // pred_fallthru
    _

// kernel: _lambda_.22
$region0: #{_lambda_.22}
  #allocation0 [shape = 'u32[]', space=smem, size = 0x4, offset = 0x4, fixed_abs, tag = 'smem constant byte address 0x4 - core index']
  #allocation1 [shape = 'u32[72,128]{1,0:T(1,128)}', space=vmem, size = 0x9000, scoped, tag = 'internal scratch']
  %s0 = inlined_call_operand.vmem [shape: bf16[32,864], index: 0, kind: input, shape index: {}]
  %s1 = inlined_call_operand.vmem [shape: bf16[864,2], index: 1, kind: input, shape index: {}]
  %s2 = inlined_call_operand.vmem [shape: f32[32,1], index: 2, kind: input, shape index: {}]
  %s3 = inlined_call_operand.vmem [shape: f32[32,2], index: 3, kind: input, shape index: {}]
  %s4 = inlined_call_operand.vmem [shape: f32[32,2], index: 4, kind: output, shape index: {}]
  %s5 = sld [smem:[#allocation0]]
  $region26: #{_lambda_.22} parent=0
    _
  %s7 = ssub.s32 1, %s5
  %s8 = scalar_select 0, %s7, %s5
  // Predicated region
  $region2: #{_lambda_.22} parent=0 // pred_check
    _
  $region3: #{_lambda_.22} parent=0 // pred_check_branch
    %10 = sbr.rel (0) target = $region5
  $region4: #{_lambda_.22} parent=0 // pred_region
    _
  $region5: #{_lambda_.22} parent=0 // pred_fallthru
    _
  // Predicated region
  $region6: #{_lambda_.22} parent=0 // pred_check
    _
  $region7: #{_lambda_.22} parent=0 // pred_check_branch
    %12 = sbr.rel (0) target = $region9
  $region8: #{_lambda_.22} parent=0 // pred_region
    _
  $region9: #{_lambda_.22} parent=0 // pred_fallthru
    _
  // Predicated region
  $region10: #{_lambda_.22} parent=0 // pred_check
    _
  $region11: #{_lambda_.22} parent=0 // pred_check_branch
    %14 = sbr.rel (0) target = $region13
  $region12: #{_lambda_.22} parent=0 // pred_region
    _
  $region13: #{_lambda_.22} parent=0 // pred_fallthru
    _
  // Predicated region
  $region14: #{_lambda_.22} parent=0 // pred_check
    _
  $region15: #{_lambda_.22} parent=0 // pred_check_branch
    %16 = sbr.rel (0) target = $region17
  $region16: #{_lambda_.22} parent=0 // pred_region
    _
  $region17: #{_lambda_.22} parent=0 // pred_fallthru
    _
  %v18 = vld [vmem:[%s0] sm:$0xff]
  %v19 = vld [vmem:[%s0 + $0x8] sm:$0xff]
  %v20 = vld [vmem:[%s0 + $0x10] sm:$0xff]
  %v21 = vld [vmem:[%s0 + $0x18] sm:$0xf]
  %v22 = vld [vmem:[%s0 + $0x1c] sm:$0xff]
  %v23 = vld [vmem:[%s0 + $0x24] sm:$0xff]
  %v24 = vld [vmem:[%s0 + $0x2c] sm:$0xff]
  %v25 = vld [vmem:[%s0 + $0x34] sm:$0xf]
  %v26 = vld [vmem:[%s0 + $0x38] sm:$0xff]
  %v27 = vld [vmem:[%s0 + $0x40] sm:$0xff]
  %v28 = vld [vmem:[%s0 + $0x48] sm:$0xff]
  %v29 = vld [vmem:[%s0 + $0x50] sm:$0xf]
  %v30 = vld [vmem:[%s0 + $0x54] sm:$0xff]
  %v31 = vld [vmem:[%s0 + $0x5c] sm:$0xff]
  %v32 = vld [vmem:[%s0 + $0x64] sm:$0xff]
  %v33 = vld [vmem:[%s0 + $0x6c] sm:$0xf]
  %v34 = vld [vmem:[%s1] sm:$0xf]
  %v35 = vld [vmem:[%s1 + $0x4] sm:$0xf]
  %v36 = vld [vmem:[%s1 + $0x8] sm:$0xf]
  %v37 = vld [vmem:[%s1 + $0xc] sm:$0xf]
  %v38 = vld [vmem:[%s1 + $0x10] sm:$0xf]
  %v39 = vld [vmem:[%s1 + $0x14] sm:$0xf]
  %v40 = vld [vmem:[%s1 + $0x18] sm:$0xf]
  %v41 = vld [vmem:[%s1 + $0x1c] sm:$0xf]
  %v42 = vld [vmem:[%s1 + $0x20] sm:$0xf]
  %v43 = vld [vmem:[%s1 + $0x24] sm:$0xf]
  %v44 = vld [vmem:[%s1 + $0x28] sm:$0xf]
  %v45 = vld [vmem:[%s1 + $0x2c] sm:$0xf]
  %v46 = vld [vmem:[%s1 + $0x30] sm:$0xf]
  %v47 = vld [vmem:[%s1 + $0x34] sm:$0xf]
  %v48 = vld [vmem:[%s1 + $0x38] sm:$0xf]
  %v49 = vld [vmem:[%s1 + $0x3c] sm:$0xf]
  %v50 = vld [vmem:[%s1 + $0x40] sm:$0xf]
  %v51 = vld [vmem:[%s1 + $0x44] sm:$0xf]
  %v52 = vld [vmem:[%s1 + $0x48] sm:$0xf]
  %v53 = vld [vmem:[%s1 + $0x4c] sm:$0xf]
  %v54 = vld [vmem:[%s1 + $0x50] sm:$0xf]
  %v55 = vld [vmem:[%s1 + $0x54] sm:$0xf]
  %v56 = vld [vmem:[%s1 + $0x58] sm:$0xf]
  %v57 = vld [vmem:[%s1 + $0x5c] sm:$0xf]
  %v58 = vld [vmem:[%s1 + $0x60] sm:$0xf]
  %v59 = vld [vmem:[%s1 + $0x64] sm:$0xf]
  %v60 = vld [vmem:[%s1 + $0x68] sm:$0xf]
  %v61 = vld [vmem:[%s1 + $0x6c] sm:$0xf]
  %v62 = vld [vmem:[%s1 + $0x70] sm:$0xf]
  %v63 = vld [vmem:[%s1 + $0x74] sm:$0xf]
  %v64 = vld [vmem:[%s1 + $0x78] sm:$0xf]
  %v65 = vld [vmem:[%s1 + $0x7c] sm:$0xf]
  %v66 = vld [vmem:[%s1 + $0x80] sm:$0xf]
  %v67 = vld [vmem:[%s1 + $0x84] sm:$0xf]
  %v68 = vld [vmem:[%s1 + $0x88] sm:$0xf]
  %v69 = vld [vmem:[%s1 + $0x8c] sm:$0xf]
  %v70 = vld [vmem:[%s1 + $0x90] sm:$0xf]
  %v71 = vld [vmem:[%s1 + $0x94] sm:$0xf]
  %v72 = vld [vmem:[%s1 + $0x98] sm:$0xf]
  %v73 = vld [vmem:[%s1 + $0x9c] sm:$0xf]
  %v74 = vld [vmem:[%s1 + $0xa0] sm:$0xf]
  %v75 = vld [vmem:[%s1 + $0xa4] sm:$0xf]
  %v76 = vld [vmem:[%s1 + $0xa8] sm:$0xf]
  %v77 = vld [vmem:[%s1 + $0xac] sm:$0xf]
  %v78 = vld [vmem:[%s1 + $0xb0] sm:$0xf]
  %v79 = vld [vmem:[%s1 + $0xb4] sm:$0xf]
  %v80 = vld [vmem:[%s1 + $0xb8] sm:$0xf]
  %v81 = vld [vmem:[%s1 + $0xbc] sm:$0xf]
  %v82 = vld [vmem:[%s1 + $0xc0] sm:$0xf]
  %v83 = vld [vmem:[%s1 + $0xc4] sm:$0xf]
  %v84 = vld [vmem:[%s1 + $0xc8] sm:$0xf]
  %v85 = vld [vmem:[%s1 + $0xcc] sm:$0xf]
  %v86 = vld [vmem:[%s1 + $0xd0] sm:$0xf]
  %v87 = vld [vmem:[%s1 + $0xd4] sm:$0xf]
  %v88 = vld [vmem:[%s1 + $0xd8] sm:$0xf]
  %v89 = vld [vmem:[%s1 + $0xdc] sm:$0xf]
  %v90 = vld [vmem:[%s1 + $0xe0] sm:$0xf]
  %v91 = vld [vmem:[%s1 + $0xe4] sm:$0xf]
  %v92 = vld [vmem:[%s1 + $0xe8] sm:$0xf]
  %v93 = vld [vmem:[%s1 + $0xec] sm:$0xf]
  %v94 = vld [vmem:[%s1 + $0xf0] sm:$0xf]
  %v95 = vld [vmem:[%s1 + $0xf4] sm:$0xf]
  %v96 = vld [vmem:[%s1 + $0xf8] sm:$0xf]
  %v97 = vld [vmem:[%s1 + $0xfc] sm:$0xf]
  %v98 = vld [vmem:[%s1 + $0x100] sm:$0xf]
  %v99 = vld [vmem:[%s1 + $0x104] sm:$0xf]
  %v100 = vld [vmem:[%s1 + $0x108] sm:$0xf]
  %v101 = vld [vmem:[%s1 + $0x10c] sm:$0xf]
  %v102 = vld [vmem:[%s1 + $0x110] sm:$0xf]
  %v103 = vld [vmem:[%s1 + $0x114] sm:$0xf]
  %v104 = vld [vmem:[%s1 + $0x118] sm:$0xf]
  %v105 = vld [vmem:[%s1 + $0x11c] sm:$0xf]
  %v106 = vld [vmem:[%s1 + $0x120] sm:$0xf]
  %v107 = vld [vmem:[%s1 + $0x124] sm:$0xf]
  %v108 = vld [vmem:[%s1 + $0x128] sm:$0xf]
  %v109 = vld [vmem:[%s1 + $0x12c] sm:$0xf]
  %v110 = vld [vmem:[%s1 + $0x130] sm:$0xf]
  %v111 = vld [vmem:[%s1 + $0x134] sm:$0xf]
  %v112 = vld [vmem:[%s1 + $0x138] sm:$0xf]
  %v113 = vld [vmem:[%s1 + $0x13c] sm:$0xf]
  %v114 = vld [vmem:[%s1 + $0x140] sm:$0xf]
  %v115 = vld [vmem:[%s1 + $0x144] sm:$0xf]
  %v116 = vld [vmem:[%s1 + $0x148] sm:$0xf]
  %v117 = vld [vmem:[%s1 + $0x14c] sm:$0xf]
  %v118 = vld [vmem:[%s1 + $0x150] sm:$0xf]
  %v119 = vld [vmem:[%s1 + $0x154] sm:$0xf]
  %v120 = vld [vmem:[%s1 + $0x158] sm:$0xf]
  %v121 = vld [vmem:[%s1 + $0x15c] sm:$0xf]
  %v122 = vld [vmem:[%s1 + $0x160] sm:$0xf]
  %v123 = vld [vmem:[%s1 + $0x164] sm:$0xf]
  %v124 = vld [vmem:[%s1 + $0x168] sm:$0xf]
  %v125 = vld [vmem:[%s1 + $0x16c] sm:$0xf]
  %v126 = vld [vmem:[%s1 + $0x170] sm:$0xf]
  %v127 = vld [vmem:[%s1 + $0x174] sm:$0xf]
  %v128 = vld [vmem:[%s1 + $0x178] sm:$0xf]
  %v129 = vld [vmem:[%s1 + $0x17c] sm:$0xf]
  %v130 = vld [vmem:[%s1 + $0x180] sm:$0xf]
  %v131 = vld [vmem:[%s1 + $0x184] sm:$0xf]
  %v132 = vld [vmem:[%s1 + $0x188] sm:$0xf]
  %v133 = vld [vmem:[%s1 + $0x18c] sm:$0xf]
  %v134 = vld [vmem:[%s1 + $0x190] sm:$0xf]
  %v135 = vld [vmem:[%s1 + $0x194] sm:$0xf]
  %v136 = vld [vmem:[%s1 + $0x198] sm:$0xf]
  %v137 = vld [vmem:[%s1 + $0x19c] sm:$0xf]
  %v138 = vld [vmem:[%s1 + $0x1a0] sm:$0xf]
  %v139 = vld [vmem:[%s1 + $0x1a4] sm:$0xf]
  %v140 = vld [vmem:[%s1 + $0x1a8] sm:$0xf]
  %v141 = vld [vmem:[%s1 + $0x1ac] sm:$0xf]
  %v142 = vld [vmem:[%s2] sm:$0xff]
  %v143 = vld [vmem:[%s2 + $0x8] sm:$0xff]
  %v144 = vld [vmem:[%s2 + $0x10] sm:$0xff]
  %v145 = vld [vmem:[%s2 + $0x18] sm:$0xff]
  %147 = vset.pattern.permute.xlu0 0
  %148 = vperm.xlu0 %147, %v142
  %v149 = vpop.permute.xlu0 %148
  %152 = vset.pattern.permute.xlu0 0
  %153 = vperm.xlu0 %152, %v143
  %v154 = vpop.permute.xlu0 %153
  %157 = vset.pattern.permute.xlu0 0
  %158 = vperm.xlu0 %157, %v144
  %v159 = vpop.permute.xlu0 %158
  %162 = vset.pattern.permute.xlu0 0
  %163 = vperm.xlu0 %162, %v145
  %v164 = vpop.permute.xlu0 %163
  %v182 = vunpack.c.l.b16 %v18
  %v183 = vunpack.c.h.b16 %v18
  %v184 = vunpack.c.l.b16 %v19
  %v185 = vunpack.c.h.b16 %v19
  %v186 = vunpack.c.l.b16 %v20
  %v187 = vunpack.c.h.b16 %v20
  %v188 = vunpack.c.l.b16 %v21
  %v189 = vunpack.c.l.b16 %v22
  %v190 = vunpack.c.h.b16 %v22
  %v191 = vunpack.c.l.b16 %v23
  %v192 = vunpack.c.h.b16 %v23
  %v193 = vunpack.c.l.b16 %v24
  %v194 = vunpack.c.h.b16 %v24
  %v195 = vunpack.c.l.b16 %v25
  %v196 = vunpack.c.l.b16 %v26
  %v197 = vunpack.c.h.b16 %v26
  %v198 = vunpack.c.l.b16 %v27
  %v199 = vunpack.c.h.b16 %v27
  %v200 = vunpack.c.l.b16 %v28
  %v201 = vunpack.c.h.b16 %v28
  %v202 = vunpack.c.l.b16 %v29
  %v203 = vunpack.c.l.b16 %v30
  %v204 = vunpack.c.h.b16 %v30
  %v205 = vunpack.c.l.b16 %v31
  %v206 = vunpack.c.h.b16 %v31
  %v207 = vunpack.c.l.b16 %v32
  %v208 = vunpack.c.h.b16 %v32
  %v209 = vunpack.c.l.b16 %v33
  %v210 = vpack.c.b16 %v189, %v182
  %v211 = vpack.c.b16 %v190, %v183
  %v212 = vpack.c.b16 %v191, %v184
  %v213 = vpack.c.b16 %v192, %v185
  %v214 = vpack.c.b16 %v193, %v186
  %v215 = vpack.c.b16 %v194, %v187
  %v216 = vpack.c.b16 %v195, %v188
  %v217 = vpack.c.b16 %v203, %v196
  %v218 = vpack.c.b16 %v204, %v197
  %v219 = vpack.c.b16 %v205, %v198
  %v220 = vpack.c.b16 %v206, %v199
  %v221 = vpack.c.b16 %v207, %v200
  %v222 = vpack.c.b16 %v208, %v201
  %v223 = vpack.c.b16 %v209, %v202
  %v344 = vunpack.c.l.b16 %v34
  %v345 = vunpack.c.l.b16 %v35
  %v346 = vunpack.c.l.b16 %v36
  %v347 = vunpack.c.l.b16 %v37
  %v348 = vunpack.c.l.b16 %v38
  %v349 = vunpack.c.l.b16 %v39
  %v350 = vunpack.c.l.b16 %v40
  %v351 = vunpack.c.l.b16 %v41
  %v352 = vunpack.c.l.b16 %v42
  %v353 = vunpack.c.l.b16 %v43
  %v354 = vunpack.c.l.b16 %v44
  %v355 = vunpack.c.l.b16 %v45
  %v356 = vunpack.c.l.b16 %v46
  %v357 = vunpack.c.l.b16 %v47
  %v358 = vunpack.c.l.b16 %v48
  %v359 = vunpack.c.l.b16 %v49
  %v360 = vunpack.c.l.b16 %v50
  %v361 = vunpack.c.l.b16 %v51
  %v362 = vunpack.c.l.b16 %v52
  %v363 = vunpack.c.l.b16 %v53
  %v364 = vunpack.c.l.b16 %v54
  %v365 = vunpack.c.l.b16 %v55
  %v366 = vunpack.c.l.b16 %v56
  %v367 = vunpack.c.l.b16 %v57
  %v368 = vunpack.c.l.b16 %v58
  %v369 = vunpack.c.l.b16 %v59
  %v370 = vunpack.c.l.b16 %v60
  %v371 = vunpack.c.l.b16 %v61
  %v372 = vunpack.c.l.b16 %v62
  %v373 = vunpack.c.l.b16 %v63
  %v374 = vunpack.c.l.b16 %v64
  %v375 = vunpack.c.l.b16 %v65
  %v376 = vunpack.c.l.b16 %v66
  %v377 = vunpack.c.l.b16 %v67
  %v378 = vunpack.c.l.b16 %v68
  %v379 = vunpack.c.l.b16 %v69
  %v380 = vunpack.c.l.b16 %v70
  %v381 = vunpack.c.l.b16 %v71
  %v382 = vunpack.c.l.b16 %v72
  %v383 = vunpack.c.l.b16 %v73
  %v384 = vunpack.c.l.b16 %v74
  %v385 = vunpack.c.l.b16 %v75
  %v386 = vunpack.c.l.b16 %v76
  %v387 = vunpack.c.l.b16 %v77
  %v388 = vunpack.c.l.b16 %v78
  %v389 = vunpack.c.l.b16 %v79
  %v390 = vunpack.c.l.b16 %v80
  %v391 = vunpack.c.l.b16 %v81
  %v392 = vunpack.c.l.b16 %v82
  %v393 = vunpack.c.l.b16 %v83
  %v394 = vunpack.c.l.b16 %v84
  %v395 = vunpack.c.l.b16 %v85
  %v396 = vunpack.c.l.b16 %v86
  %v397 = vunpack.c.l.b16 %v87
  %v398 = vunpack.c.l.b16 %v88
  %v399 = vunpack.c.l.b16 %v89
  %v400 = vunpack.c.l.b16 %v90
  %v401 = vunpack.c.l.b16 %v91
  %v402 = vunpack.c.l.b16 %v92
  %v403 = vunpack.c.l.b16 %v93
  %v404 = vunpack.c.l.b16 %v94
  %v405 = vunpack.c.l.b16 %v95
  %v406 = vunpack.c.l.b16 %v96
  %v407 = vunpack.c.l.b16 %v97
  %v408 = vunpack.c.l.b16 %v98
  %v409 = vunpack.c.l.b16 %v99
  %v410 = vunpack.c.l.b16 %v100
  %v411 = vunpack.c.l.b16 %v101
  %v412 = vunpack.c.l.b16 %v102
  %v413 = vunpack.c.l.b16 %v103
  %v414 = vunpack.c.l.b16 %v104
  %v415 = vunpack.c.l.b16 %v105
  %v416 = vunpack.c.l.b16 %v106
  %v417 = vunpack.c.l.b16 %v107
  %v418 = vunpack.c.l.b16 %v108
  %v419 = vunpack.c.l.b16 %v109
  %v420 = vunpack.c.l.b16 %v110
  %v421 = vunpack.c.l.b16 %v111
  %v422 = vunpack.c.l.b16 %v112
  %v423 = vunpack.c.l.b16 %v113
  %v424 = vunpack.c.l.b16 %v114
  %v425 = vunpack.c.l.b16 %v115
  %v426 = vunpack.c.l.b16 %v116
  %v427 = vunpack.c.l.b16 %v117
  %v428 = vunpack.c.l.b16 %v118
  %v429 = vunpack.c.l.b16 %v119
  %v430 = vunpack.c.l.b16 %v120
  %v431 = vunpack.c.l.b16 %v121
  %v432 = vunpack.c.l.b16 %v122
  %v433 = vunpack.c.l.b16 %v123
  %v434 = vunpack.c.l.b16 %v124
  %v435 = vunpack.c.l.b16 %v125
  %v436 = vunpack.c.l.b16 %v126
  %v437 = vunpack.c.l.b16 %v127
  %v438 = vunpack.c.l.b16 %v128
  %v439 = vunpack.c.l.b16 %v129
  %v440 = vunpack.c.l.b16 %v130
  %v441 = vunpack.c.l.b16 %v131
  %v442 = vunpack.c.l.b16 %v132
  %v443 = vunpack.c.l.b16 %v133
  %v444 = vunpack.c.l.b16 %v134
  %v445 = vunpack.c.l.b16 %v135
  %v446 = vunpack.c.l.b16 %v136
  %v447 = vunpack.c.l.b16 %v137
  %v448 = vunpack.c.l.b16 %v138
  %v449 = vunpack.c.l.b16 %v139
  %v450 = vunpack.c.l.b16 %v140
  %v451 = vunpack.c.l.b16 %v141
  %v452 = vpack.c.b16 %v345, %v344
  %v453 = vpack.c.b16 %v347, %v346
  %v454 = vpack.c.b16 %v349, %v348
  %v455 = vpack.c.b16 %v351, %v350
  %v456 = vpack.c.b16 %v353, %v352
  %v457 = vpack.c.b16 %v355, %v354
  %v458 = vpack.c.b16 %v357, %v356
  %v459 = vpack.c.b16 %v359, %v358
  %v460 = vpack.c.b16 %v361, %v360
  %v461 = vpack.c.b16 %v363, %v362
  %v462 = vpack.c.b16 %v365, %v364
  %v463 = vpack.c.b16 %v367, %v366
  %v464 = vpack.c.b16 %v369, %v368
  %v465 = vpack.c.b16 %v371, %v370
  %v466 = vpack.c.b16 %v373, %v372
  %v467 = vpack.c.b16 %v375, %v374
  %v468 = vpack.c.b16 %v377, %v376
  %v469 = vpack.c.b16 %v379, %v378
  %v470 = vpack.c.b16 %v381, %v380
  %v471 = vpack.c.b16 %v383, %v382
  %v472 = vpack.c.b16 %v385, %v384
  %v473 = vpack.c.b16 %v387, %v386
  %v474 = vpack.c.b16 %v389, %v388
  %v475 = vpack.c.b16 %v391, %v390
  %v476 = vpack.c.b16 %v393, %v392
  %v477 = vpack.c.b16 %v395, %v394
  %v478 = vpack.c.b16 %v397, %v396
  %v479 = vpack.c.b16 %v399, %v398
  %v480 = vpack.c.b16 %v401, %v400
  %v481 = vpack.c.b16 %v403, %v402
  %v482 = vpack.c.b16 %v405, %v404
  %v483 = vpack.c.b16 %v407, %v406
  %v484 = vpack.c.b16 %v409, %v408
  %v485 = vpack.c.b16 %v411, %v410
  %v486 = vpack.c.b16 %v413, %v412
  %v487 = vpack.c.b16 %v415, %v414
  %v488 = vpack.c.b16 %v417, %v416
  %v489 = vpack.c.b16 %v419, %v418
  %v490 = vpack.c.b16 %v421, %v420
  %v491 = vpack.c.b16 %v423, %v422
  %v492 = vpack.c.b16 %v425, %v424
  %v493 = vpack.c.b16 %v427, %v426
  %v494 = vpack.c.b16 %v429, %v428
  %v495 = vpack.c.b16 %v431, %v430
  %v496 = vpack.c.b16 %v433, %v432
  %v497 = vpack.c.b16 %v435, %v434
  %v498 = vpack.c.b16 %v437, %v436
  %v499 = vpack.c.b16 %v439, %v438
  %v500 = vpack.c.b16 %v441, %v440
  %v501 = vpack.c.b16 %v443, %v442
  %v502 = vpack.c.b16 %v445, %v444
  %v503 = vpack.c.b16 %v447, %v446
  %v504 = vpack.c.b16 %v449, %v448
  %v505 = vpack.c.b16 %v451, %v450
  %vm560 = vcmask 785408
  %v562 = vsel %vm560, %v216, 0
  %v565 = vsel %vm560, %v223, 0
  %567 = vmatpush.bf16.msra.mxu0 %v459
  %568 = vmatpush.bf16.msra.mxu0 %v458
  %569 = vmatpush.bf16.msra.mxu0 %v457
  %570 = vmatpush.bf16.msra.mxu0 %v456
  %571 = vmatpush.bf16.msra.mxu0 %v455
  %572 = vmatpush.bf16.msra.mxu0 %v454
  %573 = vmatpush.bf16.msra.mxu0 %v453
  %574 = vmatpush.bf16.msra.mxu0 %v452
  %575 = vmatmul.bf16.gmra.mxu0 %v210
  %v576 = vpop.f32.mrf.mxu0
  %v577 = vadd.f32 %v149, %v576
  %v578 = vpop.f32.mrf.mxu0
  %v579 = vadd.f32 %v154, %v578
  %580 = vmatmul.bf16.gmra.mxu0 %v217
  %v581 = vpop.f32.mrf.mxu0
  %v582 = vadd.f32 %v159, %v581
  %v583 = vpop.f32.mrf.mxu0
  %v584 = vadd.f32 %v164, %v583
  %585 = vdwg.mxu0
  %586 = vmatpush.bf16.msra.mxu0 %v467
  %587 = vmatpush.bf16.msra.mxu0 %v466
  %588 = vmatpush.bf16.msra.mxu0 %v465
  %589 = vmatpush.bf16.msra.mxu0 %v464
  %590 = vmatpush.bf16.msra.mxu0 %v463
  %591 = vmatpush.bf16.msra.mxu0 %v462
  %592 = vmatpush.bf16.msra.mxu0 %v461
  %593 = vmatpush.bf16.msra.mxu0 %v460
  %594 = vmatmul.bf16.gmra.mxu0 %v211
  %v595 = vpop.f32.mrf.mxu0
  %v596 = vadd.f32 %v577, %v595
  %v597 = vpop.f32.mrf.mxu0
  %v598 = vadd.f32 %v579, %v597
  %599 = vmatmul.bf16.gmra.mxu0 %v218
  %v600 = vpop.f32.mrf.mxu0
  %v601 = vadd.f32 %v582, %v600
  %v602 = vpop.f32.mrf.mxu0
  %v603 = vadd.f32 %v584, %v602
  %604 = vdwg.mxu0
  %605 = vmatpush.bf16.msra.mxu0 %v475
  %606 = vmatpush.bf16.msra.mxu0 %v474
  %607 = vmatpush.bf16.msra.mxu0 %v473
  %608 = vmatpush.bf16.msra.mxu0 %v472
  %609 = vmatpush.bf16.msra.mxu0 %v471
  %610 = vmatpush.bf16.msra.mxu0 %v470
  %611 = vmatpush.bf16.msra.mxu0 %v469
  %612 = vmatpush.bf16.msra.mxu0 %v468
  %613 = vmatmul.bf16.gmra.mxu0 %v212
  %v614 = vpop.f32.mrf.mxu0
  %v615 = vadd.f32 %v596, %v614
  %v616 = vpop.f32.mrf.mxu0
  %v617 = vadd.f32 %v598, %v616
  %618 = vmatmul.bf16.gmra.mxu0 %v219
  %v619 = vpop.f32.mrf.mxu0
  %v620 = vadd.f32 %v601, %v619
  %v621 = vpop.f32.mrf.mxu0
  %v622 = vadd.f32 %v603, %v621
  %623 = vdwg.mxu0
  %624 = vmatpush.bf16.msra.mxu0 %v483
  %625 = vmatpush.bf16.msra.mxu0 %v482
  %626 = vmatpush.bf16.msra.mxu0 %v481
  %627 = vmatpush.bf16.msra.mxu0 %v480
  %628 = vmatpush.bf16.msra.mxu0 %v479
  %629 = vmatpush.bf16.msra.mxu0 %v478
  %630 = vmatpush.bf16.msra.mxu0 %v477
  %631 = vmatpush.bf16.msra.mxu0 %v476
  %632 = vmatmul.bf16.gmra.mxu0 %v213
  %v633 = vpop.f32.mrf.mxu0
  %v634 = vadd.f32 %v615, %v633
  %v635 = vpop.f32.mrf.mxu0
  %v636 = vadd.f32 %v617, %v635
  %637 = vmatmul.bf16.gmra.mxu0 %v220
  %v638 = vpop.f32.mrf.mxu0
  %v639 = vadd.f32 %v620, %v638
  %v640 = vpop.f32.mrf.mxu0
  %v641 = vadd.f32 %v622, %v640
  %642 = vdwg.mxu0
  %643 = vmatpush.bf16.msra.mxu0 %v491
  %644 = vmatpush.bf16.msra.mxu0 %v490
  %645 = vmatpush.bf16.msra.mxu0 %v489
  %646 = vmatpush.bf16.msra.mxu0 %v488
  %647 = vmatpush.bf16.msra.mxu0 %v487
  %648 = vmatpush.bf16.msra.mxu0 %v486
  %649 = vmatpush.bf16.msra.mxu0 %v485
  %650 = vmatpush.bf16.msra.mxu0 %v484
  %651 = vmatmul.bf16.gmra.mxu0 %v214
  %v652 = vpop.f32.mrf.mxu0
  %v653 = vadd.f32 %v634, %v652
  %v654 = vpop.f32.mrf.mxu0
  %v655 = vadd.f32 %v636, %v654
  %656 = vmatmul.bf16.gmra.mxu0 %v221
  %v657 = vpop.f32.mrf.mxu0
  %v658 = vadd.f32 %v639, %v657
  %v659 = vpop.f32.mrf.mxu0
  %v660 = vadd.f32 %v641, %v659
  %661 = vdwg.mxu0
  %662 = vmatpush.bf16.msra.mxu0 %v499
  %663 = vmatpush.bf16.msra.mxu0 %v498
  %664 = vmatpush.bf16.msra.mxu0 %v497
  %665 = vmatpush.bf16.msra.mxu0 %v496
  %666 = vmatpush.bf16.msra.mxu0 %v495
  %667 = vmatpush.bf16.msra.mxu0 %v494
  %668 = vmatpush.bf16.msra.mxu0 %v493
  %669 = vmatpush.bf16.msra.mxu0 %v492
  %670 = vmatmul.bf16.gmra.mxu0 %v215
  %v671 = vpop.f32.mrf.mxu0
  %v672 = vadd.f32 %v653, %v671
  %v673 = vpop.f32.mrf.mxu0
  %v674 = vadd.f32 %v655, %v673
  %675 = vmatmul.bf16.gmra.mxu0 %v222
  %v676 = vpop.f32.mrf.mxu0
  %v677 = vadd.f32 %v658, %v676
  %v678 = vpop.f32.mrf.mxu0
  %v679 = vadd.f32 %v660, %v678
  %680 = vdwg.mxu0
  %681 = vmatpush.bf16.msra.mxu0 0
  %682 = vmatpush.bf16.msra.mxu0 0
  %683 = vmatpush.bf16.msra.mxu0 %v505
  %684 = vmatpush.bf16.msra.mxu0 %v504
  %685 = vmatpush.bf16.msra.mxu0 %v503
  %686 = vmatpush.bf16.msra.mxu0 %v502
  %687 = vmatpush.bf16.msra.mxu0 %v501
  %688 = vmatpush.bf16.msra.mxu0 %v500
  %689 = vmatmul.bf16.gmra.mxu0 %v562
  %v690 = vpop.f32.mrf.mxu0
  %v691 = vadd.f32 %v672, %v690
  %v692 = vpop.f32.mrf.mxu0
  %v693 = vadd.f32 %v674, %v692
  %694 = vmatmul.bf16.gmra.mxu0 %v565
  %v695 = vpop.f32.mrf.mxu0
  %v696 = vadd.f32 %v677, %v695
  %v697 = vpop.f32.mrf.mxu0
  %v698 = vadd.f32 %v679, %v697
  %699 = vdwg.mxu0
  %v700 = vld [vmem:[%s3] sm:$0xff]
  %v701 = vld [vmem:[%s3 + $0x8] sm:$0xff]
  %v702 = vld [vmem:[%s3 + $0x10] sm:$0xff]
  %v703 = vld [vmem:[%s3 + $0x18] sm:$0xff]
  %v704 = vadd.f32 %v691, %v700
  %v705 = vadd.f32 %v693, %v701
  %v706 = vadd.f32 %v696, %v702
  %v707 = vadd.f32 %v698, %v703
  %v708 = vmax.f32 %v704, 0.0
  %v709 = vmax.f32 %v705, 0.0
  %v710 = vmax.f32 %v706, 0.0
  %v711 = vmax.f32 %v707, 0.0
  %vm712 = vcmask 15360
  %713 = vst.msk [vmem:[%s4] sm:$0xff] %vm712, %v708
  %714 = vst.msk [vmem:[%s4 + $0x8] sm:$0xff] %vm712, %v709
  %715 = vst.msk [vmem:[%s4 + $0x10] sm:$0xff] %vm712, %v710
  %716 = vst.msk [vmem:[%s4 + $0x18] sm:$0xff] %vm712, %v711
  // Predicated region
  $region18: #{_lambda_.22} parent=0 // pred_check
    _
  $region19: #{_lambda_.22} parent=0 // pred_check_branch
    %718 = sbr.rel (0) target = $region21
  $region20: #{_lambda_.22} parent=0 // pred_region
    _
  $region21: #{_lambda_.22} parent=0 // pred_fallthru
    _
  // Predicated region
  $region22: #{_lambda_.22} parent=0 // pred_check
    _
  $region23: #{_lambda_.22} parent=0 // pred_check_branch
    %720 = sbr.rel (0) target = $region25
  $region24: #{_lambda_.22} parent=0 // pred_region
    _
  $region25: #{_lambda_.22} parent=0 // pred_fallthru
    _

// kernel: _lambda_.23
$region0: #{_lambda_.23}
  #allocation0 [shape = 'u32[]', space=smem, size = 0x4, offset = 0x4, fixed_abs, tag = 'smem constant byte address 0x4 - core index']
  #allocation1 [shape = 'u32[72,128]{1,0:T(1,128)}', space=vmem, size = 0x9000, scoped, tag = 'internal scratch']
  %s0 = inlined_call_operand.vmem [shape: bf16[64,864], index: 0, kind: input, shape index: {}]
  %s1 = inlined_call_operand.vmem [shape: bf16[864,2], index: 1, kind: input, shape index: {}]
  %s2 = inlined_call_operand.vmem [shape: f32[64,1], index: 2, kind: input, shape index: {}]
  %s3 = inlined_call_operand.vmem [shape: f32[64,2], index: 3, kind: output, shape index: {}]
  %s4 = sld [smem:[#allocation0]]
  $region22: #{_lambda_.23} parent=0
    _
  %s6 = ssub.s32 1, %s4
  %s7 = scalar_select 0, %s6, %s4
  // Predicated region
  $region2: #{_lambda_.23} parent=0 // pred_check
    _
  $region3: #{_lambda_.23} parent=0 // pred_check_branch
    %9 = sbr.rel (0) target = $region5
  $region4: #{_lambda_.23} parent=0 // pred_region
    _
  $region5: #{_lambda_.23} parent=0 // pred_fallthru
    _
  // Predicated region
  $region6: #{_lambda_.23} parent=0 // pred_check
    _
  $region7: #{_lambda_.23} parent=0 // pred_check_branch
    %11 = sbr.rel (0) target = $region9
  $region8: #{_lambda_.23} parent=0 // pred_region
    _
  $region9: #{_lambda_.23} parent=0 // pred_fallthru
    _
  // Predicated region
  $region10: #{_lambda_.23} parent=0 // pred_check
    _
  $region11: #{_lambda_.23} parent=0 // pred_check_branch
    %13 = sbr.rel (0) target = $region13
  $region12: #{_lambda_.23} parent=0 // pred_region
    _
  $region13: #{_lambda_.23} parent=0 // pred_fallthru
    _
  %v15 = vld [vmem:[%s0] sm:$0xff]
  %v16 = vld [vmem:[%s0 + $0x8] sm:$0xff]
  %v17 = vld [vmem:[%s0 + $0x10] sm:$0xff]
  %v18 = vld [vmem:[%s0 + $0x18] sm:$0xf]
  %v19 = vld [vmem:[%s0 + $0x1c] sm:$0xff]
  %v20 = vld [vmem:[%s0 + $0x24] sm:$0xff]
  %v21 = vld [vmem:[%s0 + $0x2c] sm:$0xff]
  %v22 = vld [vmem:[%s0 + $0x34] sm:$0xf]
  %v23 = vld [vmem:[%s0 + $0x38] sm:$0xff]
  %v24 = vld [vmem:[%s0 + $0x40] sm:$0xff]
  %v25 = vld [vmem:[%s0 + $0x48] sm:$0xff]
  %v26 = vld [vmem:[%s0 + $0x50] sm:$0xf]
  %v27 = vld [vmem:[%s0 + $0x54] sm:$0xff]
  %v28 = vld [vmem:[%s0 + $0x5c] sm:$0xff]
  %v29 = vld [vmem:[%s0 + $0x64] sm:$0xff]
  %v30 = vld [vmem:[%s0 + $0x6c] sm:$0xf]
  %v31 = vld [vmem:[%s0 + $0x70] sm:$0xff]
  %v32 = vld [vmem:[%s0 + $0x78] sm:$0xff]
  %v33 = vld [vmem:[%s0 + $0x80] sm:$0xff]
  %v34 = vld [vmem:[%s0 + $0x88] sm:$0xf]
  %v35 = vld [vmem:[%s0 + $0x8c] sm:$0xff]
  %v36 = vld [vmem:[%s0 + $0x94] sm:$0xff]
  %v37 = vld [vmem:[%s0 + $0x9c] sm:$0xff]
  %v38 = vld [vmem:[%s0 + $0xa4] sm:$0xf]
  %v39 = vld [vmem:[%s0 + $0xa8] sm:$0xff]
  %v40 = vld [vmem:[%s0 + $0xb0] sm:$0xff]
  %v41 = vld [vmem:[%s0 + $0xb8] sm:$0xff]
  %v42 = vld [vmem:[%s0 + $0xc0] sm:$0xf]
  %v43 = vld [vmem:[%s0 + $0xc4] sm:$0xff]
  %v44 = vld [vmem:[%s0 + $0xcc] sm:$0xff]
  %v45 = vld [vmem:[%s0 + $0xd4] sm:$0xff]
  %v46 = vld [vmem:[%s0 + $0xdc] sm:$0xf]
  %v47 = vld [vmem:[%s1] sm:$0xf]
  %v48 = vld [vmem:[%s1 + $0x4] sm:$0xf]
  %v49 = vld [vmem:[%s1 + $0x8] sm:$0xf]
  %v50 = vld [vmem:[%s1 + $0xc] sm:$0xf]
  %v51 = vld [vmem:[%s1 + $0x10] sm:$0xf]
  %v52 = vld [vmem:[%s1 + $0x14] sm:$0xf]
  %v53 = vld [vmem:[%s1 + $0x18] sm:$0xf]
  %v54 = vld [vmem:[%s1 + $0x1c] sm:$0xf]
  %v55 = vld [vmem:[%s1 + $0x20] sm:$0xf]
  %v56 = vld [vmem:[%s1 + $0x24] sm:$0xf]
  %v57 = vld [vmem:[%s1 + $0x28] sm:$0xf]
  %v58 = vld [vmem:[%s1 + $0x2c] sm:$0xf]
  %v59 = vld [vmem:[%s1 + $0x30] sm:$0xf]
  %v60 = vld [vmem:[%s1 + $0x34] sm:$0xf]
  %v61 = vld [vmem:[%s1 + $0x38] sm:$0xf]
  %v62 = vld [vmem:[%s1 + $0x3c] sm:$0xf]
  %v63 = vld [vmem:[%s1 + $0x40] sm:$0xf]
  %v64 = vld [vmem:[%s1 + $0x44] sm:$0xf]
  %v65 = vld [vmem:[%s1 + $0x48] sm:$0xf]
  %v66 = vld [vmem:[%s1 + $0x4c] sm:$0xf]
  %v67 = vld [vmem:[%s1 + $0x50] sm:$0xf]
  %v68 = vld [vmem:[%s1 + $0x54] sm:$0xf]
  %v69 = vld [vmem:[%s1 + $0x58] sm:$0xf]
  %v70 = vld [vmem:[%s1 + $0x5c] sm:$0xf]
  %v71 = vld [vmem:[%s1 + $0x60] sm:$0xf]
  %v72 = vld [vmem:[%s1 + $0x64] sm:$0xf]
  %v73 = vld [vmem:[%s1 + $0x68] sm:$0xf]
  %v74 = vld [vmem:[%s1 + $0x6c] sm:$0xf]
  %v75 = vld [vmem:[%s1 + $0x70] sm:$0xf]
  %v76 = vld [vmem:[%s1 + $0x74] sm:$0xf]
  %v77 = vld [vmem:[%s1 + $0x78] sm:$0xf]
  %v78 = vld [vmem:[%s1 + $0x7c] sm:$0xf]
  %v79 = vld [vmem:[%s1 + $0x80] sm:$0xf]
  %v80 = vld [vmem:[%s1 + $0x84] sm:$0xf]
  %v81 = vld [vmem:[%s1 + $0x88] sm:$0xf]
  %v82 = vld [vmem:[%s1 + $0x8c] sm:$0xf]
  %v83 = vld [vmem:[%s1 + $0x90] sm:$0xf]
  %v84 = vld [vmem:[%s1 + $0x94] sm:$0xf]
  %v85 = vld [vmem:[%s1 + $0x98] sm:$0xf]
  %v86 = vld [vmem:[%s1 + $0x9c] sm:$0xf]
  %v87 = vld [vmem:[%s1 + $0xa0] sm:$0xf]
  %v88 = vld [vmem:[%s1 + $0xa4] sm:$0xf]
  %v89 = vld [vmem:[%s1 + $0xa8] sm:$0xf]
  %v90 = vld [vmem:[%s1 + $0xac] sm:$0xf]
  %v91 = vld [vmem:[%s1 + $0xb0] sm:$0xf]
  %v92 = vld [vmem:[%s1 + $0xb4] sm:$0xf]
  %v93 = vld [vmem:[%s1 + $0xb8] sm:$0xf]
  %v94 = vld [vmem:[%s1 + $0xbc] sm:$0xf]
  %v95 = vld [vmem:[%s1 + $0xc0] sm:$0xf]
  %v96 = vld [vmem:[%s1 + $0xc4] sm:$0xf]
  %v97 = vld [vmem:[%s1 + $0xc8] sm:$0xf]
  %v98 = vld [vmem:[%s1 + $0xcc] sm:$0xf]
  %v99 = vld [vmem:[%s1 + $0xd0] sm:$0xf]
  %v100 = vld [vmem:[%s1 + $0xd4] sm:$0xf]
  %v101 = vld [vmem:[%s1 + $0xd8] sm:$0xf]
  %v102 = vld [vmem:[%s1 + $0xdc] sm:$0xf]
  %v103 = vld [vmem:[%s1 + $0xe0] sm:$0xf]
  %v104 = vld [vmem:[%s1 + $0xe4] sm:$0xf]
  %v105 = vld [vmem:[%s1 + $0xe8] sm:$0xf]
  %v106 = vld [vmem:[%s1 + $0xec] sm:$0xf]
  %v107 = vld [vmem:[%s1 + $0xf0] sm:$0xf]
  %v108 = vld [vmem:[%s1 + $0xf4] sm:$0xf]
  %v109 = vld [vmem:[%s1 + $0xf8] sm:$0xf]
  %v110 = vld [vmem:[%s1 + $0xfc] sm:$0xf]
  %v111 = vld [vmem:[%s1 + $0x100] sm:$0xf]
  %v112 = vld [vmem:[%s1 + $0x104] sm:$0xf]
  %v113 = vld [vmem:[%s1 + $0x108] sm:$0xf]
  %v114 = vld [vmem:[%s1 + $0x10c] sm:$0xf]
  %v115 = vld [vmem:[%s1 + $0x110] sm:$0xf]
  %v116 = vld [vmem:[%s1 + $0x114] sm:$0xf]
  %v117 = vld [vmem:[%s1 + $0x118] sm:$0xf]
  %v118 = vld [vmem:[%s1 + $0x11c] sm:$0xf]
  %v119 = vld [vmem:[%s1 + $0x120] sm:$0xf]
  %v120 = vld [vmem:[%s1 + $0x124] sm:$0xf]
  %v121 = vld [vmem:[%s1 + $0x128] sm:$0xf]
  %v122 = vld [vmem:[%s1 + $0x12c] sm:$0xf]
  %v123 = vld [vmem:[%s1 + $0x130] sm:$0xf]
  %v124 = vld [vmem:[%s1 + $0x134] sm:$0xf]
  %v125 = vld [vmem:[%s1 + $0x138] sm:$0xf]
  %v126 = vld [vmem:[%s1 + $0x13c] sm:$0xf]
  %v127 = vld [vmem:[%s1 + $0x140] sm:$0xf]
  %v128 = vld [vmem:[%s1 + $0x144] sm:$0xf]
  %v129 = vld [vmem:[%s1 + $0x148] sm:$0xf]
  %v130 = vld [vmem:[%s1 + $0x14c] sm:$0xf]
  %v131 = vld [vmem:[%s1 + $0x150] sm:$0xf]
  %v132 = vld [vmem:[%s1 + $0x154] sm:$0xf]
  %v133 = vld [vmem:[%s1 + $0x158] sm:$0xf]
  %v134 = vld [vmem:[%s1 + $0x15c] sm:$0xf]
  %v135 = vld [vmem:[%s1 + $0x160] sm:$0xf]
  %v136 = vld [vmem:[%s1 + $0x164] sm:$0xf]
  %v137 = vld [vmem:[%s1 + $0x168] sm:$0xf]
  %v138 = vld [vmem:[%s1 + $0x16c] sm:$0xf]
  %v139 = vld [vmem:[%s1 + $0x170] sm:$0xf]
  %v140 = vld [vmem:[%s1 + $0x174] sm:$0xf]
  %v141 = vld [vmem:[%s1 + $0x178] sm:$0xf]
  %v142 = vld [vmem:[%s1 + $0x17c] sm:$0xf]
  %v143 = vld [vmem:[%s1 + $0x180] sm:$0xf]
  %v144 = vld [vmem:[%s1 + $0x184] sm:$0xf]
  %v145 = vld [vmem:[%s1 + $0x188] sm:$0xf]
  %v146 = vld [vmem:[%s1 + $0x18c] sm:$0xf]
  %v147 = vld [vmem:[%s1 + $0x190] sm:$0xf]
  %v148 = vld [vmem:[%s1 + $0x194] sm:$0xf]
  %v149 = vld [vmem:[%s1 + $0x198] sm:$0xf]
  %v150 = vld [vmem:[%s1 + $0x19c] sm:$0xf]
  %v151 = vld [vmem:[%s1 + $0x1a0] sm:$0xf]
  %v152 = vld [vmem:[%s1 + $0x1a4] sm:$0xf]
  %v153 = vld [vmem:[%s1 + $0x1a8] sm:$0xf]
  %v154 = vld [vmem:[%s1 + $0x1ac] sm:$0xf]
  %v155 = vld [vmem:[%s2] sm:$0xff]
  %v156 = vld [vmem:[%s2 + $0x8] sm:$0xff]
  %v157 = vld [vmem:[%s2 + $0x10] sm:$0xff]
  %v158 = vld [vmem:[%s2 + $0x18] sm:$0xff]
  %v159 = vld [vmem:[%s2 + $0x20] sm:$0xff]
  %v160 = vld [vmem:[%s2 + $0x28] sm:$0xff]
  %v161 = vld [vmem:[%s2 + $0x30] sm:$0xff]
  %v162 = vld [vmem:[%s2 + $0x38] sm:$0xff]
  %164 = vset.pattern.permute.xlu0 0
  %165 = vperm.xlu0 %164, %v155
  %v166 = vpop.permute.xlu0 %165
  %169 = vset.pattern.permute.xlu0 0
  %170 = vperm.xlu0 %169, %v156
  %v171 = vpop.permute.xlu0 %170
  %174 = vset.pattern.permute.xlu0 0
  %175 = vperm.xlu0 %174, %v157
  %v176 = vpop.permute.xlu0 %175
  %179 = vset.pattern.permute.xlu0 0
  %180 = vperm.xlu0 %179, %v158
  %v181 = vpop.permute.xlu0 %180
  %184 = vset.pattern.permute.xlu0 0
  %185 = vperm.xlu0 %184, %v159
  %v186 = vpop.permute.xlu0 %185
  %189 = vset.pattern.permute.xlu0 0
  %190 = vperm.xlu0 %189, %v160
  %v191 = vpop.permute.xlu0 %190
  %194 = vset.pattern.permute.xlu0 0
  %195 = vperm.xlu0 %194, %v161
  %v196 = vpop.permute.xlu0 %195
  %199 = vset.pattern.permute.xlu0 0
  %200 = vperm.xlu0 %199, %v162
  %v201 = vpop.permute.xlu0 %200
  %v235 = vunpack.c.l.b16 %v15
  %v236 = vunpack.c.h.b16 %v15
  %v237 = vunpack.c.l.b16 %v16
  %v238 = vunpack.c.h.b16 %v16
  %v239 = vunpack.c.l.b16 %v17
  %v240 = vunpack.c.h.b16 %v17
  %v241 = vunpack.c.l.b16 %v18
  %v242 = vunpack.c.l.b16 %v19
  %v243 = vunpack.c.h.b16 %v19
  %v244 = vunpack.c.l.b16 %v20
  %v245 = vunpack.c.h.b16 %v20
  %v246 = vunpack.c.l.b16 %v21
  %v247 = vunpack.c.h.b16 %v21
  %v248 = vunpack.c.l.b16 %v22
  %v249 = vunpack.c.l.b16 %v23
  %v250 = vunpack.c.h.b16 %v23
  %v251 = vunpack.c.l.b16 %v24
  %v252 = vunpack.c.h.b16 %v24
  %v253 = vunpack.c.l.b16 %v25
  %v254 = vunpack.c.h.b16 %v25
  %v255 = vunpack.c.l.b16 %v26
  %v256 = vunpack.c.l.b16 %v27
  %v257 = vunpack.c.h.b16 %v27
  %v258 = vunpack.c.l.b16 %v28
  %v259 = vunpack.c.h.b16 %v28
  %v260 = vunpack.c.l.b16 %v29
  %v261 = vunpack.c.h.b16 %v29
  %v262 = vunpack.c.l.b16 %v30
  %v263 = vunpack.c.l.b16 %v31
  %v264 = vunpack.c.h.b16 %v31
  %v265 = vunpack.c.l.b16 %v32
  %v266 = vunpack.c.h.b16 %v32
  %v267 = vunpack.c.l.b16 %v33
  %v268 = vunpack.c.h.b16 %v33
  %v269 = vunpack.c.l.b16 %v34
  %v270 = vunpack.c.l.b16 %v35
  %v271 = vunpack.c.h.b16 %v35
  %v272 = vunpack.c.l.b16 %v36
  %v273 = vunpack.c.h.b16 %v36
  %v274 = vunpack.c.l.b16 %v37
  %v275 = vunpack.c.h.b16 %v37
  %v276 = vunpack.c.l.b16 %v38
  %v277 = vunpack.c.l.b16 %v39
  %v278 = vunpack.c.h.b16 %v39
  %v279 = vunpack.c.l.b16 %v40
  %v280 = vunpack.c.h.b16 %v40
  %v281 = vunpack.c.l.b16 %v41
  %v282 = vunpack.c.h.b16 %v41
  %v283 = vunpack.c.l.b16 %v42
  %v284 = vunpack.c.l.b16 %v43
  %v285 = vunpack.c.h.b16 %v43
  %v286 = vunpack.c.l.b16 %v44
  %v287 = vunpack.c.h.b16 %v44
  %v288 = vunpack.c.l.b16 %v45
  %v289 = vunpack.c.h.b16 %v45
  %v290 = vunpack.c.l.b16 %v46
  %v291 = vpack.c.b16 %v242, %v235
  %v292 = vpack.c.b16 %v243, %v236
  %v293 = vpack.c.b16 %v244, %v237
  %v294 = vpack.c.b16 %v245, %v238
  %v295 = vpack.c.b16 %v246, %v239
  %v296 = vpack.c.b16 %v247, %v240
  %v297 = vpack.c.b16 %v248, %v241
  %v298 = vpack.c.b16 %v256, %v249
  %v299 = vpack.c.b16 %v257, %v250
  %v300 = vpack.c.b16 %v258, %v251
  %v301 = vpack.c.b16 %v259, %v252
  %v302 = vpack.c.b16 %v260, %v253
  %v303 = vpack.c.b16 %v261, %v254
  %v304 = vpack.c.b16 %v262, %v255
  %v305 = vpack.c.b16 %v270, %v263
  %v306 = vpack.c.b16 %v271, %v264
  %v307 = vpack.c.b16 %v272, %v265
  %v308 = vpack.c.b16 %v273, %v266
  %v309 = vpack.c.b16 %v274, %v267
  %v310 = vpack.c.b16 %v275, %v268
  %v311 = vpack.c.b16 %v276, %v269
  %v312 = vpack.c.b16 %v284, %v277
  %v313 = vpack.c.b16 %v285, %v278
  %v314 = vpack.c.b16 %v286, %v279
  %v315 = vpack.c.b16 %v287, %v280
  %v316 = vpack.c.b16 %v288, %v281
  %v317 = vpack.c.b16 %v289, %v282
  %v318 = vpack.c.b16 %v290, %v283
  %v451 = vunpack.c.l.b16 %v47
  %v452 = vunpack.c.l.b16 %v48
  %v453 = vunpack.c.l.b16 %v49
  %v454 = vunpack.c.l.b16 %v50
  %v455 = vunpack.c.l.b16 %v51
  %v456 = vunpack.c.l.b16 %v52
  %v457 = vunpack.c.l.b16 %v53
  %v458 = vunpack.c.l.b16 %v54
  %v459 = vunpack.c.l.b16 %v55
  %v460 = vunpack.c.l.b16 %v56
  %v461 = vunpack.c.l.b16 %v57
  %v462 = vunpack.c.l.b16 %v58
  %v463 = vunpack.c.l.b16 %v59
  %v464 = vunpack.c.l.b16 %v60
  %v465 = vunpack.c.l.b16 %v61
  %v466 = vunpack.c.l.b16 %v62
  %v467 = vunpack.c.l.b16 %v63
  %v468 = vunpack.c.l.b16 %v64
  %v469 = vunpack.c.l.b16 %v65
  %v470 = vunpack.c.l.b16 %v66
  %v471 = vunpack.c.l.b16 %v67
  %v472 = vunpack.c.l.b16 %v68
  %v473 = vunpack.c.l.b16 %v69
  %v474 = vunpack.c.l.b16 %v70
  %v475 = vunpack.c.l.b16 %v71
  %v476 = vunpack.c.l.b16 %v72
  %v477 = vunpack.c.l.b16 %v73
  %v478 = vunpack.c.l.b16 %v74
  %v479 = vunpack.c.l.b16 %v75
  %v480 = vunpack.c.l.b16 %v76
  %v481 = vunpack.c.l.b16 %v77
  %v482 = vunpack.c.l.b16 %v78
  %v483 = vunpack.c.l.b16 %v79
  %v484 = vunpack.c.l.b16 %v80
  %v485 = vunpack.c.l.b16 %v81
  %v486 = vunpack.c.l.b16 %v82
  %v487 = vunpack.c.l.b16 %v83
  %v488 = vunpack.c.l.b16 %v84
  %v489 = vunpack.c.l.b16 %v85
  %v490 = vunpack.c.l.b16 %v86
  %v491 = vunpack.c.l.b16 %v87
  %v492 = vunpack.c.l.b16 %v88
  %v493 = vunpack.c.l.b16 %v89
  %v494 = vunpack.c.l.b16 %v90
  %v495 = vunpack.c.l.b16 %v91
  %v496 = vunpack.c.l.b16 %v92
  %v497 = vunpack.c.l.b16 %v93
  %v498 = vunpack.c.l.b16 %v94
  %v499 = vunpack.c.l.b16 %v95
  %v500 = vunpack.c.l.b16 %v96
  %v501 = vunpack.c.l.b16 %v97
  %v502 = vunpack.c.l.b16 %v98
  %v503 = vunpack.c.l.b16 %v99
  %v504 = vunpack.c.l.b16 %v100
  %v505 = vunpack.c.l.b16 %v101
  %v506 = vunpack.c.l.b16 %v102
  %v507 = vunpack.c.l.b16 %v103
  %v508 = vunpack.c.l.b16 %v104
  %v509 = vunpack.c.l.b16 %v105
  %v510 = vunpack.c.l.b16 %v106
  %v511 = vunpack.c.l.b16 %v107
  %v512 = vunpack.c.l.b16 %v108
  %v513 = vunpack.c.l.b16 %v109
  %v514 = vunpack.c.l.b16 %v110
  %v515 = vunpack.c.l.b16 %v111
  %v516 = vunpack.c.l.b16 %v112
  %v517 = vunpack.c.l.b16 %v113
  %v518 = vunpack.c.l.b16 %v114
  %v519 = vunpack.c.l.b16 %v115
  %v520 = vunpack.c.l.b16 %v116
  %v521 = vunpack.c.l.b16 %v117
  %v522 = vunpack.c.l.b16 %v118
  %v523 = vunpack.c.l.b16 %v119
  %v524 = vunpack.c.l.b16 %v120
  %v525 = vunpack.c.l.b16 %v121
  %v526 = vunpack.c.l.b16 %v122
  %v527 = vunpack.c.l.b16 %v123
  %v528 = vunpack.c.l.b16 %v124
  %v529 = vunpack.c.l.b16 %v125
  %v530 = vunpack.c.l.b16 %v126
  %v531 = vunpack.c.l.b16 %v127
  %v532 = vunpack.c.l.b16 %v128
  %v533 = vunpack.c.l.b16 %v129
  %v534 = vunpack.c.l.b16 %v130
  %v535 = vunpack.c.l.b16 %v131
  %v536 = vunpack.c.l.b16 %v132
  %v537 = vunpack.c.l.b16 %v133
  %v538 = vunpack.c.l.b16 %v134
  %v539 = vunpack.c.l.b16 %v135
  %v540 = vunpack.c.l.b16 %v136
  %v541 = vunpack.c.l.b16 %v137
  %v542 = vunpack.c.l.b16 %v138
  %v543 = vunpack.c.l.b16 %v139
  %v544 = vunpack.c.l.b16 %v140
  %v545 = vunpack.c.l.b16 %v141
  %v546 = vunpack.c.l.b16 %v142
  %v547 = vunpack.c.l.b16 %v143
  %v548 = vunpack.c.l.b16 %v144
  %v549 = vunpack.c.l.b16 %v145
  %v550 = vunpack.c.l.b16 %v146
  %v551 = vunpack.c.l.b16 %v147
  %v552 = vunpack.c.l.b16 %v148
  %v553 = vunpack.c.l.b16 %v149
  %v554 = vunpack.c.l.b16 %v150
  %v555 = vunpack.c.l.b16 %v151
  %v556 = vunpack.c.l.b16 %v152
  %v557 = vunpack.c.l.b16 %v153
  %v558 = vunpack.c.l.b16 %v154
  %v559 = vpack.c.b16 %v452, %v451
  %v560 = vpack.c.b16 %v454, %v453
  %v561 = vpack.c.b16 %v456, %v455
  %v562 = vpack.c.b16 %v458, %v457
  %v563 = vpack.c.b16 %v460, %v459
  %v564 = vpack.c.b16 %v462, %v461
  %v565 = vpack.c.b16 %v464, %v463
  %v566 = vpack.c.b16 %v466, %v465
  %v567 = vpack.c.b16 %v468, %v467
  %v568 = vpack.c.b16 %v470, %v469
  %v569 = vpack.c.b16 %v472, %v471
  %v570 = vpack.c.b16 %v474, %v473
  %v571 = vpack.c.b16 %v476, %v475
  %v572 = vpack.c.b16 %v478, %v477
  %v573 = vpack.c.b16 %v480, %v479
  %v574 = vpack.c.b16 %v482, %v481
  %v575 = vpack.c.b16 %v484, %v483
  %v576 = vpack.c.b16 %v486, %v485
  %v577 = vpack.c.b16 %v488, %v487
  %v578 = vpack.c.b16 %v490, %v489
  %v579 = vpack.c.b16 %v492, %v491
  %v580 = vpack.c.b16 %v494, %v493
  %v581 = vpack.c.b16 %v496, %v495
  %v582 = vpack.c.b16 %v498, %v497
  %v583 = vpack.c.b16 %v500, %v499
  %v584 = vpack.c.b16 %v502, %v501
  %v585 = vpack.c.b16 %v504, %v503
  %v586 = vpack.c.b16 %v506, %v505
  %v587 = vpack.c.b16 %v508, %v507
  %v588 = vpack.c.b16 %v510, %v509
  %v589 = vpack.c.b16 %v512, %v511
  %v590 = vpack.c.b16 %v514, %v513
  %v591 = vpack.c.b16 %v516, %v515
  %v592 = vpack.c.b16 %v518, %v517
  %v593 = vpack.c.b16 %v520, %v519
  %v594 = vpack.c.b16 %v522, %v521
  %v595 = vpack.c.b16 %v524, %v523
  %v596 = vpack.c.b16 %v526, %v525
  %v597 = vpack.c.b16 %v528, %v527
  %v598 = vpack.c.b16 %v530, %v529
  %v599 = vpack.c.b16 %v532, %v531
  %v600 = vpack.c.b16 %v534, %v533
  %v601 = vpack.c.b16 %v536, %v535
  %v602 = vpack.c.b16 %v538, %v537
  %v603 = vpack.c.b16 %v540, %v539
  %v604 = vpack.c.b16 %v542, %v541
  %v605 = vpack.c.b16 %v544, %v543
  %v606 = vpack.c.b16 %v546, %v545
  %v607 = vpack.c.b16 %v548, %v547
  %v608 = vpack.c.b16 %v550, %v549
  %v609 = vpack.c.b16 %v552, %v551
  %v610 = vpack.c.b16 %v554, %v553
  %v611 = vpack.c.b16 %v556, %v555
  %v612 = vpack.c.b16 %v558, %v557
  %vm667 = vcmask 785408
  %v669 = vsel %vm667, %v297, 0
  %v672 = vsel %vm667, %v304, 0
  %v675 = vsel %vm667, %v311, 0
  %v678 = vsel %vm667, %v318, 0
  %680 = vmatpush.bf16.msra.mxu0 %v566
  %681 = vmatpush.bf16.msra.mxu0 %v565
  %682 = vmatpush.bf16.msra.mxu0 %v564
  %683 = vmatpush.bf16.msra.mxu0 %v563
  %684 = vmatpush.bf16.msra.mxu0 %v562
  %685 = vmatpush.bf16.msra.mxu0 %v561
  %686 = vmatpush.bf16.msra.mxu0 %v560
  %687 = vmatpush.bf16.msra.mxu0 %v559
  %688 = vmatmul.bf16.gmra.mxu0 %v291
  %v689 = vpop.f32.mrf.mxu0
  %v690 = vadd.f32 %v166, %v689
  %v691 = vpop.f32.mrf.mxu0
  %v692 = vadd.f32 %v171, %v691
  %693 = vmatmul.bf16.gmra.mxu0 %v298
  %v694 = vpop.f32.mrf.mxu0
  %v695 = vadd.f32 %v176, %v694
  %v696 = vpop.f32.mrf.mxu0
  %v697 = vadd.f32 %v181, %v696
  %698 = vmatmul.bf16.gmra.mxu0 %v305
  %v699 = vpop.f32.mrf.mxu0
  %v700 = vadd.f32 %v186, %v699
  %v701 = vpop.f32.mrf.mxu0
  %v702 = vadd.f32 %v191, %v701
  %703 = vmatmul.bf16.gmra.mxu0 %v312
  %v704 = vpop.f32.mrf.mxu0
  %v705 = vadd.f32 %v196, %v704
  %v706 = vpop.f32.mrf.mxu0
  %v707 = vadd.f32 %v201, %v706
  %708 = vdwg.mxu0
  %709 = vmatpush.bf16.msra.mxu0 %v574
  %710 = vmatpush.bf16.msra.mxu0 %v573
  %711 = vmatpush.bf16.msra.mxu0 %v572
  %712 = vmatpush.bf16.msra.mxu0 %v571
  %713 = vmatpush.bf16.msra.mxu0 %v570
  %714 = vmatpush.bf16.msra.mxu0 %v569
  %715 = vmatpush.bf16.msra.mxu0 %v568
  %716 = vmatpush.bf16.msra.mxu0 %v567
  %717 = vmatmul.bf16.gmra.mxu0 %v292
  %v718 = vpop.f32.mrf.mxu0
  %v719 = vadd.f32 %v690, %v718
  %v720 = vpop.f32.mrf.mxu0
  %v721 = vadd.f32 %v692, %v720
  %722 = vmatmul.bf16.gmra.mxu0 %v299
  %v723 = vpop.f32.mrf.mxu0
  %v724 = vadd.f32 %v695, %v723
  %v725 = vpop.f32.mrf.mxu0
  %v726 = vadd.f32 %v697, %v725
  %727 = vmatmul.bf16.gmra.mxu0 %v306
  %v728 = vpop.f32.mrf.mxu0
  %v729 = vadd.f32 %v700, %v728
  %v730 = vpop.f32.mrf.mxu0
  %v731 = vadd.f32 %v702, %v730
  %732 = vmatmul.bf16.gmra.mxu0 %v313
  %v733 = vpop.f32.mrf.mxu0
  %v734 = vadd.f32 %v705, %v733
  %v735 = vpop.f32.mrf.mxu0
  %v736 = vadd.f32 %v707, %v735
  %737 = vdwg.mxu0
  %738 = vmatpush.bf16.msra.mxu0 %v582
  %739 = vmatpush.bf16.msra.mxu0 %v581
  %740 = vmatpush.bf16.msra.mxu0 %v580
  %741 = vmatpush.bf16.msra.mxu0 %v579
  %742 = vmatpush.bf16.msra.mxu0 %v578
  %743 = vmatpush.bf16.msra.mxu0 %v577
  %744 = vmatpush.bf16.msra.mxu0 %v576
  %745 = vmatpush.bf16.msra.mxu0 %v575
  %746 = vmatmul.bf16.gmra.mxu0 %v293
  %v747 = vpop.f32.mrf.mxu0
  %v748 = vadd.f32 %v719, %v747
  %v749 = vpop.f32.mrf.mxu0
  %v750 = vadd.f32 %v721, %v749
  %751 = vmatmul.bf16.gmra.mxu0 %v300
  %v752 = vpop.f32.mrf.mxu0
  %v753 = vadd.f32 %v724, %v752
  %v754 = vpop.f32.mrf.mxu0
  %v755 = vadd.f32 %v726, %v754
  %756 = vmatmul.bf16.gmra.mxu0 %v307
  %v757 = vpop.f32.mrf.mxu0
  %v758 = vadd.f32 %v729, %v757
  %v759 = vpop.f32.mrf.mxu0
  %v760 = vadd.f32 %v731, %v759
  %761 = vmatmul.bf16.gmra.mxu0 %v314
  %v762 = vpop.f32.mrf.mxu0
  %v763 = vadd.f32 %v734, %v762
  %v764 = vpop.f32.mrf.mxu0
  %v765 = vadd.f32 %v736, %v764
  %766 = vdwg.mxu0
  %767 = vmatpush.bf16.msra.mxu0 %v590
  %768 = vmatpush.bf16.msra.mxu0 %v589
  %769 = vmatpush.bf16.msra.mxu0 %v588
  %770 = vmatpush.bf16.msra.mxu0 %v587
  %771 = vmatpush.bf16.msra.mxu0 %v586
  %772 = vmatpush.bf16.msra.mxu0 %v585
  %773 = vmatpush.bf16.msra.mxu0 %v584
  %774 = vmatpush.bf16.msra.mxu0 %v583
  %775 = vmatmul.bf16.gmra.mxu0 %v294
  %v776 = vpop.f32.mrf.mxu0
  %v777 = vadd.f32 %v748, %v776
  %v778 = vpop.f32.mrf.mxu0
  %v779 = vadd.f32 %v750, %v778
  %780 = vmatmul.bf16.gmra.mxu0 %v301
  %v781 = vpop.f32.mrf.mxu0
  %v782 = vadd.f32 %v753, %v781
  %v783 = vpop.f32.mrf.mxu0
  %v784 = vadd.f32 %v755, %v783
  %785 = vmatmul.bf16.gmra.mxu0 %v308
  %v786 = vpop.f32.mrf.mxu0
  %v787 = vadd.f32 %v758, %v786
  %v788 = vpop.f32.mrf.mxu0
  %v789 = vadd.f32 %v760, %v788
  %790 = vmatmul.bf16.gmra.mxu0 %v315
  %v791 = vpop.f32.mrf.mxu0
  %v792 = vadd.f32 %v763, %v791
  %v793 = vpop.f32.mrf.mxu0
  %v794 = vadd.f32 %v765, %v793
  %795 = vdwg.mxu0
  %796 = vmatpush.bf16.msra.mxu0 %v598
  %797 = vmatpush.bf16.msra.mxu0 %v597
  %798 = vmatpush.bf16.msra.mxu0 %v596
  %799 = vmatpush.bf16.msra.mxu0 %v595
  %800 = vmatpush.bf16.msra.mxu0 %v594
  %801 = vmatpush.bf16.msra.mxu0 %v593
  %802 = vmatpush.bf16.msra.mxu0 %v592
  %803 = vmatpush.bf16.msra.mxu0 %v591
  %804 = vmatmul.bf16.gmra.mxu0 %v295
  %v805 = vpop.f32.mrf.mxu0
  %v806 = vadd.f32 %v777, %v805
  %v807 = vpop.f32.mrf.mxu0
  %v808 = vadd.f32 %v779, %v807
  %809 = vmatmul.bf16.gmra.mxu0 %v302
  %v810 = vpop.f32.mrf.mxu0
  %v811 = vadd.f32 %v782, %v810
  %v812 = vpop.f32.mrf.mxu0
  %v813 = vadd.f32 %v784, %v812
  %814 = vmatmul.bf16.gmra.mxu0 %v309
  %v815 = vpop.f32.mrf.mxu0
  %v816 = vadd.f32 %v787, %v815
  %v817 = vpop.f32.mrf.mxu0
  %v818 = vadd.f32 %v789, %v817
  %819 = vmatmul.bf16.gmra.mxu0 %v316
  %v820 = vpop.f32.mrf.mxu0
  %v821 = vadd.f32 %v792, %v820
  %v822 = vpop.f32.mrf.mxu0
  %v823 = vadd.f32 %v794, %v822
  %824 = vdwg.mxu0
  %825 = vmatpush.bf16.msra.mxu0 %v606
  %826 = vmatpush.bf16.msra.mxu0 %v605
  %827 = vmatpush.bf16.msra.mxu0 %v604
  %828 = vmatpush.bf16.msra.mxu0 %v603
  %829 = vmatpush.bf16.msra.mxu0 %v602
  %830 = vmatpush.bf16.msra.mxu0 %v601
  %831 = vmatpush.bf16.msra.mxu0 %v600
  %832 = vmatpush.bf16.msra.mxu0 %v599
  %833 = vmatmul.bf16.gmra.mxu0 %v296
  %v834 = vpop.f32.mrf.mxu0
  %v835 = vadd.f32 %v806, %v834
  %v836 = vpop.f32.mrf.mxu0
  %v837 = vadd.f32 %v808, %v836
  %838 = vmatmul.bf16.gmra.mxu0 %v303
  %v839 = vpop.f32.mrf.mxu0
  %v840 = vadd.f32 %v811, %v839
  %v841 = vpop.f32.mrf.mxu0
  %v842 = vadd.f32 %v813, %v841
  %843 = vmatmul.bf16.gmra.mxu0 %v310
  %v844 = vpop.f32.mrf.mxu0
  %v845 = vadd.f32 %v816, %v844
  %v846 = vpop.f32.mrf.mxu0
  %v847 = vadd.f32 %v818, %v846
  %848 = vmatmul.bf16.gmra.mxu0 %v317
  %v849 = vpop.f32.mrf.mxu0
  %v850 = vadd.f32 %v821, %v849
  %v851 = vpop.f32.mrf.mxu0
  %v852 = vadd.f32 %v823, %v851
  %853 = vdwg.mxu0
  %854 = vmatpush.bf16.msra.mxu0 0
  %855 = vmatpush.bf16.msra.mxu0 0
  %856 = vmatpush.bf16.msra.mxu0 %v612
  %857 = vmatpush.bf16.msra.mxu0 %v611
  %858 = vmatpush.bf16.msra.mxu0 %v610
  %859 = vmatpush.bf16.msra.mxu0 %v609
  %860 = vmatpush.bf16.msra.mxu0 %v608
  %861 = vmatpush.bf16.msra.mxu0 %v607
  %862 = vmatmul.bf16.gmra.mxu0 %v669
  %v863 = vpop.f32.mrf.mxu0
  %v864 = vadd.f32 %v835, %v863
  %v865 = vpop.f32.mrf.mxu0
  %v866 = vadd.f32 %v837, %v865
  %867 = vmatmul.bf16.gmra.mxu0 %v672
  %v868 = vpop.f32.mrf.mxu0
  %v869 = vadd.f32 %v840, %v868
  %v870 = vpop.f32.mrf.mxu0
  %v871 = vadd.f32 %v842, %v870
  %872 = vmatmul.bf16.gmra.mxu0 %v675
  %v873 = vpop.f32.mrf.mxu0
  %v874 = vadd.f32 %v845, %v873
  %v875 = vpop.f32.mrf.mxu0
  %v876 = vadd.f32 %v847, %v875
  %877 = vmatmul.bf16.gmra.mxu0 %v678
  %v878 = vpop.f32.mrf.mxu0
  %v879 = vadd.f32 %v850, %v878
  %v880 = vpop.f32.mrf.mxu0
  %v881 = vadd.f32 %v852, %v880
  %882 = vdwg.mxu0
  %v883 = vmax.f32 %v864, 0.0
  %v884 = vmax.f32 %v866, 0.0
  %v885 = vmax.f32 %v869, 0.0
  %v886 = vmax.f32 %v871, 0.0
  %v887 = vmax.f32 %v874, 0.0
  %v888 = vmax.f32 %v876, 0.0
  %v889 = vmax.f32 %v879, 0.0
  %v890 = vmax.f32 %v881, 0.0
  %vm891 = vcmask 15360
  %892 = vst.msk [vmem:[%s3] sm:$0xff] %vm891, %v883
  %893 = vst.msk [vmem:[%s3 + $0x8] sm:$0xff] %vm891, %v884
  %894 = vst.msk [vmem:[%s3 + $0x10] sm:$0xff] %vm891, %v885
  %895 = vst.msk [vmem:[%s3 + $0x18] sm:$0xff] %vm891, %v886
  %896 = vst.msk [vmem:[%s3 + $0x20] sm:$0xff] %vm891, %v887
  %897 = vst.msk [vmem:[%s3 + $0x28] sm:$0xff] %vm891, %v888
  %898 = vst.msk [vmem:[%s3 + $0x30] sm:$0xff] %vm891, %v889
  %899 = vst.msk [vmem:[%s3 + $0x38] sm:$0xff] %vm891, %v890
  // Predicated region
  $region14: #{_lambda_.23} parent=0 // pred_check
    _
  $region15: #{_lambda_.23} parent=0 // pred_check_branch
    %901 = sbr.rel (0) target = $region17
  $region16: #{_lambda_.23} parent=0 // pred_region
    _
  $region17: #{_lambda_.23} parent=0 // pred_fallthru
    _
  // Predicated region
  $region18: #{_lambda_.23} parent=0 // pred_check
    _
  $region19: #{_lambda_.23} parent=0 // pred_check_branch
    %903 = sbr.rel (0) target = $region21
  $region20: #{_lambda_.23} parent=0 // pred_region
    _
  $region21: #{_lambda_.23} parent=0 // pred_fallthru
    _

// kernel: _lambda_.24
$region0: #{_lambda_.24}
  #allocation0 [shape = 'u32[]', space=smem, size = 0x4, offset = 0x4, fixed_abs, tag = 'smem constant byte address 0x4 - core index']
  #allocation1 [shape = 'u32[72,128]{1,0:T(1,128)}', space=vmem, size = 0x9000, scoped, tag = 'internal scratch']
  %s0 = inlined_call_operand.vmem [shape: bf16[64,32], index: 0, kind: input, shape index: {}]
  %s1 = inlined_call_operand.vmem [shape: bf16[32,2], index: 1, kind: input, shape index: {}]
  %s2 = inlined_call_operand.vmem [shape: f32[64,1], index: 2, kind: input, shape index: {}]
  %s3 = inlined_call_operand.vmem [shape: f32[64,2], index: 3, kind: output, shape index: {}]
  %s4 = sld [smem:[#allocation0]]
  $region22: #{_lambda_.24} parent=0
    _
  %s6 = ssub.s32 1, %s4
  %s7 = scalar_select 0, %s6, %s4
  // Predicated region
  $region2: #{_lambda_.24} parent=0 // pred_check
    _
  $region3: #{_lambda_.24} parent=0 // pred_check_branch
    %9 = sbr.rel (0) target = $region5
  $region4: #{_lambda_.24} parent=0 // pred_region
    _
  $region5: #{_lambda_.24} parent=0 // pred_fallthru
    _
  // Predicated region
  $region6: #{_lambda_.24} parent=0 // pred_check
    _
  $region7: #{_lambda_.24} parent=0 // pred_check_branch
    %11 = sbr.rel (0) target = $region9
  $region8: #{_lambda_.24} parent=0 // pred_region
    _
  $region9: #{_lambda_.24} parent=0 // pred_fallthru
    _
  // Predicated region
  $region10: #{_lambda_.24} parent=0 // pred_check
    _
  $region11: #{_lambda_.24} parent=0 // pred_check_branch
    %13 = sbr.rel (0) target = $region13
  $region12: #{_lambda_.24} parent=0 // pred_region
    _
  $region13: #{_lambda_.24} parent=0 // pred_fallthru
    _
  %v15 = vld [vmem:[%s0] sm:$0xf]
  %v16 = vld [vmem:[%s0 + $0x4] sm:$0xf]
  %v17 = vld [vmem:[%s0 + $0x8] sm:$0xf]
  %v18 = vld [vmem:[%s0 + $0xc] sm:$0xf]
  %v19 = vld [vmem:[%s0 + $0x10] sm:$0xf]
  %v20 = vld [vmem:[%s0 + $0x14] sm:$0xf]
  %v21 = vld [vmem:[%s0 + $0x18] sm:$0xf]
  %v22 = vld [vmem:[%s0 + $0x1c] sm:$0xf]
  %v23 = vld [vmem:[%s1] sm:$0xf]
  %v24 = vld [vmem:[%s1 + $0x4] sm:$0xf]
  %v25 = vld [vmem:[%s1 + $0x8] sm:$0xf]
  %v26 = vld [vmem:[%s1 + $0xc] sm:$0xf]
  %v27 = vld [vmem:[%s2] sm:$0xff]
  %v28 = vld [vmem:[%s2 + $0x8] sm:$0xff]
  %v29 = vld [vmem:[%s2 + $0x10] sm:$0xff]
  %v30 = vld [vmem:[%s2 + $0x18] sm:$0xff]
  %v31 = vld [vmem:[%s2 + $0x20] sm:$0xff]
  %v32 = vld [vmem:[%s2 + $0x28] sm:$0xff]
  %v33 = vld [vmem:[%s2 + $0x30] sm:$0xff]
  %v34 = vld [vmem:[%s2 + $0x38] sm:$0xff]
  %36 = vset.pattern.permute.xlu0 0
  %37 = vperm.xlu0 %36, %v27
  %v38 = vpop.permute.xlu0 %37
  %41 = vset.pattern.permute.xlu0 0
  %42 = vperm.xlu0 %41, %v28
  %v43 = vpop.permute.xlu0 %42
  %46 = vset.pattern.permute.xlu0 0
  %47 = vperm.xlu0 %46, %v29
  %v48 = vpop.permute.xlu0 %47
  %51 = vset.pattern.permute.xlu0 0
  %52 = vperm.xlu0 %51, %v30
  %v53 = vpop.permute.xlu0 %52
  %56 = vset.pattern.permute.xlu0 0
  %57 = vperm.xlu0 %56, %v31
  %v58 = vpop.permute.xlu0 %57
  %61 = vset.pattern.permute.xlu0 0
  %62 = vperm.xlu0 %61, %v32
  %v63 = vpop.permute.xlu0 %62
  %66 = vset.pattern.permute.xlu0 0
  %67 = vperm.xlu0 %66, %v33
  %v68 = vpop.permute.xlu0 %67
  %71 = vset.pattern.permute.xlu0 0
  %72 = vperm.xlu0 %71, %v34
  %v73 = vpop.permute.xlu0 %72
  %v83 = vunpack.c.l.b16 %v15
  %v84 = vunpack.c.l.b16 %v16
  %v85 = vunpack.c.l.b16 %v17
  %v86 = vunpack.c.l.b16 %v18
  %v87 = vunpack.c.l.b16 %v19
  %v88 = vunpack.c.l.b16 %v20
  %v89 = vunpack.c.l.b16 %v21
  %v90 = vunpack.c.l.b16 %v22
  %v91 = vpack.c.b16 %v84, %v83
  %v92 = vpack.c.b16 %v86, %v85
  %v93 = vpack.c.b16 %v88, %v87
  %v94 = vpack.c.b16 %v90, %v89
  %v99 = vunpack.c.l.b16 %v23
  %v100 = vunpack.c.l.b16 %v24
  %v101 = vunpack.c.l.b16 %v25
  %v102 = vunpack.c.l.b16 %v26
  %v103 = vpack.c.b16 %v100, %v99
  %v104 = vpack.c.b16 %v102, %v101
  %vm107 = vcmask 261120
  %v109 = vsel %vm107, %v91, 0
  %v112 = vsel %vm107, %v92, 0
  %v115 = vsel %vm107, %v93, 0
  %v118 = vsel %vm107, %v94, 0
  %120 = vmatpush.bf16.msra.mxu0 0
  %121 = vmatpush.bf16.msra.mxu0 0
  %122 = vmatpush.bf16.msra.mxu0 0
  %123 = vmatpush.bf16.msra.mxu0 0
  %124 = vmatpush.bf16.msra.mxu0 0
  %125 = vmatpush.bf16.msra.mxu0 0
  %126 = vmatpush.bf16.msra.mxu0 %v104
  %127 = vmatpush.bf16.msra.mxu0 %v103
  %128 = vmatmul.bf16.gmra.mxu0 %v109
  %v129 = vpop.f32.mrf.mxu0
  %v130 = vadd.f32 %v38, %v129
  %v131 = vpop.f32.mrf.mxu0
  %v132 = vadd.f32 %v43, %v131
  %133 = vmatmul.bf16.gmra.mxu0 %v112
  %v134 = vpop.f32.mrf.mxu0
  %v135 = vadd.f32 %v48, %v134
  %v136 = vpop.f32.mrf.mxu0
  %v137 = vadd.f32 %v53, %v136
  %138 = vmatmul.bf16.gmra.mxu0 %v115
  %v139 = vpop.f32.mrf.mxu0
  %v140 = vadd.f32 %v58, %v139
  %v141 = vpop.f32.mrf.mxu0
  %v142 = vadd.f32 %v63, %v141
  %143 = vmatmul.bf16.gmra.mxu0 %v118
  %v144 = vpop.f32.mrf.mxu0
  %v145 = vadd.f32 %v68, %v144
  %v146 = vpop.f32.mrf.mxu0
  %v147 = vadd.f32 %v73, %v146
  %148 = vdwg.mxu0
  %vm149 = vcmask 15360
  %150 = vst.msk [vmem:[%s3] sm:$0xff] %vm149, %v130
  %151 = vst.msk [vmem:[%s3 + $0x8] sm:$0xff] %vm149, %v132
  %152 = vst.msk [vmem:[%s3 + $0x10] sm:$0xff] %vm149, %v135
  %153 = vst.msk [vmem:[%s3 + $0x18] sm:$0xff] %vm149, %v137
  %154 = vst.msk [vmem:[%s3 + $0x20] sm:$0xff] %vm149, %v140
  %155 = vst.msk [vmem:[%s3 + $0x28] sm:$0xff] %vm149, %v142
  %156 = vst.msk [vmem:[%s3 + $0x30] sm:$0xff] %vm149, %v145
  %157 = vst.msk [vmem:[%s3 + $0x38] sm:$0xff] %vm149, %v147
  // Predicated region
  $region14: #{_lambda_.24} parent=0 // pred_check
    _
  $region15: #{_lambda_.24} parent=0 // pred_check_branch
    %159 = sbr.rel (0) target = $region17
  $region16: #{_lambda_.24} parent=0 // pred_region
    _
  $region17: #{_lambda_.24} parent=0 // pred_fallthru
    _
  // Predicated region
  $region18: #{_lambda_.24} parent=0 // pred_check
    _
  $region19: #{_lambda_.24} parent=0 // pred_check_branch
    %161 = sbr.rel (0) target = $region21
  $region20: #{_lambda_.24} parent=0 // pred_region
    _
  $region21: #{_lambda_.24} parent=0 // pred_fallthru
    _

// kernel: _lambda_.25
$region0: #{_lambda_.25}
  #allocation0 [shape = 'u32[]', space=smem, size = 0x4, offset = 0x4, fixed_abs, tag = 'smem constant byte address 0x4 - core index']
  #allocation1 [shape = 'u32[72,128]{1,0:T(1,128)}', space=vmem, size = 0x9000, scoped, tag = 'internal scratch']
  %s0 = inlined_call_operand.vmem [shape: bf16[64,1728], index: 0, kind: input, shape index: {}]
  %s1 = inlined_call_operand.vmem [shape: bf16[1728,2], index: 1, kind: input, shape index: {}]
  %s2 = inlined_call_operand.vmem [shape: f32[64,1], index: 2, kind: input, shape index: {}]
  %s3 = inlined_call_operand.vmem [shape: f32[64,2], index: 3, kind: input, shape index: {}]
  %s4 = inlined_call_operand.vmem [shape: f32[64,2], index: 4, kind: output, shape index: {}]
  %s5 = sld [smem:[#allocation0]]
  $region26: #{_lambda_.25} parent=0
    _
  %s7 = ssub.s32 1, %s5
  %s8 = scalar_select 0, %s7, %s5
  // Predicated region
  $region2: #{_lambda_.25} parent=0 // pred_check
    _
  $region3: #{_lambda_.25} parent=0 // pred_check_branch
    %10 = sbr.rel (0) target = $region5
  $region4: #{_lambda_.25} parent=0 // pred_region
    _
  $region5: #{_lambda_.25} parent=0 // pred_fallthru
    _
  // Predicated region
  $region6: #{_lambda_.25} parent=0 // pred_check
    _
  $region7: #{_lambda_.25} parent=0 // pred_check_branch
    %12 = sbr.rel (0) target = $region9
  $region8: #{_lambda_.25} parent=0 // pred_region
    _
  $region9: #{_lambda_.25} parent=0 // pred_fallthru
    _
  // Predicated region
  $region10: #{_lambda_.25} parent=0 // pred_check
    _
  $region11: #{_lambda_.25} parent=0 // pred_check_branch
    %14 = sbr.rel (0) target = $region13
  $region12: #{_lambda_.25} parent=0 // pred_region
    _
  $region13: #{_lambda_.25} parent=0 // pred_fallthru
    _
  // Predicated region
  $region14: #{_lambda_.25} parent=0 // pred_check
    _
  $region15: #{_lambda_.25} parent=0 // pred_check_branch
    %16 = sbr.rel (0) target = $region17
  $region16: #{_lambda_.25} parent=0 // pred_region
    _
  $region17: #{_lambda_.25} parent=0 // pred_fallthru
    _
  %v18 = vld [vmem:[%s0] sm:$0xff]
  %v19 = vld [vmem:[%s0 + $0x8] sm:$0xff]
  %v20 = vld [vmem:[%s0 + $0x10] sm:$0xff]
  %v21 = vld [vmem:[%s0 + $0x18] sm:$0xff]
  %v22 = vld [vmem:[%s0 + $0x20] sm:$0xff]
  %v23 = vld [vmem:[%s0 + $0x28] sm:$0xff]
  %v24 = vld [vmem:[%s0 + $0x30] sm:$0xff]
  %v25 = vld [vmem:[%s0 + $0x38] sm:$0xff]
  %v26 = vld [vmem:[%s0 + $0x40] sm:$0xff]
  %v27 = vld [vmem:[%s0 + $0x48] sm:$0xff]
  %v28 = vld [vmem:[%s0 + $0x50] sm:$0xff]
  %v29 = vld [vmem:[%s0 + $0x58] sm:$0xff]
  %v30 = vld [vmem:[%s0 + $0x60] sm:$0xff]
  %v31 = vld [vmem:[%s0 + $0x68] sm:$0xff]
  %v32 = vld [vmem:[%s0 + $0x70] sm:$0xff]
  %v33 = vld [vmem:[%s0 + $0x78] sm:$0xff]
  %v34 = vld [vmem:[%s0 + $0x80] sm:$0xff]
  %v35 = vld [vmem:[%s0 + $0x88] sm:$0xff]
  %v36 = vld [vmem:[%s0 + $0x90] sm:$0xff]
  %v37 = vld [vmem:[%s0 + $0x98] sm:$0xff]
  %v38 = vld [vmem:[%s0 + $0xa0] sm:$0xff]
  %v39 = vld [vmem:[%s0 + $0xa8] sm:$0xff]
  %v40 = vld [vmem:[%s0 + $0xb0] sm:$0xff]
  %v41 = vld [vmem:[%s0 + $0xb8] sm:$0xff]
  %v42 = vld [vmem:[%s0 + $0xc0] sm:$0xff]
  %v43 = vld [vmem:[%s0 + $0xc8] sm:$0xff]
  %v44 = vld [vmem:[%s0 + $0xd0] sm:$0xff]
  %v45 = vld [vmem:[%s0 + $0xd8] sm:$0xff]
  %v46 = vld [vmem:[%s0 + $0xe0] sm:$0xff]
  %v47 = vld [vmem:[%s0 + $0xe8] sm:$0xff]
  %v48 = vld [vmem:[%s0 + $0xf0] sm:$0xff]
  %v49 = vld [vmem:[%s0 + $0xf8] sm:$0xff]
  %v50 = vld [vmem:[%s0 + $0x100] sm:$0xff]
  %v51 = vld [vmem:[%s0 + $0x108] sm:$0xff]
  %v52 = vld [vmem:[%s0 + $0x110] sm:$0xff]
  %v53 = vld [vmem:[%s0 + $0x118] sm:$0xff]
  %v54 = vld [vmem:[%s0 + $0x120] sm:$0xff]
  %v55 = vld [vmem:[%s0 + $0x128] sm:$0xff]
  %v56 = vld [vmem:[%s0 + $0x130] sm:$0xff]
  %v57 = vld [vmem:[%s0 + $0x138] sm:$0xff]
  %v58 = vld [vmem:[%s0 + $0x140] sm:$0xff]
  %v59 = vld [vmem:[%s0 + $0x148] sm:$0xff]
  %v60 = vld [vmem:[%s0 + $0x150] sm:$0xff]
  %v61 = vld [vmem:[%s0 + $0x158] sm:$0xff]
  %v62 = vld [vmem:[%s0 + $0x160] sm:$0xff]
  %v63 = vld [vmem:[%s0 + $0x168] sm:$0xff]
  %v64 = vld [vmem:[%s0 + $0x170] sm:$0xff]
  %v65 = vld [vmem:[%s0 + $0x178] sm:$0xff]
  %v66 = vld [vmem:[%s0 + $0x180] sm:$0xff]
  %v67 = vld [vmem:[%s0 + $0x188] sm:$0xff]
  %v68 = vld [vmem:[%s0 + $0x190] sm:$0xff]
  %v69 = vld [vmem:[%s0 + $0x198] sm:$0xff]
  %v70 = vld [vmem:[%s0 + $0x1a0] sm:$0xff]
  %v71 = vld [vmem:[%s0 + $0x1a8] sm:$0xff]
  %v72 = vld [vmem:[%s0 + $0x1b0] sm:$0xff]
  %v73 = vld [vmem:[%s0 + $0x1b8] sm:$0xff]
  %v74 = vld [vmem:[%s1] sm:$0xf]
  %v75 = vld [vmem:[%s1 + $0x4] sm:$0xf]
  %v76 = vld [vmem:[%s1 + $0x8] sm:$0xf]
  %v77 = vld [vmem:[%s1 + $0xc] sm:$0xf]
  %v78 = vld [vmem:[%s1 + $0x10] sm:$0xf]
  %v79 = vld [vmem:[%s1 + $0x14] sm:$0xf]
  %v80 = vld [vmem:[%s1 + $0x18] sm:$0xf]
  %v81 = vld [vmem:[%s1 + $0x1c] sm:$0xf]
  %v82 = vld [vmem:[%s1 + $0x20] sm:$0xf]
  %v83 = vld [vmem:[%s1 + $0x24] sm:$0xf]
  %v84 = vld [vmem:[%s1 + $0x28] sm:$0xf]
  %v85 = vld [vmem:[%s1 + $0x2c] sm:$0xf]
  %v86 = vld [vmem:[%s1 + $0x30] sm:$0xf]
  %v87 = vld [vmem:[%s1 + $0x34] sm:$0xf]
  %v88 = vld [vmem:[%s1 + $0x38] sm:$0xf]
  %v89 = vld [vmem:[%s1 + $0x3c] sm:$0xf]
  %v90 = vld [vmem:[%s1 + $0x40] sm:$0xf]
  %v91 = vld [vmem:[%s1 + $0x44] sm:$0xf]
  %v92 = vld [vmem:[%s1 + $0x48] sm:$0xf]
  %v93 = vld [vmem:[%s1 + $0x4c] sm:$0xf]
  %v94 = vld [vmem:[%s1 + $0x50] sm:$0xf]
  %v95 = vld [vmem:[%s1 + $0x54] sm:$0xf]
  %v96 = vld [vmem:[%s1 + $0x58] sm:$0xf]
  %v97 = vld [vmem:[%s1 + $0x5c] sm:$0xf]
  %v98 = vld [vmem:[%s1 + $0x60] sm:$0xf]
  %v99 = vld [vmem:[%s1 + $0x64] sm:$0xf]
  %v100 = vld [vmem:[%s1 + $0x68] sm:$0xf]
  %v101 = vld [vmem:[%s1 + $0x6c] sm:$0xf]
  %v102 = vld [vmem:[%s1 + $0x70] sm:$0xf]
  %v103 = vld [vmem:[%s1 + $0x74] sm:$0xf]
  %v104 = vld [vmem:[%s1 + $0x78] sm:$0xf]
  %v105 = vld [vmem:[%s1 + $0x7c] sm:$0xf]
  %v106 = vld [vmem:[%s1 + $0x80] sm:$0xf]
  %v107 = vld [vmem:[%s1 + $0x84] sm:$0xf]
  %v108 = vld [vmem:[%s1 + $0x88] sm:$0xf]
  %v109 = vld [vmem:[%s1 + $0x8c] sm:$0xf]
  %v110 = vld [vmem:[%s1 + $0x90] sm:$0xf]
  %v111 = vld [vmem:[%s1 + $0x94] sm:$0xf]
  %v112 = vld [vmem:[%s1 + $0x98] sm:$0xf]
  %v113 = vld [vmem:[%s1 + $0x9c] sm:$0xf]
  %v114 = vld [vmem:[%s1 + $0xa0] sm:$0xf]
  %v115 = vld [vmem:[%s1 + $0xa4] sm:$0xf]
  %v116 = vld [vmem:[%s1 + $0xa8] sm:$0xf]
  %v117 = vld [vmem:[%s1 + $0xac] sm:$0xf]
  %v118 = vld [vmem:[%s1 + $0xb0] sm:$0xf]
  %v119 = vld [vmem:[%s1 + $0xb4] sm:$0xf]
  %v120 = vld [vmem:[%s1 + $0xb8] sm:$0xf]
  %v121 = vld [vmem:[%s1 + $0xbc] sm:$0xf]
  %v122 = vld [vmem:[%s1 + $0xc0] sm:$0xf]
  %v123 = vld [vmem:[%s1 + $0xc4] sm:$0xf]
  %v124 = vld [vmem:[%s1 + $0xc8] sm:$0xf]
  %v125 = vld [vmem:[%s1 + $0xcc] sm:$0xf]
  %v126 = vld [vmem:[%s1 + $0xd0] sm:$0xf]
  %v127 = vld [vmem:[%s1 + $0xd4] sm:$0xf]
  %v128 = vld [vmem:[%s1 + $0xd8] sm:$0xf]
  %v129 = vld [vmem:[%s1 + $0xdc] sm:$0xf]
  %v130 = vld [vmem:[%s1 + $0xe0] sm:$0xf]
  %v131 = vld [vmem:[%s1 + $0xe4] sm:$0xf]
  %v132 = vld [vmem:[%s1 + $0xe8] sm:$0xf]
  %v133 = vld [vmem:[%s1 + $0xec] sm:$0xf]
  %v134 = vld [vmem:[%s1 + $0xf0] sm:$0xf]
  %v135 = vld [vmem:[%s1 + $0xf4] sm:$0xf]
  %v136 = vld [vmem:[%s1 + $0xf8] sm:$0xf]
  %v137 = vld [vmem:[%s1 + $0xfc] sm:$0xf]
  %v138 = vld [vmem:[%s1 + $0x100] sm:$0xf]
  %v139 = vld [vmem:[%s1 + $0x104] sm:$0xf]
  %v140 = vld [vmem:[%s1 + $0x108] sm:$0xf]
  %v141 = vld [vmem:[%s1 + $0x10c] sm:$0xf]
  %v142 = vld [vmem:[%s1 + $0x110] sm:$0xf]
  %v143 = vld [vmem:[%s1 + $0x114] sm:$0xf]
  %v144 = vld [vmem:[%s1 + $0x118] sm:$0xf]
  %v145 = vld [vmem:[%s1 + $0x11c] sm:$0xf]
  %v146 = vld [vmem:[%s1 + $0x120] sm:$0xf]
  %v147 = vld [vmem:[%s1 + $0x124] sm:$0xf]
  %v148 = vld [vmem:[%s1 + $0x128] sm:$0xf]
  %v149 = vld [vmem:[%s1 + $0x12c] sm:$0xf]
  %v150 = vld [vmem:[%s1 + $0x130] sm:$0xf]
  %v151 = vld [vmem:[%s1 + $0x134] sm:$0xf]
  %v152 = vld [vmem:[%s1 + $0x138] sm:$0xf]
  %v153 = vld [vmem:[%s1 + $0x13c] sm:$0xf]
  %v154 = vld [vmem:[%s1 + $0x140] sm:$0xf]
  %v155 = vld [vmem:[%s1 + $0x144] sm:$0xf]
  %v156 = vld [vmem:[%s1 + $0x148] sm:$0xf]
  %v157 = vld [vmem:[%s1 + $0x14c] sm:$0xf]
  %v158 = vld [vmem:[%s1 + $0x150] sm:$0xf]
  %v159 = vld [vmem:[%s1 + $0x154] sm:$0xf]
  %v160 = vld [vmem:[%s1 + $0x158] sm:$0xf]
  %v161 = vld [vmem:[%s1 + $0x15c] sm:$0xf]
  %v162 = vld [vmem:[%s1 + $0x160] sm:$0xf]
  %v163 = vld [vmem:[%s1 + $0x164] sm:$0xf]
  %v164 = vld [vmem:[%s1 + $0x168] sm:$0xf]
  %v165 = vld [vmem:[%s1 + $0x16c] sm:$0xf]
  %v166 = vld [vmem:[%s1 + $0x170] sm:$0xf]
  %v167 = vld [vmem:[%s1 + $0x174] sm:$0xf]
  %v168 = vld [vmem:[%s1 + $0x178] sm:$0xf]
  %v169 = vld [vmem:[%s1 + $0x17c] sm:$0xf]
  %v170 = vld [vmem:[%s1 + $0x180] sm:$0xf]
  %v171 = vld [vmem:[%s1 + $0x184] sm:$0xf]
  %v172 = vld [vmem:[%s1 + $0x188] sm:$0xf]
  %v173 = vld [vmem:[%s1 + $0x18c] sm:$0xf]
  %v174 = vld [vmem:[%s1 + $0x190] sm:$0xf]
  %v175 = vld [vmem:[%s1 + $0x194] sm:$0xf]
  %v176 = vld [vmem:[%s1 + $0x198] sm:$0xf]
  %v177 = vld [vmem:[%s1 + $0x19c] sm:$0xf]
  %v178 = vld [vmem:[%s1 + $0x1a0] sm:$0xf]
  %v179 = vld [vmem:[%s1 + $0x1a4] sm:$0xf]
  %v180 = vld [vmem:[%s1 + $0x1a8] sm:$0xf]
  %v181 = vld [vmem:[%s1 + $0x1ac] sm:$0xf]
  %v182 = vld [vmem:[%s1 + $0x1b0] sm:$0xf]
  %v183 = vld [vmem:[%s1 + $0x1b4] sm:$0xf]
  %v184 = vld [vmem:[%s1 + $0x1b8] sm:$0xf]
  %v185 = vld [vmem:[%s1 + $0x1bc] sm:$0xf]
  %v186 = vld [vmem:[%s1 + $0x1c0] sm:$0xf]
  %v187 = vld [vmem:[%s1 + $0x1c4] sm:$0xf]
  %v188 = vld [vmem:[%s1 + $0x1c8] sm:$0xf]
  %v189 = vld [vmem:[%s1 + $0x1cc] sm:$0xf]
  %v190 = vld [vmem:[%s1 + $0x1d0] sm:$0xf]
  %v191 = vld [vmem:[%s1 + $0x1d4] sm:$0xf]
  %v192 = vld [vmem:[%s1 + $0x1d8] sm:$0xf]
  %v193 = vld [vmem:[%s1 + $0x1dc] sm:$0xf]
  %v194 = vld [vmem:[%s1 + $0x1e0] sm:$0xf]
  %v195 = vld [vmem:[%s1 + $0x1e4] sm:$0xf]
  %v196 = vld [vmem:[%s1 + $0x1e8] sm:$0xf]
  %v197 = vld [vmem:[%s1 + $0x1ec] sm:$0xf]
  %v198 = vld [vmem:[%s1 + $0x1f0] sm:$0xf]
  %v199 = vld [vmem:[%s1 + $0x1f4] sm:$0xf]
  %v200 = vld [vmem:[%s1 + $0x1f8] sm:$0xf]
  %v201 = vld [vmem:[%s1 + $0x1fc] sm:$0xf]
  %v202 = vld [vmem:[%s1 + $0x200] sm:$0xf]
  %v203 = vld [vmem:[%s1 + $0x204] sm:$0xf]
  %v204 = vld [vmem:[%s1 + $0x208] sm:$0xf]
  %v205 = vld [vmem:[%s1 + $0x20c] sm:$0xf]
  %v206 = vld [vmem:[%s1 + $0x210] sm:$0xf]
  %v207 = vld [vmem:[%s1 + $0x214] sm:$0xf]
  %v208 = vld [vmem:[%s1 + $0x218] sm:$0xf]
  %v209 = vld [vmem:[%s1 + $0x21c] sm:$0xf]
  %v210 = vld [vmem:[%s1 + $0x220] sm:$0xf]
  %v211 = vld [vmem:[%s1 + $0x224] sm:$0xf]
  %v212 = vld [vmem:[%s1 + $0x228] sm:$0xf]
  %v213 = vld [vmem:[%s1 + $0x22c] sm:$0xf]
  %v214 = vld [vmem:[%s1 + $0x230] sm:$0xf]
  %v215 = vld [vmem:[%s1 + $0x234] sm:$0xf]
  %v216 = vld [vmem:[%s1 + $0x238] sm:$0xf]
  %v217 = vld [vmem:[%s1 + $0x23c] sm:$0xf]
  %v218 = vld [vmem:[%s1 + $0x240] sm:$0xf]
  %v219 = vld [vmem:[%s1 + $0x244] sm:$0xf]
  %v220 = vld [vmem:[%s1 + $0x248] sm:$0xf]
  %v221 = vld [vmem:[%s1 + $0x24c] sm:$0xf]
  %v222 = vld [vmem:[%s1 + $0x250] sm:$0xf]
  %v223 = vld [vmem:[%s1 + $0x254] sm:$0xf]
  %v224 = vld [vmem:[%s1 + $0x258] sm:$0xf]
  %v225 = vld [vmem:[%s1 + $0x25c] sm:$0xf]
  %v226 = vld [vmem:[%s1 + $0x260] sm:$0xf]
  %v227 = vld [vmem:[%s1 + $0x264] sm:$0xf]
  %v228 = vld [vmem:[%s1 + $0x268] sm:$0xf]
  %v229 = vld [vmem:[%s1 + $0x26c] sm:$0xf]
  %v230 = vld [vmem:[%s1 + $0x270] sm:$0xf]
  %v231 = vld [vmem:[%s1 + $0x274] sm:$0xf]
  %v232 = vld [vmem:[%s1 + $0x278] sm:$0xf]
  %v233 = vld [vmem:[%s1 + $0x27c] sm:$0xf]
  %v234 = vld [vmem:[%s1 + $0x280] sm:$0xf]
  %v235 = vld [vmem:[%s1 + $0x284] sm:$0xf]
  %v236 = vld [vmem:[%s1 + $0x288] sm:$0xf]
  %v237 = vld [vmem:[%s1 + $0x28c] sm:$0xf]
  %v238 = vld [vmem:[%s1 + $0x290] sm:$0xf]
  %v239 = vld [vmem:[%s1 + $0x294] sm:$0xf]
  %v240 = vld [vmem:[%s1 + $0x298] sm:$0xf]
  %v241 = vld [vmem:[%s1 + $0x29c] sm:$0xf]
  %v242 = vld [vmem:[%s1 + $0x2a0] sm:$0xf]
  %v243 = vld [vmem:[%s1 + $0x2a4] sm:$0xf]
  %v244 = vld [vmem:[%s1 + $0x2a8] sm:$0xf]
  %v245 = vld [vmem:[%s1 + $0x2ac] sm:$0xf]
  %v246 = vld [vmem:[%s1 + $0x2b0] sm:$0xf]
  %v247 = vld [vmem:[%s1 + $0x2b4] sm:$0xf]
  %v248 = vld [vmem:[%s1 + $0x2b8] sm:$0xf]
  %v249 = vld [vmem:[%s1 + $0x2bc] sm:$0xf]
  %v250 = vld [vmem:[%s1 + $0x2c0] sm:$0xf]
  %v251 = vld [vmem:[%s1 + $0x2c4] sm:$0xf]
  %v252 = vld [vmem:[%s1 + $0x2c8] sm:$0xf]
  %v253 = vld [vmem:[%s1 + $0x2cc] sm:$0xf]
  %v254 = vld [vmem:[%s1 + $0x2d0] sm:$0xf]
  %v255 = vld [vmem:[%s1 + $0x2d4] sm:$0xf]
  %v256 = vld [vmem:[%s1 + $0x2d8] sm:$0xf]
  %v257 = vld [vmem:[%s1 + $0x2dc] sm:$0xf]
  %v258 = vld [vmem:[%s1 + $0x2e0] sm:$0xf]
  %v259 = vld [vmem:[%s1 + $0x2e4] sm:$0xf]
  %v260 = vld [vmem:[%s1 + $0x2e8] sm:$0xf]
  %v261 = vld [vmem:[%s1 + $0x2ec] sm:$0xf]
  %v262 = vld [vmem:[%s1 + $0x2f0] sm:$0xf]
  %v263 = vld [vmem:[%s1 + $0x2f4] sm:$0xf]
  %v264 = vld [vmem:[%s1 + $0x2f8] sm:$0xf]
  %v265 = vld [vmem:[%s1 + $0x2fc] sm:$0xf]
  %v266 = vld [vmem:[%s1 + $0x300] sm:$0xf]
  %v267 = vld [vmem:[%s1 + $0x304] sm:$0xf]
  %v268 = vld [vmem:[%s1 + $0x308] sm:$0xf]
  %v269 = vld [vmem:[%s1 + $0x30c] sm:$0xf]
  %v270 = vld [vmem:[%s1 + $0x310] sm:$0xf]
  %v271 = vld [vmem:[%s1 + $0x314] sm:$0xf]
  %v272 = vld [vmem:[%s1 + $0x318] sm:$0xf]
  %v273 = vld [vmem:[%s1 + $0x31c] sm:$0xf]
  %v274 = vld [vmem:[%s1 + $0x320] sm:$0xf]
  %v275 = vld [vmem:[%s1 + $0x324] sm:$0xf]
  %v276 = vld [vmem:[%s1 + $0x328] sm:$0xf]
  %v277 = vld [vmem:[%s1 + $0x32c] sm:$0xf]
  %v278 = vld [vmem:[%s1 + $0x330] sm:$0xf]
  %v279 = vld [vmem:[%s1 + $0x334] sm:$0xf]
  %v280 = vld [vmem:[%s1 + $0x338] sm:$0xf]
  %v281 = vld [vmem:[%s1 + $0x33c] sm:$0xf]
  %v282 = vld [vmem:[%s1 + $0x340] sm:$0xf]
  %v283 = vld [vmem:[%s1 + $0x344] sm:$0xf]
  %v284 = vld [vmem:[%s1 + $0x348] sm:$0xf]
  %v285 = vld [vmem:[%s1 + $0x34c] sm:$0xf]
  %v286 = vld [vmem:[%s1 + $0x350] sm:$0xf]
  %v287 = vld [vmem:[%s1 + $0x354] sm:$0xf]
  %v288 = vld [vmem:[%s1 + $0x358] sm:$0xf]
  %v289 = vld [vmem:[%s1 + $0x35c] sm:$0xf]
  %v290 = vld [vmem:[%s2] sm:$0xff]
  %v291 = vld [vmem:[%s2 + $0x8] sm:$0xff]
  %v292 = vld [vmem:[%s2 + $0x10] sm:$0xff]
  %v293 = vld [vmem:[%s2 + $0x18] sm:$0xff]
  %v294 = vld [vmem:[%s2 + $0x20] sm:$0xff]
  %v295 = vld [vmem:[%s2 + $0x28] sm:$0xff]
  %v296 = vld [vmem:[%s2 + $0x30] sm:$0xff]
  %v297 = vld [vmem:[%s2 + $0x38] sm:$0xff]
  %299 = vset.pattern.permute.xlu0 0
  %300 = vperm.xlu0 %299, %v290
  %v301 = vpop.permute.xlu0 %300
  %304 = vset.pattern.permute.xlu0 0
  %305 = vperm.xlu0 %304, %v291
  %v306 = vpop.permute.xlu0 %305
  %309 = vset.pattern.permute.xlu0 0
  %310 = vperm.xlu0 %309, %v292
  %v311 = vpop.permute.xlu0 %310
  %314 = vset.pattern.permute.xlu0 0
  %315 = vperm.xlu0 %314, %v293
  %v316 = vpop.permute.xlu0 %315
  %319 = vset.pattern.permute.xlu0 0
  %320 = vperm.xlu0 %319, %v294
  %v321 = vpop.permute.xlu0 %320
  %324 = vset.pattern.permute.xlu0 0
  %325 = vperm.xlu0 %324, %v295
  %v326 = vpop.permute.xlu0 %325
  %329 = vset.pattern.permute.xlu0 0
  %330 = vperm.xlu0 %329, %v296
  %v331 = vpop.permute.xlu0 %330
  %334 = vset.pattern.permute.xlu0 0
  %335 = vperm.xlu0 %334, %v297
  %v336 = vpop.permute.xlu0 %335
  %v394 = vunpack.c.l.b16 %v18
  %v395 = vunpack.c.h.b16 %v18
  %v396 = vunpack.c.l.b16 %v19
  %v397 = vunpack.c.h.b16 %v19
  %v398 = vunpack.c.l.b16 %v20
  %v399 = vunpack.c.h.b16 %v20
  %v400 = vunpack.c.l.b16 %v21
  %v401 = vunpack.c.h.b16 %v21
  %v402 = vunpack.c.l.b16 %v22
  %v403 = vunpack.c.h.b16 %v22
  %v404 = vunpack.c.l.b16 %v23
  %v405 = vunpack.c.h.b16 %v23
  %v406 = vunpack.c.l.b16 %v24
  %v407 = vunpack.c.h.b16 %v24
  %v408 = vunpack.c.l.b16 %v25
  %v409 = vunpack.c.h.b16 %v25
  %v410 = vunpack.c.l.b16 %v26
  %v411 = vunpack.c.h.b16 %v26
  %v412 = vunpack.c.l.b16 %v27
  %v413 = vunpack.c.h.b16 %v27
  %v414 = vunpack.c.l.b16 %v28
  %v415 = vunpack.c.h.b16 %v28
  %v416 = vunpack.c.l.b16 %v29
  %v417 = vunpack.c.h.b16 %v29
  %v418 = vunpack.c.l.b16 %v30
  %v419 = vunpack.c.h.b16 %v30
  %v420 = vunpack.c.l.b16 %v31
  %v421 = vunpack.c.h.b16 %v31
  %v422 = vunpack.c.l.b16 %v32
  %v423 = vunpack.c.h.b16 %v32
  %v424 = vunpack.c.l.b16 %v33
  %v425 = vunpack.c.h.b16 %v33
  %v426 = vunpack.c.l.b16 %v34
  %v427 = vunpack.c.h.b16 %v34
  %v428 = vunpack.c.l.b16 %v35
  %v429 = vunpack.c.h.b16 %v35
  %v430 = vunpack.c.l.b16 %v36
  %v431 = vunpack.c.h.b16 %v36
  %v432 = vunpack.c.l.b16 %v37
  %v433 = vunpack.c.h.b16 %v37
  %v434 = vunpack.c.l.b16 %v38
  %v435 = vunpack.c.h.b16 %v38
  %v436 = vunpack.c.l.b16 %v39
  %v437 = vunpack.c.h.b16 %v39
  %v438 = vunpack.c.l.b16 %v40
  %v439 = vunpack.c.h.b16 %v40
  %v440 = vunpack.c.l.b16 %v41
  %v441 = vunpack.c.h.b16 %v41
  %v442 = vunpack.c.l.b16 %v42
  %v443 = vunpack.c.h.b16 %v42
  %v444 = vunpack.c.l.b16 %v43
  %v445 = vunpack.c.h.b16 %v43
  %v446 = vunpack.c.l.b16 %v44
  %v447 = vunpack.c.h.b16 %v44
  %v448 = vunpack.c.l.b16 %v45
  %v449 = vunpack.c.h.b16 %v45
  %v450 = vunpack.c.l.b16 %v46
  %v451 = vunpack.c.h.b16 %v46
  %v452 = vunpack.c.l.b16 %v47
  %v453 = vunpack.c.h.b16 %v47
  %v454 = vunpack.c.l.b16 %v48
  %v455 = vunpack.c.h.b16 %v48
  %v456 = vunpack.c.l.b16 %v49
  %v457 = vunpack.c.h.b16 %v49
  %v458 = vunpack.c.l.b16 %v50
  %v459 = vunpack.c.h.b16 %v50
  %v460 = vunpack.c.l.b16 %v51
  %v461 = vunpack.c.h.b16 %v51
  %v462 = vunpack.c.l.b16 %v52
  %v463 = vunpack.c.h.b16 %v52
  %v464 = vunpack.c.l.b16 %v53
  %v465 = vunpack.c.h.b16 %v53
  %v466 = vunpack.c.l.b16 %v54
  %v467 = vunpack.c.h.b16 %v54
  %v468 = vunpack.c.l.b16 %v55
  %v469 = vunpack.c.h.b16 %v55
  %v470 = vunpack.c.l.b16 %v56
  %v471 = vunpack.c.h.b16 %v56
  %v472 = vunpack.c.l.b16 %v57
  %v473 = vunpack.c.h.b16 %v57
  %v474 = vunpack.c.l.b16 %v58
  %v475 = vunpack.c.h.b16 %v58
  %v476 = vunpack.c.l.b16 %v59
  %v477 = vunpack.c.h.b16 %v59
  %v478 = vunpack.c.l.b16 %v60
  %v479 = vunpack.c.h.b16 %v60
  %v480 = vunpack.c.l.b16 %v61
  %v481 = vunpack.c.h.b16 %v61
  %v482 = vunpack.c.l.b16 %v62
  %v483 = vunpack.c.h.b16 %v62
  %v484 = vunpack.c.l.b16 %v63
  %v485 = vunpack.c.h.b16 %v63
  %v486 = vunpack.c.l.b16 %v64
  %v487 = vunpack.c.h.b16 %v64
  %v488 = vunpack.c.l.b16 %v65
  %v489 = vunpack.c.h.b16 %v65
  %v490 = vunpack.c.l.b16 %v66
  %v491 = vunpack.c.h.b16 %v66
  %v492 = vunpack.c.l.b16 %v67
  %v493 = vunpack.c.h.b16 %v67
  %v494 = vunpack.c.l.b16 %v68
  %v495 = vunpack.c.h.b16 %v68
  %v496 = vunpack.c.l.b16 %v69
  %v497 = vunpack.c.h.b16 %v69
  %v498 = vunpack.c.l.b16 %v70
  %v499 = vunpack.c.h.b16 %v70
  %v500 = vunpack.c.l.b16 %v71
  %v501 = vunpack.c.h.b16 %v71
  %v502 = vunpack.c.l.b16 %v72
  %v503 = vunpack.c.h.b16 %v72
  %v504 = vunpack.c.l.b16 %v73
  %v505 = vunpack.c.h.b16 %v73
  %v506 = vpack.c.b16 %v408, %v394
  %v507 = vpack.c.b16 %v409, %v395
  %v508 = vpack.c.b16 %v410, %v396
  %v509 = vpack.c.b16 %v411, %v397
  %v510 = vpack.c.b16 %v412, %v398
  %v511 = vpack.c.b16 %v413, %v399
  %v512 = vpack.c.b16 %v414, %v400
  %v513 = vpack.c.b16 %v415, %v401
  %v514 = vpack.c.b16 %v416, %v402
  %v515 = vpack.c.b16 %v417, %v403
  %v516 = vpack.c.b16 %v418, %v404
  %v517 = vpack.c.b16 %v419, %v405
  %v518 = vpack.c.b16 %v420, %v406
  %v519 = vpack.c.b16 %v421, %v407
  %v520 = vpack.c.b16 %v436, %v422
  %v521 = vpack.c.b16 %v437, %v423
  %v522 = vpack.c.b16 %v438, %v424
  %v523 = vpack.c.b16 %v439, %v425
  %v524 = vpack.c.b16 %v440, %v426
  %v525 = vpack.c.b16 %v441, %v427
  %v526 = vpack.c.b16 %v442, %v428
  %v527 = vpack.c.b16 %v443, %v429
  %v528 = vpack.c.b16 %v444, %v430
  %v529 = vpack.c.b16 %v445, %v431
  %v530 = vpack.c.b16 %v446, %v432
  %v531 = vpack.c.b16 %v447, %v433
  %v532 = vpack.c.b16 %v448, %v434
  %v533 = vpack.c.b16 %v449, %v435
  %v534 = vpack.c.b16 %v464, %v450
  %v535 = vpack.c.b16 %v465, %v451
  %v536 = vpack.c.b16 %v466, %v452
  %v537 = vpack.c.b16 %v467, %v453
  %v538 = vpack.c.b16 %v468, %v454
  %v539 = vpack.c.b16 %v469, %v455
  %v540 = vpack.c.b16 %v470, %v456
  %v541 = vpack.c.b16 %v471, %v457
  %v542 = vpack.c.b16 %v472, %v458
  %v543 = vpack.c.b16 %v473, %v459
  %v544 = vpack.c.b16 %v474, %v460
  %v545 = vpack.c.b16 %v475, %v461
  %v546 = vpack.c.b16 %v476, %v462
  %v547 = vpack.c.b16 %v477, %v463
  %v548 = vpack.c.b16 %v492, %v478
  %v549 = vpack.c.b16 %v493, %v479
  %v550 = vpack.c.b16 %v494, %v480
  %v551 = vpack.c.b16 %v495, %v481
  %v552 = vpack.c.b16 %v496, %v482
  %v553 = vpack.c.b16 %v497, %v483
  %v554 = vpack.c.b16 %v498, %v484
  %v555 = vpack.c.b16 %v499, %v485
  %v556 = vpack.c.b16 %v500, %v486
  %v557 = vpack.c.b16 %v501, %v487
  %v558 = vpack.c.b16 %v502, %v488
  %v559 = vpack.c.b16 %v503, %v489
  %v560 = vpack.c.b16 %v504, %v490
  %v561 = vpack.c.b16 %v505, %v491
  %v830 = vunpack.c.l.b16 %v74
  %v831 = vunpack.c.l.b16 %v75
  %v832 = vunpack.c.l.b16 %v76
  %v833 = vunpack.c.l.b16 %v77
  %v834 = vunpack.c.l.b16 %v78
  %v835 = vunpack.c.l.b16 %v79
  %v836 = vunpack.c.l.b16 %v80
  %v837 = vunpack.c.l.b16 %v81
  %v838 = vunpack.c.l.b16 %v82
  %v839 = vunpack.c.l.b16 %v83
  %v840 = vunpack.c.l.b16 %v84
  %v841 = vunpack.c.l.b16 %v85
  %v842 = vunpack.c.l.b16 %v86
  %v843 = vunpack.c.l.b16 %v87
  %v844 = vunpack.c.l.b16 %v88
  %v845 = vunpack.c.l.b16 %v89
  %v846 = vunpack.c.l.b16 %v90
  %v847 = vunpack.c.l.b16 %v91
  %v848 = vunpack.c.l.b16 %v92
  %v849 = vunpack.c.l.b16 %v93
  %v850 = vunpack.c.l.b16 %v94
  %v851 = vunpack.c.l.b16 %v95
  %v852 = vunpack.c.l.b16 %v96
  %v853 = vunpack.c.l.b16 %v97
  %v854 = vunpack.c.l.b16 %v98
  %v855 = vunpack.c.l.b16 %v99
  %v856 = vunpack.c.l.b16 %v100
  %v857 = vunpack.c.l.b16 %v101
  %v858 = vunpack.c.l.b16 %v102
  %v859 = vunpack.c.l.b16 %v103
  %v860 = vunpack.c.l.b16 %v104
  %v861 = vunpack.c.l.b16 %v105
  %v862 = vunpack.c.l.b16 %v106
  %v863 = vunpack.c.l.b16 %v107
  %v864 = vunpack.c.l.b16 %v108
  %v865 = vunpack.c.l.b16 %v109
  %v866 = vunpack.c.l.b16 %v110
  %v867 = vunpack.c.l.b16 %v111
  %v868 = vunpack.c.l.b16 %v112
  %v869 = vunpack.c.l.b16 %v113
  %v870 = vunpack.c.l.b16 %v114
  %v871 = vunpack.c.l.b16 %v115
  %v872 = vunpack.c.l.b16 %v116
  %v873 = vunpack.c.l.b16 %v117
  %v874 = vunpack.c.l.b16 %v118
  %v875 = vunpack.c.l.b16 %v119
  %v876 = vunpack.c.l.b16 %v120
  %v877 = vunpack.c.l.b16 %v121
  %v878 = vunpack.c.l.b16 %v122
  %v879 = vunpack.c.l.b16 %v123
  %v880 = vunpack.c.l.b16 %v124
  %v881 = vunpack.c.l.b16 %v125
  %v882 = vunpack.c.l.b16 %v126
  %v883 = vunpack.c.l.b16 %v127
  %v884 = vunpack.c.l.b16 %v128
  %v885 = vunpack.c.l.b16 %v129
  %v886 = vunpack.c.l.b16 %v130
  %v887 = vunpack.c.l.b16 %v131
  %v888 = vunpack.c.l.b16 %v132
  %v889 = vunpack.c.l.b16 %v133
  %v890 = vunpack.c.l.b16 %v134
  %v891 = vunpack.c.l.b16 %v135
  %v892 = vunpack.c.l.b16 %v136
  %v893 = vunpack.c.l.b16 %v137
  %v894 = vunpack.c.l.b16 %v138
  %v895 = vunpack.c.l.b16 %v139
  %v896 = vunpack.c.l.b16 %v140
  %v897 = vunpack.c.l.b16 %v141
  %v898 = vunpack.c.l.b16 %v142
  %v899 = vunpack.c.l.b16 %v143
  %v900 = vunpack.c.l.b16 %v144
  %v901 = vunpack.c.l.b16 %v145
  %v902 = vunpack.c.l.b16 %v146
  %v903 = vunpack.c.l.b16 %v147
  %v904 = vunpack.c.l.b16 %v148
  %v905 = vunpack.c.l.b16 %v149
  %v906 = vunpack.c.l.b16 %v150
  %v907 = vunpack.c.l.b16 %v151
  %v908 = vunpack.c.l.b16 %v152
  %v909 = vunpack.c.l.b16 %v153
  %v910 = vunpack.c.l.b16 %v154
  %v911 = vunpack.c.l.b16 %v155
  %v912 = vunpack.c.l.b16 %v156
  %v913 = vunpack.c.l.b16 %v157
  %v914 = vunpack.c.l.b16 %v158
  %v915 = vunpack.c.l.b16 %v159
  %v916 = vunpack.c.l.b16 %v160
  %v917 = vunpack.c.l.b16 %v161
  %v918 = vunpack.c.l.b16 %v162
  %v919 = vunpack.c.l.b16 %v163
  %v920 = vunpack.c.l.b16 %v164
  %v921 = vunpack.c.l.b16 %v165
  %v922 = vunpack.c.l.b16 %v166
  %v923 = vunpack.c.l.b16 %v167
  %v924 = vunpack.c.l.b16 %v168
  %v925 = vunpack.c.l.b16 %v169
  %v926 = vunpack.c.l.b16 %v170
  %v927 = vunpack.c.l.b16 %v171
  %v928 = vunpack.c.l.b16 %v172
  %v929 = vunpack.c.l.b16 %v173
  %v930 = vunpack.c.l.b16 %v174
  %v931 = vunpack.c.l.b16 %v175
  %v932 = vunpack.c.l.b16 %v176
  %v933 = vunpack.c.l.b16 %v177
  %v934 = vunpack.c.l.b16 %v178
  %v935 = vunpack.c.l.b16 %v179
  %v936 = vunpack.c.l.b16 %v180
  %v937 = vunpack.c.l.b16 %v181
  %v938 = vunpack.c.l.b16 %v182
  %v939 = vunpack.c.l.b16 %v183
  %v940 = vunpack.c.l.b16 %v184
  %v941 = vunpack.c.l.b16 %v185
  %v942 = vunpack.c.l.b16 %v186
  %v943 = vunpack.c.l.b16 %v187
  %v944 = vunpack.c.l.b16 %v188
  %v945 = vunpack.c.l.b16 %v189
  %v946 = vunpack.c.l.b16 %v190
  %v947 = vunpack.c.l.b16 %v191
  %v948 = vunpack.c.l.b16 %v192
  %v949 = vunpack.c.l.b16 %v193
  %v950 = vunpack.c.l.b16 %v194
  %v951 = vunpack.c.l.b16 %v195
  %v952 = vunpack.c.l.b16 %v196
  %v953 = vunpack.c.l.b16 %v197
  %v954 = vunpack.c.l.b16 %v198
  %v955 = vunpack.c.l.b16 %v199
  %v956 = vunpack.c.l.b16 %v200
  %v957 = vunpack.c.l.b16 %v201
  %v958 = vunpack.c.l.b16 %v202
  %v959 = vunpack.c.l.b16 %v203
  %v960 = vunpack.c.l.b16 %v204
  %v961 = vunpack.c.l.b16 %v205
  %v962 = vunpack.c.l.b16 %v206
  %v963 = vunpack.c.l.b16 %v207
  %v964 = vunpack.c.l.b16 %v208
  %v965 = vunpack.c.l.b16 %v209
  %v966 = vunpack.c.l.b16 %v210
  %v967 = vunpack.c.l.b16 %v211
  %v968 = vunpack.c.l.b16 %v212
  %v969 = vunpack.c.l.b16 %v213
  %v970 = vunpack.c.l.b16 %v214
  %v971 = vunpack.c.l.b16 %v215
  %v972 = vunpack.c.l.b16 %v216
  %v973 = vunpack.c.l.b16 %v217
  %v974 = vunpack.c.l.b16 %v218
  %v975 = vunpack.c.l.b16 %v219
  %v976 = vunpack.c.l.b16 %v220
  %v977 = vunpack.c.l.b16 %v221
  %v978 = vunpack.c.l.b16 %v222
  %v979 = vunpack.c.l.b16 %v223
  %v980 = vunpack.c.l.b16 %v224
  %v981 = vunpack.c.l.b16 %v225
  %v982 = vunpack.c.l.b16 %v226
  %v983 = vunpack.c.l.b16 %v227
  %v984 = vunpack.c.l.b16 %v228
  %v985 = vunpack.c.l.b16 %v229
  %v986 = vunpack.c.l.b16 %v230
  %v987 = vunpack.c.l.b16 %v231
  %v988 = vunpack.c.l.b16 %v232
  %v989 = vunpack.c.l.b16 %v233
  %v990 = vunpack.c.l.b16 %v234
  %v991 = vunpack.c.l.b16 %v235
  %v992 = vunpack.c.l.b16 %v236
  %v993 = vunpack.c.l.b16 %v237
  %v994 = vunpack.c.l.b16 %v238
  %v995 = vunpack.c.l.b16 %v239
  %v996 = vunpack.c.l.b16 %v240
  %v997 = vunpack.c.l.b16 %v241
  %v998 = vunpack.c.l.b16 %v242
  %v999 = vunpack.c.l.b16 %v243
  %v1000 = vunpack.c.l.b16 %v244
  %v1001 = vunpack.c.l.b16 %v245
  %v1002 = vunpack.c.l.b16 %v246
  %v1003 = vunpack.c.l.b16 %v247
  %v1004 = vunpack.c.l.b16 %v248
  %v1005 = vunpack.c.l.b16 %v249
  %v1006 = vunpack.c.l.b16 %v250
  %v1007 = vunpack.c.l.b16 %v251
  %v1008 = vunpack.c.l.b16 %v252
  %v1009 = vunpack.c.l.b16 %v253
  %v1010 = vunpack.c.l.b16 %v254
  %v1011 = vunpack.c.l.b16 %v255
  %v1012 = vunpack.c.l.b16 %v256
  %v1013 = vunpack.c.l.b16 %v257
  %v1014 = vunpack.c.l.b16 %v258
  %v1015 = vunpack.c.l.b16 %v259
  %v1016 = vunpack.c.l.b16 %v260
  %v1017 = vunpack.c.l.b16 %v261
  %v1018 = vunpack.c.l.b16 %v262
  %v1019 = vunpack.c.l.b16 %v263
  %v1020 = vunpack.c.l.b16 %v264
  %v1021 = vunpack.c.l.b16 %v265
  %v1022 = vunpack.c.l.b16 %v266
  %v1023 = vunpack.c.l.b16 %v267
  %v1024 = vunpack.c.l.b16 %v268
  %v1025 = vunpack.c.l.b16 %v269
  %v1026 = vunpack.c.l.b16 %v270
  %v1027 = vunpack.c.l.b16 %v271
  %v1028 = vunpack.c.l.b16 %v272
  %v1029 = vunpack.c.l.b16 %v273
  %v1030 = vunpack.c.l.b16 %v274
  %v1031 = vunpack.c.l.b16 %v275
  %v1032 = vunpack.c.l.b16 %v276
  %v1033 = vunpack.c.l.b16 %v277
  %v1034 = vunpack.c.l.b16 %v278
  %v1035 = vunpack.c.l.b16 %v279
  %v1036 = vunpack.c.l.b16 %v280
  %v1037 = vunpack.c.l.b16 %v281
  %v1038 = vunpack.c.l.b16 %v282
  %v1039 = vunpack.c.l.b16 %v283
  %v1040 = vunpack.c.l.b16 %v284
  %v1041 = vunpack.c.l.b16 %v285
  %v1042 = vunpack.c.l.b16 %v286
  %v1043 = vunpack.c.l.b16 %v287
  %v1044 = vunpack.c.l.b16 %v288
  %v1045 = vunpack.c.l.b16 %v289
  %v1046 = vpack.c.b16 %v831, %v830
  %v1047 = vpack.c.b16 %v833, %v832
  %v1048 = vpack.c.b16 %v835, %v834
  %v1049 = vpack.c.b16 %v837, %v836
  %v1050 = vpack.c.b16 %v839, %v838
  %v1051 = vpack.c.b16 %v841, %v840
  %v1052 = vpack.c.b16 %v843, %v842
  %v1053 = vpack.c.b16 %v845, %v844
  %v1054 = vpack.c.b16 %v847, %v846
  %v1055 = vpack.c.b16 %v849, %v848
  %v1056 = vpack.c.b16 %v851, %v850
  %v1057 = vpack.c.b16 %v853, %v852
  %v1058 = vpack.c.b16 %v855, %v854
  %v1059 = vpack.c.b16 %v857, %v856
  %v1060 = vpack.c.b16 %v859, %v858
  %v1061 = vpack.c.b16 %v861, %v860
  %v1062 = vpack.c.b16 %v863, %v862
  %v1063 = vpack.c.b16 %v865, %v864
  %v1064 = vpack.c.b16 %v867, %v866
  %v1065 = vpack.c.b16 %v869, %v868
  %v1066 = vpack.c.b16 %v871, %v870
  %v1067 = vpack.c.b16 %v873, %v872
  %v1068 = vpack.c.b16 %v875, %v874
  %v1069 = vpack.c.b16 %v877, %v876
  %v1070 = vpack.c.b16 %v879, %v878
  %v1071 = vpack.c.b16 %v881, %v880
  %v1072 = vpack.c.b16 %v883, %v882
  %v1073 = vpack.c.b16 %v885, %v884
  %v1074 = vpack.c.b16 %v887, %v886
  %v1075 = vpack.c.b16 %v889, %v888
  %v1076 = vpack.c.b16 %v891, %v890
  %v1077 = vpack.c.b16 %v893, %v892
  %v1078 = vpack.c.b16 %v895, %v894
  %v1079 = vpack.c.b16 %v897, %v896
  %v1080 = vpack.c.b16 %v899, %v898
  %v1081 = vpack.c.b16 %v901, %v900
  %v1082 = vpack.c.b16 %v903, %v902
  %v1083 = vpack.c.b16 %v905, %v904
  %v1084 = vpack.c.b16 %v907, %v906
  %v1085 = vpack.c.b16 %v909, %v908
  %v1086 = vpack.c.b16 %v911, %v910
  %v1087 = vpack.c.b16 %v913, %v912
  %v1088 = vpack.c.b16 %v915, %v914
  %v1089 = vpack.c.b16 %v917, %v916
  %v1090 = vpack.c.b16 %v919, %v918
  %v1091 = vpack.c.b16 %v921, %v920
  %v1092 = vpack.c.b16 %v923, %v922
  %v1093 = vpack.c.b16 %v925, %v924
  %v1094 = vpack.c.b16 %v927, %v926
  %v1095 = vpack.c.b16 %v929, %v928
  %v1096 = vpack.c.b16 %v931, %v930
  %v1097 = vpack.c.b16 %v933, %v932
  %v1098 = vpack.c.b16 %v935, %v934
  %v1099 = vpack.c.b16 %v937, %v936
  %v1100 = vpack.c.b16 %v939, %v938
  %v1101 = vpack.c.b16 %v941, %v940
  %v1102 = vpack.c.b16 %v943, %v942
  %v1103 = vpack.c.b16 %v945, %v944
  %v1104 = vpack.c.b16 %v947, %v946
  %v1105 = vpack.c.b16 %v949, %v948
  %v1106 = vpack.c.b16 %v951, %v950
  %v1107 = vpack.c.b16 %v953, %v952
  %v1108 = vpack.c.b16 %v955, %v954
  %v1109 = vpack.c.b16 %v957, %v956
  %v1110 = vpack.c.b16 %v959, %v958
  %v1111 = vpack.c.b16 %v961, %v960
  %v1112 = vpack.c.b16 %v963, %v962
  %v1113 = vpack.c.b16 %v965, %v964
  %v1114 = vpack.c.b16 %v967, %v966
  %v1115 = vpack.c.b16 %v969, %v968
  %v1116 = vpack.c.b16 %v971, %v970
  %v1117 = vpack.c.b16 %v973, %v972
  %v1118 = vpack.c.b16 %v975, %v974
  %v1119 = vpack.c.b16 %v977, %v976
  %v1120 = vpack.c.b16 %v979, %v978
  %v1121 = vpack.c.b16 %v981, %v980
  %v1122 = vpack.c.b16 %v983, %v982
  %v1123 = vpack.c.b16 %v985, %v984
  %v1124 = vpack.c.b16 %v987, %v986
  %v1125 = vpack.c.b16 %v989, %v988
  %v1126 = vpack.c.b16 %v991, %v990
  %v1127 = vpack.c.b16 %v993, %v992
  %v1128 = vpack.c.b16 %v995, %v994
  %v1129 = vpack.c.b16 %v997, %v996
  %v1130 = vpack.c.b16 %v999, %v998
  %v1131 = vpack.c.b16 %v1001, %v1000
  %v1132 = vpack.c.b16 %v1003, %v1002
  %v1133 = vpack.c.b16 %v1005, %v1004
  %v1134 = vpack.c.b16 %v1007, %v1006
  %v1135 = vpack.c.b16 %v1009, %v1008
  %v1136 = vpack.c.b16 %v1011, %v1010
  %v1137 = vpack.c.b16 %v1013, %v1012
  %v1138 = vpack.c.b16 %v1015, %v1014
  %v1139 = vpack.c.b16 %v1017, %v1016
  %v1140 = vpack.c.b16 %v1019, %v1018
  %v1141 = vpack.c.b16 %v1021, %v1020
  %v1142 = vpack.c.b16 %v1023, %v1022
  %v1143 = vpack.c.b16 %v1025, %v1024
  %v1144 = vpack.c.b16 %v1027, %v1026
  %v1145 = vpack.c.b16 %v1029, %v1028
  %v1146 = vpack.c.b16 %v1031, %v1030
  %v1147 = vpack.c.b16 %v1033, %v1032
  %v1148 = vpack.c.b16 %v1035, %v1034
  %v1149 = vpack.c.b16 %v1037, %v1036
  %v1150 = vpack.c.b16 %v1039, %v1038
  %v1151 = vpack.c.b16 %v1041, %v1040
  %v1152 = vpack.c.b16 %v1043, %v1042
  %v1153 = vpack.c.b16 %v1045, %v1044
  %vm1262 = vcmask 523264
  %v1264 = vsel %vm1262, %v519, 0
  %v1267 = vsel %vm1262, %v533, 0
  %v1270 = vsel %vm1262, %v547, 0
  %v1273 = vsel %vm1262, %v561, 0
  %1275 = vmatpush.bf16.msra.mxu0 %v1053
  %1276 = vmatpush.bf16.msra.mxu0 %v1052
  %1277 = vmatpush.bf16.msra.mxu0 %v1051
  %1278 = vmatpush.bf16.msra.mxu0 %v1050
  %1279 = vmatpush.bf16.msra.mxu0 %v1049
  %1280 = vmatpush.bf16.msra.mxu0 %v1048
  %1281 = vmatpush.bf16.msra.mxu0 %v1047
  %1282 = vmatpush.bf16.msra.mxu0 %v1046
  %1283 = vmatmul.bf16.gmra.mxu0 %v506
  %v1284 = vpop.f32.mrf.mxu0
  %v1285 = vadd.f32 %v301, %v1284
  %v1286 = vpop.f32.mrf.mxu0
  %v1287 = vadd.f32 %v306, %v1286
  %1288 = vmatmul.bf16.gmra.mxu0 %v520
  %v1289 = vpop.f32.mrf.mxu0
  %v1290 = vadd.f32 %v311, %v1289
  %v1291 = vpop.f32.mrf.mxu0
  %v1292 = vadd.f32 %v316, %v1291
  %1293 = vmatmul.bf16.gmra.mxu0 %v534
  %v1294 = vpop.f32.mrf.mxu0
  %v1295 = vadd.f32 %v321, %v1294
  %v1296 = vpop.f32.mrf.mxu0
  %v1297 = vadd.f32 %v326, %v1296
  %1298 = vmatmul.bf16.gmra.mxu0 %v548
  %v1299 = vpop.f32.mrf.mxu0
  %v1300 = vadd.f32 %v331, %v1299
  %v1301 = vpop.f32.mrf.mxu0
  %v1302 = vadd.f32 %v336, %v1301
  %1303 = vdwg.mxu0
  %1304 = vmatpush.bf16.msra.mxu0 %v1061
  %1305 = vmatpush.bf16.msra.mxu0 %v1060
  %1306 = vmatpush.bf16.msra.mxu0 %v1059
  %1307 = vmatpush.bf16.msra.mxu0 %v1058
  %1308 = vmatpush.bf16.msra.mxu0 %v1057
  %1309 = vmatpush.bf16.msra.mxu0 %v1056
  %1310 = vmatpush.bf16.msra.mxu0 %v1055
  %1311 = vmatpush.bf16.msra.mxu0 %v1054
  %1312 = vmatmul.bf16.gmra.mxu0 %v507
  %v1313 = vpop.f32.mrf.mxu0
  %v1314 = vadd.f32 %v1285, %v1313
  %v1315 = vpop.f32.mrf.mxu0
  %v1316 = vadd.f32 %v1287, %v1315
  %1317 = vmatmul.bf16.gmra.mxu0 %v521
  %v1318 = vpop.f32.mrf.mxu0
  %v1319 = vadd.f32 %v1290, %v1318
  %v1320 = vpop.f32.mrf.mxu0
  %v1321 = vadd.f32 %v1292, %v1320
  %1322 = vmatmul.bf16.gmra.mxu0 %v535
  %v1323 = vpop.f32.mrf.mxu0
  %v1324 = vadd.f32 %v1295, %v1323
  %v1325 = vpop.f32.mrf.mxu0
  %v1326 = vadd.f32 %v1297, %v1325
  %1327 = vmatmul.bf16.gmra.mxu0 %v549
  %v1328 = vpop.f32.mrf.mxu0
  %v1329 = vadd.f32 %v1300, %v1328
  %v1330 = vpop.f32.mrf.mxu0
  %v1331 = vadd.f32 %v1302, %v1330
  %1332 = vdwg.mxu0
  %1333 = vmatpush.bf16.msra.mxu0 %v1069
  %1334 = vmatpush.bf16.msra.mxu0 %v1068
  %1335 = vmatpush.bf16.msra.mxu0 %v1067
  %1336 = vmatpush.bf16.msra.mxu0 %v1066
  %1337 = vmatpush.bf16.msra.mxu0 %v1065
  %1338 = vmatpush.bf16.msra.mxu0 %v1064
  %1339 = vmatpush.bf16.msra.mxu0 %v1063
  %1340 = vmatpush.bf16.msra.mxu0 %v1062
  %1341 = vmatmul.bf16.gmra.mxu0 %v508
  %v1342 = vpop.f32.mrf.mxu0
  %v1343 = vadd.f32 %v1314, %v1342
  %v1344 = vpop.f32.mrf.mxu0
  %v1345 = vadd.f32 %v1316, %v1344
  %1346 = vmatmul.bf16.gmra.mxu0 %v522
  %v1347 = vpop.f32.mrf.mxu0
  %v1348 = vadd.f32 %v1319, %v1347
  %v1349 = vpop.f32.mrf.mxu0
  %v1350 = vadd.f32 %v1321, %v1349
  %1351 = vmatmul.bf16.gmra.mxu0 %v536
  %v1352 = vpop.f32.mrf.mxu0
  %v1353 = vadd.f32 %v1324, %v1352
  %v1354 = vpop.f32.mrf.mxu0
  %v1355 = vadd.f32 %v1326, %v1354
  %1356 = vmatmul.bf16.gmra.mxu0 %v550
  %v1357 = vpop.f32.mrf.mxu0
  %v1358 = vadd.f32 %v1329, %v1357
  %v1359 = vpop.f32.mrf.mxu0
  %v1360 = vadd.f32 %v1331, %v1359
  %1361 = vdwg.mxu0
  %1362 = vmatpush.bf16.msra.mxu0 %v1077
  %1363 = vmatpush.bf16.msra.mxu0 %v1076
  %1364 = vmatpush.bf16.msra.mxu0 %v1075
  %1365 = vmatpush.bf16.msra.mxu0 %v1074
  %1366 = vmatpush.bf16.msra.mxu0 %v1073
  %1367 = vmatpush.bf16.msra.mxu0 %v1072
  %1368 = vmatpush.bf16.msra.mxu0 %v1071
  %1369 = vmatpush.bf16.msra.mxu0 %v1070
  %1370 = vmatmul.bf16.gmra.mxu0 %v509
  %v1371 = vpop.f32.mrf.mxu0
  %v1372 = vadd.f32 %v1343, %v1371
  %v1373 = vpop.f32.mrf.mxu0
  %v1374 = vadd.f32 %v1345, %v1373
  %1375 = vmatmul.bf16.gmra.mxu0 %v523
  %v1376 = vpop.f32.mrf.mxu0
  %v1377 = vadd.f32 %v1348, %v1376
  %v1378 = vpop.f32.mrf.mxu0
  %v1379 = vadd.f32 %v1350, %v1378
  %1380 = vmatmul.bf16.gmra.mxu0 %v537
  %v1381 = vpop.f32.mrf.mxu0
  %v1382 = vadd.f32 %v1353, %v1381
  %v1383 = vpop.f32.mrf.mxu0
  %v1384 = vadd.f32 %v1355, %v1383
  %1385 = vmatmul.bf16.gmra.mxu0 %v551
  %v1386 = vpop.f32.mrf.mxu0
  %v1387 = vadd.f32 %v1358, %v1386
  %v1388 = vpop.f32.mrf.mxu0
  %v1389 = vadd.f32 %v1360, %v1388
  %1390 = vdwg.mxu0
  %1391 = vmatpush.bf16.msra.mxu0 %v1085
  %1392 = vmatpush.bf16.msra.mxu0 %v1084
  %1393 = vmatpush.bf16.msra.mxu0 %v1083
  %1394 = vmatpush.bf16.msra.mxu0 %v1082
  %1395 = vmatpush.bf16.msra.mxu0 %v1081
  %1396 = vmatpush.bf16.msra.mxu0 %v1080
  %1397 = vmatpush.bf16.msra.mxu0 %v1079
  %1398 = vmatpush.bf16.msra.mxu0 %v1078
  %1399 = vmatmul.bf16.gmra.mxu0 %v510
  %v1400 = vpop.f32.mrf.mxu0
  %v1401 = vadd.f32 %v1372, %v1400
  %v1402 = vpop.f32.mrf.mxu0
  %v1403 = vadd.f32 %v1374, %v1402
  %1404 = vmatmul.bf16.gmra.mxu0 %v524
  %v1405 = vpop.f32.mrf.mxu0
  %v1406 = vadd.f32 %v1377, %v1405
  %v1407 = vpop.f32.mrf.mxu0
  %v1408 = vadd.f32 %v1379, %v1407
  %1409 = vmatmul.bf16.gmra.mxu0 %v538
  %v1410 = vpop.f32.mrf.mxu0
  %v1411 = vadd.f32 %v1382, %v1410
  %v1412 = vpop.f32.mrf.mxu0
  %v1413 = vadd.f32 %v1384, %v1412
  %1414 = vmatmul.bf16.gmra.mxu0 %v552
  %v1415 = vpop.f32.mrf.mxu0
  %v1416 = vadd.f32 %v1387, %v1415
  %v1417 = vpop.f32.mrf.mxu0
  %v1418 = vadd.f32 %v1389, %v1417
  %1419 = vdwg.mxu0
  %1420 = vmatpush.bf16.msra.mxu0 %v1093
  %1421 = vmatpush.bf16.msra.mxu0 %v1092
  %1422 = vmatpush.bf16.msra.mxu0 %v1091
  %1423 = vmatpush.bf16.msra.mxu0 %v1090
  %1424 = vmatpush.bf16.msra.mxu0 %v1089
  %1425 = vmatpush.bf16.msra.mxu0 %v1088
  %1426 = vmatpush.bf16.msra.mxu0 %v1087
  %1427 = vmatpush.bf16.msra.mxu0 %v1086
  %1428 = vmatmul.bf16.gmra.mxu0 %v511
  %v1429 = vpop.f32.mrf.mxu0
  %v1430 = vadd.f32 %v1401, %v1429
  %v1431 = vpop.f32.mrf.mxu0
  %v1432 = vadd.f32 %v1403, %v1431
  %1433 = vmatmul.bf16.gmra.mxu0 %v525
  %v1434 = vpop.f32.mrf.mxu0
  %v1435 = vadd.f32 %v1406, %v1434
  %v1436 = vpop.f32.mrf.mxu0
  %v1437 = vadd.f32 %v1408, %v1436
  %1438 = vmatmul.bf16.gmra.mxu0 %v539
  %v1439 = vpop.f32.mrf.mxu0
  %v1440 = vadd.f32 %v1411, %v1439
  %v1441 = vpop.f32.mrf.mxu0
  %v1442 = vadd.f32 %v1413, %v1441
  %1443 = vmatmul.bf16.gmra.mxu0 %v553
  %v1444 = vpop.f32.mrf.mxu0
  %v1445 = vadd.f32 %v1416, %v1444
  %v1446 = vpop.f32.mrf.mxu0
  %v1447 = vadd.f32 %v1418, %v1446
  %1448 = vdwg.mxu0
  %1449 = vmatpush.bf16.msra.mxu0 %v1101
  %1450 = vmatpush.bf16.msra.mxu0 %v1100
  %1451 = vmatpush.bf16.msra.mxu0 %v1099
  %1452 = vmatpush.bf16.msra.mxu0 %v1098
  %1453 = vmatpush.bf16.msra.mxu0 %v1097
  %1454 = vmatpush.bf16.msra.mxu0 %v1096
  %1455 = vmatpush.bf16.msra.mxu0 %v1095
  %1456 = vmatpush.bf16.msra.mxu0 %v1094
  %1457 = vmatmul.bf16.gmra.mxu0 %v512
  %v1458 = vpop.f32.mrf.mxu0
  %v1459 = vadd.f32 %v1430, %v1458
  %v1460 = vpop.f32.mrf.mxu0
  %v1461 = vadd.f32 %v1432, %v1460
  %1462 = vmatmul.bf16.gmra.mxu0 %v526
  %v1463 = vpop.f32.mrf.mxu0
  %v1464 = vadd.f32 %v1435, %v1463
  %v1465 = vpop.f32.mrf.mxu0
  %v1466 = vadd.f32 %v1437, %v1465
  %1467 = vmatmul.bf16.gmra.mxu0 %v540
  %v1468 = vpop.f32.mrf.mxu0
  %v1469 = vadd.f32 %v1440, %v1468
  %v1470 = vpop.f32.mrf.mxu0
  %v1471 = vadd.f32 %v1442, %v1470
  %1472 = vmatmul.bf16.gmra.mxu0 %v554
  %v1473 = vpop.f32.mrf.mxu0
  %v1474 = vadd.f32 %v1445, %v1473
  %v1475 = vpop.f32.mrf.mxu0
  %v1476 = vadd.f32 %v1447, %v1475
  %1477 = vdwg.mxu0
  %1478 = vmatpush.bf16.msra.mxu0 %v1109
  %1479 = vmatpush.bf16.msra.mxu0 %v1108
  %1480 = vmatpush.bf16.msra.mxu0 %v1107
  %1481 = vmatpush.bf16.msra.mxu0 %v1106
  %1482 = vmatpush.bf16.msra.mxu0 %v1105
  %1483 = vmatpush.bf16.msra.mxu0 %v1104
  %1484 = vmatpush.bf16.msra.mxu0 %v1103
  %1485 = vmatpush.bf16.msra.mxu0 %v1102
  %1486 = vmatmul.bf16.gmra.mxu0 %v513
  %v1487 = vpop.f32.mrf.mxu0
  %v1488 = vadd.f32 %v1459, %v1487
  %v1489 = vpop.f32.mrf.mxu0
  %v1490 = vadd.f32 %v1461, %v1489
  %1491 = vmatmul.bf16.gmra.mxu0 %v527
  %v1492 = vpop.f32.mrf.mxu0
  %v1493 = vadd.f32 %v1464, %v1492
  %v1494 = vpop.f32.mrf.mxu0
  %v1495 = vadd.f32 %v1466, %v1494
  %1496 = vmatmul.bf16.gmra.mxu0 %v541
  %v1497 = vpop.f32.mrf.mxu0
  %v1498 = vadd.f32 %v1469, %v1497
  %v1499 = vpop.f32.mrf.mxu0
  %v1500 = vadd.f32 %v1471, %v1499
  %1501 = vmatmul.bf16.gmra.mxu0 %v555
  %v1502 = vpop.f32.mrf.mxu0
  %v1503 = vadd.f32 %v1474, %v1502
  %v1504 = vpop.f32.mrf.mxu0
  %v1505 = vadd.f32 %v1476, %v1504
  %1506 = vdwg.mxu0
  %1507 = vmatpush.bf16.msra.mxu0 %v1117
  %1508 = vmatpush.bf16.msra.mxu0 %v1116
  %1509 = vmatpush.bf16.msra.mxu0 %v1115
  %1510 = vmatpush.bf16.msra.mxu0 %v1114
  %1511 = vmatpush.bf16.msra.mxu0 %v1113
  %1512 = vmatpush.bf16.msra.mxu0 %v1112
  %1513 = vmatpush.bf16.msra.mxu0 %v1111
  %1514 = vmatpush.bf16.msra.mxu0 %v1110
  %1515 = vmatmul.bf16.gmra.mxu0 %v514
  %v1516 = vpop.f32.mrf.mxu0
  %v1517 = vadd.f32 %v1488, %v1516
  %v1518 = vpop.f32.mrf.mxu0
  %v1519 = vadd.f32 %v1490, %v1518
  %1520 = vmatmul.bf16.gmra.mxu0 %v528
  %v1521 = vpop.f32.mrf.mxu0
  %v1522 = vadd.f32 %v1493, %v1521
  %v1523 = vpop.f32.mrf.mxu0
  %v1524 = vadd.f32 %v1495, %v1523
  %1525 = vmatmul.bf16.gmra.mxu0 %v542
  %v1526 = vpop.f32.mrf.mxu0
  %v1527 = vadd.f32 %v1498, %v1526
  %v1528 = vpop.f32.mrf.mxu0
  %v1529 = vadd.f32 %v1500, %v1528
  %1530 = vmatmul.bf16.gmra.mxu0 %v556
  %v1531 = vpop.f32.mrf.mxu0
  %v1532 = vadd.f32 %v1503, %v1531
  %v1533 = vpop.f32.mrf.mxu0
  %v1534 = vadd.f32 %v1505, %v1533
  %1535 = vdwg.mxu0
  %1536 = vmatpush.bf16.msra.mxu0 %v1125
  %1537 = vmatpush.bf16.msra.mxu0 %v1124
  %1538 = vmatpush.bf16.msra.mxu0 %v1123
  %1539 = vmatpush.bf16.msra.mxu0 %v1122
  %1540 = vmatpush.bf16.msra.mxu0 %v1121
  %1541 = vmatpush.bf16.msra.mxu0 %v1120
  %1542 = vmatpush.bf16.msra.mxu0 %v1119
  %1543 = vmatpush.bf16.msra.mxu0 %v1118
  %1544 = vmatmul.bf16.gmra.mxu0 %v515
  %v1545 = vpop.f32.mrf.mxu0
  %v1546 = vadd.f32 %v1517, %v1545
  %v1547 = vpop.f32.mrf.mxu0
  %v1548 = vadd.f32 %v1519, %v1547
  %1549 = vmatmul.bf16.gmra.mxu0 %v529
  %v1550 = vpop.f32.mrf.mxu0
  %v1551 = vadd.f32 %v1522, %v1550
  %v1552 = vpop.f32.mrf.mxu0
  %v1553 = vadd.f32 %v1524, %v1552
  %1554 = vmatmul.bf16.gmra.mxu0 %v543
  %v1555 = vpop.f32.mrf.mxu0
  %v1556 = vadd.f32 %v1527, %v1555
  %v1557 = vpop.f32.mrf.mxu0
  %v1558 = vadd.f32 %v1529, %v1557
  %1559 = vmatmul.bf16.gmra.mxu0 %v557
  %v1560 = vpop.f32.mrf.mxu0
  %v1561 = vadd.f32 %v1532, %v1560
  %v1562 = vpop.f32.mrf.mxu0
  %v1563 = vadd.f32 %v1534, %v1562
  %1564 = vdwg.mxu0
  %1565 = vmatpush.bf16.msra.mxu0 %v1133
  %1566 = vmatpush.bf16.msra.mxu0 %v1132
  %1567 = vmatpush.bf16.msra.mxu0 %v1131
  %1568 = vmatpush.bf16.msra.mxu0 %v1130
  %1569 = vmatpush.bf16.msra.mxu0 %v1129
  %1570 = vmatpush.bf16.msra.mxu0 %v1128
  %1571 = vmatpush.bf16.msra.mxu0 %v1127
  %1572 = vmatpush.bf16.msra.mxu0 %v1126
  %1573 = vmatmul.bf16.gmra.mxu0 %v516
  %v1574 = vpop.f32.mrf.mxu0
  %v1575 = vadd.f32 %v1546, %v1574
  %v1576 = vpop.f32.mrf.mxu0
  %v1577 = vadd.f32 %v1548, %v1576
  %1578 = vmatmul.bf16.gmra.mxu0 %v530
  %v1579 = vpop.f32.mrf.mxu0
  %v1580 = vadd.f32 %v1551, %v1579
  %v1581 = vpop.f32.mrf.mxu0
  %v1582 = vadd.f32 %v1553, %v1581
  %1583 = vmatmul.bf16.gmra.mxu0 %v544
  %v1584 = vpop.f32.mrf.mxu0
  %v1585 = vadd.f32 %v1556, %v1584
  %v1586 = vpop.f32.mrf.mxu0
  %v1587 = vadd.f32 %v1558, %v1586
  %1588 = vmatmul.bf16.gmra.mxu0 %v558
  %v1589 = vpop.f32.mrf.mxu0
  %v1590 = vadd.f32 %v1561, %v1589
  %v1591 = vpop.f32.mrf.mxu0
  %v1592 = vadd.f32 %v1563, %v1591
  %1593 = vdwg.mxu0
  %1594 = vmatpush.bf16.msra.mxu0 %v1141
  %1595 = vmatpush.bf16.msra.mxu0 %v1140
  %1596 = vmatpush.bf16.msra.mxu0 %v1139
  %1597 = vmatpush.bf16.msra.mxu0 %v1138
  %1598 = vmatpush.bf16.msra.mxu0 %v1137
  %1599 = vmatpush.bf16.msra.mxu0 %v1136
  %1600 = vmatpush.bf16.msra.mxu0 %v1135
  %1601 = vmatpush.bf16.msra.mxu0 %v1134
  %1602 = vmatmul.bf16.gmra.mxu0 %v517
  %v1603 = vpop.f32.mrf.mxu0
  %v1604 = vadd.f32 %v1575, %v1603
  %v1605 = vpop.f32.mrf.mxu0
  %v1606 = vadd.f32 %v1577, %v1605
  %1607 = vmatmul.bf16.gmra.mxu0 %v531
  %v1608 = vpop.f32.mrf.mxu0
  %v1609 = vadd.f32 %v1580, %v1608
  %v1610 = vpop.f32.mrf.mxu0
  %v1611 = vadd.f32 %v1582, %v1610
  %1612 = vmatmul.bf16.gmra.mxu0 %v545
  %v1613 = vpop.f32.mrf.mxu0
  %v1614 = vadd.f32 %v1585, %v1613
  %v1615 = vpop.f32.mrf.mxu0
  %v1616 = vadd.f32 %v1587, %v1615
  %1617 = vmatmul.bf16.gmra.mxu0 %v559
  %v1618 = vpop.f32.mrf.mxu0
  %v1619 = vadd.f32 %v1590, %v1618
  %v1620 = vpop.f32.mrf.mxu0
  %v1621 = vadd.f32 %v1592, %v1620
  %1622 = vdwg.mxu0
  %1623 = vmatpush.bf16.msra.mxu0 %v1149
  %1624 = vmatpush.bf16.msra.mxu0 %v1148
  %1625 = vmatpush.bf16.msra.mxu0 %v1147
  %1626 = vmatpush.bf16.msra.mxu0 %v1146
  %1627 = vmatpush.bf16.msra.mxu0 %v1145
  %1628 = vmatpush.bf16.msra.mxu0 %v1144
  %1629 = vmatpush.bf16.msra.mxu0 %v1143
  %1630 = vmatpush.bf16.msra.mxu0 %v1142
  %1631 = vmatmul.bf16.gmra.mxu0 %v518
  %v1632 = vpop.f32.mrf.mxu0
  %v1633 = vadd.f32 %v1604, %v1632
  %v1634 = vpop.f32.mrf.mxu0
  %v1635 = vadd.f32 %v1606, %v1634
  %1636 = vmatmul.bf16.gmra.mxu0 %v532
  %v1637 = vpop.f32.mrf.mxu0
  %v1638 = vadd.f32 %v1609, %v1637
  %v1639 = vpop.f32.mrf.mxu0
  %v1640 = vadd.f32 %v1611, %v1639
  %1641 = vmatmul.bf16.gmra.mxu0 %v546
  %v1642 = vpop.f32.mrf.mxu0
  %v1643 = vadd.f32 %v1614, %v1642
  %v1644 = vpop.f32.mrf.mxu0
  %v1645 = vadd.f32 %v1616, %v1644
  %1646 = vmatmul.bf16.gmra.mxu0 %v560
  %v1647 = vpop.f32.mrf.mxu0
  %v1648 = vadd.f32 %v1619, %v1647
  %v1649 = vpop.f32.mrf.mxu0
  %v1650 = vadd.f32 %v1621, %v1649
  %1651 = vdwg.mxu0
  %1652 = vmatpush.bf16.msra.mxu0 0
  %1653 = vmatpush.bf16.msra.mxu0 0
  %1654 = vmatpush.bf16.msra.mxu0 0
  %1655 = vmatpush.bf16.msra.mxu0 0
  %1656 = vmatpush.bf16.msra.mxu0 %v1153
  %1657 = vmatpush.bf16.msra.mxu0 %v1152
  %1658 = vmatpush.bf16.msra.mxu0 %v1151
  %1659 = vmatpush.bf16.msra.mxu0 %v1150
  %1660 = vmatmul.bf16.gmra.mxu0 %v1264
  %v1661 = vpop.f32.mrf.mxu0
  %v1662 = vadd.f32 %v1633, %v1661
  %v1663 = vpop.f32.mrf.mxu0
  %v1664 = vadd.f32 %v1635, %v1663
  %1665 = vmatmul.bf16.gmra.mxu0 %v1267
  %v1666 = vpop.f32.mrf.mxu0
  %v1667 = vadd.f32 %v1638, %v1666
  %v1668 = vpop.f32.mrf.mxu0
  %v1669 = vadd.f32 %v1640, %v1668
  %1670 = vmatmul.bf16.gmra.mxu0 %v1270
  %v1671 = vpop.f32.mrf.mxu0
  %v1672 = vadd.f32 %v1643, %v1671
  %v1673 = vpop.f32.mrf.mxu0
  %v1674 = vadd.f32 %v1645, %v1673
  %1675 = vmatmul.bf16.gmra.mxu0 %v1273
  %v1676 = vpop.f32.mrf.mxu0
  %v1677 = vadd.f32 %v1648, %v1676
  %v1678 = vpop.f32.mrf.mxu0
  %v1679 = vadd.f32 %v1650, %v1678
  %1680 = vdwg.mxu0
  %v1681 = vld [vmem:[%s3] sm:$0xff]
  %v1682 = vld [vmem:[%s3 + $0x8] sm:$0xff]
  %v1683 = vld [vmem:[%s3 + $0x10] sm:$0xff]
  %v1684 = vld [vmem:[%s3 + $0x18] sm:$0xff]
  %v1685 = vld [vmem:[%s3 + $0x20] sm:$0xff]
  %v1686 = vld [vmem:[%s3 + $0x28] sm:$0xff]
  %v1687 = vld [vmem:[%s3 + $0x30] sm:$0xff]
  %v1688 = vld [vmem:[%s3 + $0x38] sm:$0xff]
  %v1689 = vadd.f32 %v1662, %v1681
  %v1690 = vadd.f32 %v1664, %v1682
  %v1691 = vadd.f32 %v1667, %v1683
  %v1692 = vadd.f32 %v1669, %v1684
  %v1693 = vadd.f32 %v1672, %v1685
  %v1694 = vadd.f32 %v1674, %v1686
  %v1695 = vadd.f32 %v1677, %v1687
  %v1696 = vadd.f32 %v1679, %v1688
  %v1697 = vmax.f32 %v1689, 0.0
  %v1698 = vmax.f32 %v1690, 0.0
  %v1699 = vmax.f32 %v1691, 0.0
  %v1700 = vmax.f32 %v1692, 0.0
  %v1701 = vmax.f32 %v1693, 0.0
  %v1702 = vmax.f32 %v1694, 0.0
  %v1703 = vmax.f32 %v1695, 0.0
  %v1704 = vmax.f32 %v1696, 0.0
  %vm1705 = vcmask 15360
  %1706 = vst.msk [vmem:[%s4] sm:$0xff] %vm1705, %v1697
  %1707 = vst.msk [vmem:[%s4 + $0x8] sm:$0xff] %vm1705, %v1698
  %1708 = vst.msk [vmem:[%s4 + $0x10] sm:$0xff] %vm1705, %v1699
  %1709 = vst.msk [vmem:[%s4 + $0x18] sm:$0xff] %vm1705, %v1700
  %1710 = vst.msk [vmem:[%s4 + $0x20] sm:$0xff] %vm1705, %v1701
  %1711 = vst.msk [vmem:[%s4 + $0x28] sm:$0xff] %vm1705, %v1702
  %1712 = vst.msk [vmem:[%s4 + $0x30] sm:$0xff] %vm1705, %v1703
  %1713 = vst.msk [vmem:[%s4 + $0x38] sm:$0xff] %vm1705, %v1704
  // Predicated region
  $region18: #{_lambda_.25} parent=0 // pred_check
    _
  $region19: #{_lambda_.25} parent=0 // pred_check_branch
    %1715 = sbr.rel (0) target = $region21
  $region20: #{_lambda_.25} parent=0 // pred_region
    _
  $region21: #{_lambda_.25} parent=0 // pred_fallthru
    _
  // Predicated region
  $region22: #{_lambda_.25} parent=0 // pred_check
    _
  $region23: #{_lambda_.25} parent=0 // pred_check_branch
    %1717 = sbr.rel (0) target = $region25
  $region24: #{_lambda_.25} parent=0 // pred_region
    _
  $region25: #{_lambda_.25} parent=0 // pred_fallthru
    _

</llo_original>
